<compile_context>
chip_gen: v5e
topology: v5e:2x2
jax: 0.10.0
libtpu: 0.0.40
codegen_flags: <defaults>
</compile_context>

<pallas_src>
import functools

import jax
import jax.numpy as jnp
import numpy as np
from jax import lax
from jax.experimental import pallas as pl
from jax.experimental.pallas import tpu as pltpu


def _round_up(x, m):
    return ((x + m - 1) // m) * m


def tlstm_kernel(T, Tp, use_bf16,
                 feat_ref, delta_ref, mask_ref,
                 w_in_ref, b_in_ref, w_d_ref, b_d_ref,
                 w_ih_ref, w_hh_ref, b_lstm_ref,
                 w_out_ref, b_out_ref,
                 out_ref,
                 gx_scr, h_scr, c_scr):
    """One (batch-block, time-chunk) grid step of the TLSTM recurrence."""
    chunk = pl.program_id(1)                  # time-chunk index ("arbitrary")
    BB, Hp = h_scr.shape                      # batch-block rows, padded hidden
    rows = feat_ref.shape[0]                  # TT * BB rows in this chunk
    F = feat_ref.shape[1]
    TT = rows // BB

    # Reset the recurrent state at the start of every batch block.
    @pl.when(chunk == 0)
    def _():
        h_scr[...] = jnp.zeros_like(h_scr)
        c_scr[...] = jnp.zeros_like(c_scr)

    # ---------------- pre-pass over the whole time chunk ---------------------
    # embedded = tanh(feats @ w_in + b_in); gates_x = embedded @ w_ih + b.
    feats = feat_ref[...]                     # (rows, F) -- F not padded to 128
    if F <= 8:
        # Tiny feature dim: rank-1 VPU FMAs instead of an MXU matmul whose K
        # would be mostly zero padding.
        w_in = w_in_ref[...]
        acc = feats[:, 0:1] * w_in[0:1, :] + b_in_ref[...]
        for k in range(1, F):
            acc = acc + feats[:, k:k + 1] * w_in[k:k + 1, :]
        embedded = jnp.tanh(acc)
    else:
        embedded = jnp.tanh(
            jnp.dot(feats, w_in_ref[...], preferred_element_type=jnp.float32)
            + b_in_ref[...])

    if use_bf16:
        # bf16 operands / f32 accumulation on the only large matmul in the
        # kernel (~2-4x MXU rate on v5e/v6e/v7x).  Off by default to preserve
        # f32 parity with the reference.
        gx = jnp.dot(embedded.astype(jnp.bfloat16),
                     w_ih_ref[...].astype(jnp.bfloat16),
                     preferred_element_type=jnp.float32)
    else:
        gx = jnp.dot(embedded, w_ih_ref[...],
                     preferred_element_type=jnp.float32)
    gx_scr[...] = gx + b_lstm_ref[...]        # (rows, 4*Hp)

    # Loop-invariant operands hoisted out of the recurrence.
    w_hh = w_hh_ref[...]
    w_d = w_d_ref[...]
    b_d = b_d_ref[...]
    # TODO(synk): use pltpu.matmul_push_rhs/matmul_acc_lhs/matmul_pop to keep
    # w_hh resident in MXU staging across all TT steps instead of re-pushing
    # the RHS each jnp.dot below.

    pad_steps = Tp - T                        # static; > 0 only if T % TT != 0

    # ------------- recurrence: h/c carried as loop values (vregs) ------------
    def step(t, carry):
        h_prev, c_prev = carry
        row = pl.multiple_of(t * BB, BB)      # BB is a multiple of 8

        gx_t = gx_scr[pl.ds(row, BB), :]      # (BB, 4*Hp)
        delta_t = delta_ref[pl.ds(row, BB), :]  # (BB, 1)
        msk = mask_ref[pl.ds(row, BB), :]     # (BB, 1) -> VPU broadcast

        # Time-decay gamma per step on the VPU/EUP (slot slack under the MXU
        # push); no (rows, Hp) gamma scratch.
        gamma = jax.nn.sigmoid(delta_t * w_d + b_d)         # (BB, Hp)
        c_dec = c_prev * gamma

        gates = gx_t + jnp.dot(h_prev, w_hh,
                               preferred_element_type=jnp.float32)
        # Hp is a multiple of 128 -> every gate slice is lane-aligned.
        i_g = jax.nn.sigmoid(gates[:, 0 * Hp:1 * Hp])
        f_g = jax.nn.sigmoid(gates[:, 1 * Hp:2 * Hp])
        g_g = jnp.tanh(gates[:, 2 * Hp:3 * Hp])
        o_g = jax.nn.sigmoid(gates[:, 3 * Hp:4 * Hp])

        c_nm = f_g * c_dec + i_g * g_g
        h_nm = o_g * jnp.tanh(c_nm)
        # The PyTorch module zeroes h/c once t >= length; replicate exactly.
        h_new = h_nm * msk
        c_new = c_nm * msk

        if pad_steps:
            # Timesteps added by rounding T up to the chunk size must be
            # identity (keep state), not zeroing.
            valid = ((chunk * TT + t) < T).astype(jnp.float32)
            h_new = valid * h_new + (1.0 - valid) * h_prev
            c_new = valid * c_new + (1.0 - valid) * c_prev
        return (h_new, c_new)

    h_fin, c_fin = lax.fori_loop(0, TT, step, (h_scr[...], c_scr[...]),
                                 unroll=min(TT, 8))
    # One scratch write per chunk (not per step) to carry state onward.
    h_scr[...] = h_fin
    c_scr[...] = c_fin

    # ------------- output projection: lane-dense (BB, Cp) store --------------
    # TODO(synk): nn.Dropout(0.5) treated as identity (eval mode); training
    # dropout would need pltpu.prng_seed / pltpu.prng_random_bits.
    @pl.when(chunk == pl.num_programs(1) - 1)
    def _():
        out_ref[...] = (
            jnp.dot(h_fin, w_out_ref[...], preferred_element_type=jnp.float32)
            + b_out_ref[...])


@functools.partial(jax.jit, static_argnames=("use_bf16_prepass",))
def tlstm_forward(x, lengths, params, use_bf16_prepass=False):
    """x: (B, T, input_size) float32, lengths: (B,) int32."""
    B, T, in_sz = x.shape
    F = in_sz - 1
    H = params["w_in"].shape[1]
    C = params["w_out"].shape[1]
    f32 = jnp.float32
    x = x.astype(f32)

    # ---------------- hardware-aligned padded sizes ----------------
    Hp = _round_up(max(H, 128), 128)       # lane multiple -> aligned gate slices
    Cp = _round_up(max(C, 128), 128)       # lane-dense output store
    Fp = F if F <= 8 else _round_up(F, 8)  # no 128-padding of the feature dim

    # Batch blocks: leading "parallel" grid axis (v7x: split across the 2 TCs).
    if B <= 64:
        BB = _round_up(max(B, 8), 8)
        n_bblk = 1
    else:
        BB = 64
        n_bblk = -(-B // BB)
    Bpad = BB * n_bblk

    # Time chunks: "arbitrary" grid axis; BlockSpec double-buffers the streams.
    TT = min(T, 16)
    n_chunks = -(-T // TT)
    Tp = n_chunks * TT
    rows_blk = TT * BB

    def to_stream(a):                      # (B, T, last) -> (n_bblk*Tp*BB, last)
        last = a.shape[-1]
        a = jnp.transpose(a, (1, 0, 2))                        # (T, B, last)
        a = jnp.pad(a, ((0, Tp - T), (0, Bpad - B), (0, 0)))
        a = a.reshape(Tp, n_bblk, BB, last)
        a = jnp.transpose(a, (1, 0, 2, 3))                     # (bb, t, r, last)
        return a.reshape(n_bblk * Tp * BB, last)

    feats = to_stream(x[:, :, :F])
    if Fp != F:
        feats = jnp.pad(feats, ((0, 0), (0, Fp - F)))
    delta = to_stream(x[:, :, F:])

    t_idx = jnp.arange(T, dtype=jnp.int32)
    mask = (lengths.astype(jnp.int32)[:, None] > t_idx[None, :]).astype(f32)
    mask = to_stream(mask[:, :, None])                         # (rows, 1) only

    # ---- zero-padded parameters (per gate block so padded cols stay zero) ---
    w_in = jnp.pad(params["w_in"], ((0, Fp - F), (0, Hp - H)))
    b_in = jnp.pad(params["b_in"], ((0, 0), (0, Hp - H)))
    w_d = jnp.pad(params["w_d"], ((0, 0), (0, Hp - H)))
    b_d = jnp.pad(params["b_d"], ((0, 0), (0, Hp - H)))

    def pad_gate_w(w):                                         # (H, 4H)
        w4 = w.reshape(H, 4, H)
        w4 = jnp.pad(w4, ((0, Hp - H), (0, 0), (0, Hp - H)))
        return w4.reshape(Hp, 4 * Hp)

    def pad_gate_b(b):                                         # (1, 4H)
        b4 = b.reshape(1, 4, H)
        b4 = jnp.pad(b4, ((0, 0), (0, 0), (0, Hp - H)))
        return b4.reshape(1, 4 * Hp)

    w_ih = pad_gate_w(params["w_ih"])
    w_hh = pad_gate_w(params["w_hh"])
    b_lstm = pad_gate_b(params["b_lstm"])
    w_out = jnp.pad(params["w_out"], ((0, Hp - H), (0, Cp - C)))
    b_out = jnp.pad(params["b_out"], ((0, 0), (0, Cp - C)))

    def invariant(shape):
        return pl.BlockSpec(shape, lambda bb, ck: (0,) * len(shape))

    def chunk_spec(last):
        return pl.BlockSpec((rows_blk, last),
                            lambda bb, ck: (bb * n_chunks + ck, 0))

    in_specs = [
        chunk_spec(Fp),            # feats  (per time chunk)
        chunk_spec(1),             # delta  (per time chunk)
        chunk_spec(1),             # mask   (per time chunk, NOT Hp-broadcast)
        invariant((Fp, Hp)),       # w_in
        invariant((1, Hp)),        # b_in
        invariant((1, Hp)),        # w_d
        invariant((1, Hp)),        # b_d
        invariant((Hp, 4 * Hp)),   # w_ih
        invariant((Hp, 4 * Hp)),   # w_hh
        invariant((1, 4 * Hp)),    # b_lstm (= b_ih + b_hh)
        invariant((Hp, Cp)),       # w_out
        invariant((1, Cp)),        # b_out
    ]
    out_spec = pl.BlockSpec((BB, Cp), lambda bb, ck: (bb, 0))

    # ---- explicit VMEM budget (v5e/v6e default scoped limits are 16/32 MiB) -
    def nbytes(shape):
        n = 4
        for s in shape:
            n *= s
        return n

    block_shapes = [(rows_blk, Fp), (rows_blk, 1), (rows_blk, 1),
                    (Fp, Hp), (1, Hp), (1, Hp), (1, Hp),
                    (Hp, 4 * Hp), (Hp, 4 * Hp), (1, 4 * Hp),
                    (Hp, Cp), (1, Cp), (BB, Cp)]
    block_bytes = sum(nbytes(s) for s in block_shapes)
    scratch_bytes = nbytes((rows_blk, 4 * Hp)) + 2 * nbytes((BB, Hp))
    vmem_limit = int(min(2 * block_bytes + scratch_bytes + (16 << 20),
                         112 << 20))

    kernel = functools.partial(tlstm_kernel, T, Tp, use_bf16_prepass)
    out_padded = pl.pallas_call(
        kernel,
        out_shape=jax.ShapeDtypeStruct((Bpad, Cp), f32),
        grid_spec=pltpu.PrefetchScalarGridSpec(
            num_scalar_prefetch=0,
            grid=(n_bblk, n_chunks),
            in_specs=in_specs,
            out_specs=out_spec,
            scratch_shapes=[
                pltpu.VMEM((rows_blk, 4 * Hp), f32),   # per-chunk gates_x
                pltpu.VMEM((BB, Hp), f32),             # h carried across chunks
                pltpu.VMEM((BB, Hp), f32),             # c carried across chunks
            ]),
        compiler_params=pltpu.CompilerParams(
            dimension_semantics=("parallel", "arbitrary"),
            vmem_limit_bytes=vmem_limit),
    )(feats, delta, mask, w_in, b_in, w_d, b_d,
      w_ih, w_hh, b_lstm, w_out, b_out)

    return out_padded[:B, :C]


def reference_forward(x, lengths, params):
    """Pure-JAX reference mirroring the PyTorch forward (eval-mode dropout)."""
    B, T, _ = x.shape
    H = params["w_in"].shape[1]
    h = jnp.zeros((B, H), jnp.float32)
    c = jnp.zeros((B, H), jnp.float32)
    for t in range(T):
        mask = (t < lengths).astype(jnp.float32)[:, None]
        delta = x[:, t, -1:]
        feats = x[:, t, :-1]
        emb = jnp.tanh(feats @ params["w_in"] + params["b_in"])
        gamma = jax.nn.sigmoid(delta @ params["w_d"] + params["b_d"])
        c = c * gamma
        gates = emb @ params["w_ih"] + h @ params["w_hh"] + params["b_lstm"]
        i_g, f_g, g_g, o_g = jnp.split(gates, 4, axis=1)
        c = jax.nn.sigmoid(f_g) * c + jax.nn.sigmoid(i_g) * jnp.tanh(g_g)
        h = jax.nn.sigmoid(o_g) * jnp.tanh(c)
        h = h * mask
        c = c * mask
    return h @ params["w_out"] + params["b_out"]


def init_params(key, input_size, hidden_size, num_classes):
    F = input_size - 1
    H = hidden_size
    keys = jax.random.split(key, 10)
    s = 0.1
    # Weights stored pre-transposed to (in, out) for x @ W.
    return {
        "w_in":   s * jax.random.normal(keys[0], (F, H), jnp.float32),
        "b_in":   s * jax.random.normal(keys[1], (1, H), jnp.float32),
        "w_d":    s * jax.random.normal(keys[2], (1, H), jnp.float32),
        "b_d":    s * jax.random.normal(keys[3], (1, H), jnp.float32),
        "w_ih":   s * jax.random.normal(keys[4], (H, 4 * H), jnp.float32),
        "w_hh":   s * jax.random.normal(keys[5], (H, 4 * H), jnp.float32),
        # combined bias = b_ih + b_hh (PyTorch LSTMCell has two biases)
        "b_lstm": s * (jax.random.normal(keys[6], (1, 4 * H), jnp.float32)
                       + jax.random.normal(keys[7], (1, 4 * H), jnp.float32)),
        "w_out":  s * jax.random.normal(keys[8], (H, num_classes), jnp.float32),
        "b_out":  s * jax.random.normal(keys[9], (1, num_classes), jnp.float32),
    }


if __name__ == "__main__":
    key = jax.random.PRNGKey(0)
    k_x, k_p = jax.random.split(key)

    batch, seq_len = 2, 8
    input_size = 5           # 4 features + 1 time-delta column
    hidden_size = 32
    num_classes = 3

    x = jax.random.normal(k_x, (batch, seq_len, input_size), jnp.float32)
    lengths = jnp.array([8, 5], dtype=jnp.int32)
    params = init_params(k_p, input_size, hidden_size, num_classes)

    out = tlstm_forward(x, lengths, params)           # f32 pre-pass (default)
    out = jax.block_until_ready(out)

    ref = reference_forward(x, lengths, params)
    np.testing.assert_allclose(np.asarray(out), np.asarray(ref),
                               rtol=1e-4, atol=1e-4)
    print("KERNEL_OK")
</pallas_src>

<mosaic_0001>
module attributes {stable_mosaic.version = 11 : i64} {
  func.func @tlstm_kernel(%arg0: i32, %arg1: i32, %arg2: memref<64x4xf32, #tpu.memory_space<vmem>>, %arg3: memref<64x1xf32, #tpu.memory_space<vmem>>, %arg4: memref<64x1xf32, #tpu.memory_space<vmem>>, %arg5: memref<4x128xf32, #tpu.memory_space<vmem>>, %arg6: memref<1x128xf32, #tpu.memory_space<vmem>>, %arg7: memref<1x128xf32, #tpu.memory_space<vmem>>, %arg8: memref<1x128xf32, #tpu.memory_space<vmem>>, %arg9: memref<128x512xf32, #tpu.memory_space<vmem>>, %arg10: memref<128x512xf32, #tpu.memory_space<vmem>>, %arg11: memref<1x512xf32, #tpu.memory_space<vmem>>, %arg12: memref<128x128xf32, #tpu.memory_space<vmem>>, %arg13: memref<1x128xf32, #tpu.memory_space<vmem>>, %arg14: memref<8x128xf32, #tpu.memory_space<vmem>>, %arg15: memref<64x512xf32, #tpu.memory_space<vmem>>, %arg16: memref<8x128xf32, #tpu.memory_space<vmem>>, %arg17: memref<8x128xf32, #tpu.memory_space<vmem>>) attributes {dimension_semantics = [#tpu.dimension_semantics<parallel>, #tpu.dimension_semantics<arbitrary>], iteration_bounds = array<i64: 1, 1>, scalar_prefetch = 0 : i64, scratch_operands = 3 : i64, tpu.core_type = #tpu.core_type<tc>, window_params = [{transform_indices = @transform_0, window_bounds = array<i64: 64, 4>}, {transform_indices = @transform_1, window_bounds = array<i64: 64, 1>}, {transform_indices = @transform_2, window_bounds = array<i64: 64, 1>}, {pipeline_mode = #tpu.pipeline_mode<synchronous>, transform_indices = @transform_3, window_bounds = array<i64: 4, 128>}, {pipeline_mode = #tpu.pipeline_mode<synchronous>, transform_indices = @transform_4, window_bounds = array<i64: 1, 128>}, {pipeline_mode = #tpu.pipeline_mode<synchronous>, transform_indices = @transform_5, window_bounds = array<i64: 1, 128>}, {pipeline_mode = #tpu.pipeline_mode<synchronous>, transform_indices = @transform_6, window_bounds = array<i64: 1, 128>}, {pipeline_mode = #tpu.pipeline_mode<synchronous>, transform_indices = @transform_7, window_bounds = array<i64: 128, 512>}, {pipeline_mode = #tpu.pipeline_mode<synchronous>, transform_indices = @transform_8, window_bounds = array<i64: 128, 512>}, {pipeline_mode = #tpu.pipeline_mode<synchronous>, transform_indices = @transform_9, window_bounds = array<i64: 1, 512>}, {pipeline_mode = #tpu.pipeline_mode<synchronous>, transform_indices = @transform_10, window_bounds = array<i64: 128, 128>}, {pipeline_mode = #tpu.pipeline_mode<synchronous>, transform_indices = @transform_11, window_bounds = array<i64: 1, 128>}, {transform_indices = @transform_12, window_bounds = array<i64: 8, 128>}]} {
    %c0_i32 = arith.constant 0 : i32
    %0 = arith.cmpi eq, %arg1, %c0_i32 : i32
    %1 = arith.extui %0 : i1 to i32
    %c0_i32_0 = arith.constant 0 : i32
    %2 = arith.cmpi ne, %1, %c0_i32_0 : i32
    scf.if %2 {
      %cst_101 = arith.constant 0.000000e+00 : f32
      %448 = vector.broadcast %cst_101 : f32 to vector<8x128xf32>
      %c0_102 = arith.constant 0 : index
      %c0_103 = arith.constant 0 : index
      %449 = vector.load %arg16[%c0_102, %c0_103] : memref<8x128xf32, #tpu.memory_space<vmem>>, vector<8x128xf32>
      tpu.vector_store %arg16[%c0_102, %c0_103], %448 {strides = array<i32>} : memref<8x128xf32, #tpu.memory_space<vmem>>, vector<8x128xf32>,
      %cst_104 = arith.constant 0.000000e+00 : f32
      %450 = vector.broadcast %cst_104 : f32 to vector<8x128xf32>
      %c0_105 = arith.constant 0 : index
      %c0_106 = arith.constant 0 : index
      %451 = vector.load %arg17[%c0_105, %c0_106] : memref<8x128xf32, #tpu.memory_space<vmem>>, vector<8x128xf32>
      tpu.vector_store %arg17[%c0_105, %c0_106], %450 {strides = array<i32>} : memref<8x128xf32, #tpu.memory_space<vmem>>, vector<8x128xf32>,
    } else {
    }
    %c0 = arith.constant 0 : index
    %c0_1 = arith.constant 0 : index
    %3 = vector.load %arg2[%c0, %c0_1] : memref<64x4xf32, #tpu.memory_space<vmem>>, vector<64x4xf32>
    %c0_2 = arith.constant 0 : index
    %c0_3 = arith.constant 0 : index
    %4 = vector.load %arg5[%c0_2, %c0_3] : memref<4x128xf32, #tpu.memory_space<vmem>>, vector<4x128xf32>
    %5 = vector.extract_strided_slice %3 {offsets = [0, 0], sizes = [64, 1], strides = [1, 1]} : vector<64x4xf32> to vector<64x1xf32>
    %6 = vector.extract_strided_slice %4 {offsets = [0, 0], sizes = [1, 128], strides = [1, 1]} : vector<4x128xf32> to vector<1x128xf32>
    %7 = vector.broadcast %5 : vector<64x1xf32> to vector<64x128xf32>
    %8 = vector.broadcast %6 : vector<1x128xf32> to vector<64x128xf32>
    %9 = arith.mulf %7, %8 : vector<64x128xf32>
    %c0_4 = arith.constant 0 : index
    %c0_5 = arith.constant 0 : index
    %10 = vector.load %arg6[%c0_4, %c0_5] : memref<1x128xf32, #tpu.memory_space<vmem>>, vector<1x128xf32>
    %11 = vector.broadcast %10 : vector<1x128xf32> to vector<64x128xf32>
    %12 = arith.addf %9, %11 : vector<64x128xf32>
    %13 = vector.extract_strided_slice %3 {offsets = [0, 1], sizes = [64, 1], strides = [1, 1]} : vector<64x4xf32> to vector<64x1xf32>
    %14 = vector.extract_strided_slice %4 {offsets = [1, 0], sizes = [1, 128], strides = [1, 1]} : vector<4x128xf32> to vector<1x128xf32>
    %15 = vector.broadcast %13 : vector<64x1xf32> to vector<64x128xf32>
    %16 = vector.broadcast %14 : vector<1x128xf32> to vector<64x128xf32>
    %17 = arith.mulf %15, %16 : vector<64x128xf32>
    %18 = arith.addf %12, %17 : vector<64x128xf32>
    %19 = vector.extract_strided_slice %3 {offsets = [0, 2], sizes = [64, 1], strides = [1, 1]} : vector<64x4xf32> to vector<64x1xf32>
    %20 = vector.extract_strided_slice %4 {offsets = [2, 0], sizes = [1, 128], strides = [1, 1]} : vector<4x128xf32> to vector<1x128xf32>
    %21 = vector.broadcast %19 : vector<64x1xf32> to vector<64x128xf32>
    %22 = vector.broadcast %20 : vector<1x128xf32> to vector<64x128xf32>
    %23 = arith.mulf %21, %22 : vector<64x128xf32>
    %24 = arith.addf %18, %23 : vector<64x128xf32>
    %25 = vector.extract_strided_slice %3 {offsets = [0, 3], sizes = [64, 1], strides = [1, 1]} : vector<64x4xf32> to vector<64x1xf32>
    %26 = vector.extract_strided_slice %4 {offsets = [3, 0], sizes = [1, 128], strides = [1, 1]} : vector<4x128xf32> to vector<1x128xf32>
    %27 = vector.broadcast %25 : vector<64x1xf32> to vector<64x128xf32>
    %28 = vector.broadcast %26 : vector<1x128xf32> to vector<64x128xf32>
    %29 = arith.mulf %27, %28 : vector<64x128xf32>
    %30 = arith.addf %24, %29 : vector<64x128xf32>
    %31 = math.tanh %30 : vector<64x128xf32>
    %c0_6 = arith.constant 0 : index
    %c0_7 = arith.constant 0 : index
    %32 = vector.load %arg9[%c0_6, %c0_7] : memref<128x512xf32, #tpu.memory_space<vmem>>, vector<128x512xf32>
    %cst = arith.constant dense<0.000000e+00> : vector<64x512xf32>
    %33 = tpu.matmul %31, %32, %cst {dimension_numbers = #tpu.dot_dimension_numbers<[1], [0], [0], [1], [0, 0, 1, 1], [], []>} : vector<64x128xf32>, vector<128x512xf32>, vector<64x512xf32> -> vector<64x512xf32>
    %c0_8 = arith.constant 0 : index
    %c0_9 = arith.constant 0 : index
    %34 = vector.load %arg11[%c0_8, %c0_9] : memref<1x512xf32, #tpu.memory_space<vmem>>, vector<1x512xf32>
    %35 = vector.broadcast %34 : vector<1x512xf32> to vector<64x512xf32>
    %36 = arith.addf %33, %35 : vector<64x512xf32>
    %c0_10 = arith.constant 0 : index
    %c0_11 = arith.constant 0 : index
    %37 = vector.load %arg15[%c0_10, %c0_11] : memref<64x512xf32, #tpu.memory_space<vmem>>, vector<64x512xf32>
    tpu.vector_store %arg15[%c0_10, %c0_11], %36 {strides = array<i32>} : memref<64x512xf32, #tpu.memory_space<vmem>>, vector<64x512xf32>,
    %c0_12 = arith.constant 0 : index
    %c0_13 = arith.constant 0 : index
    %38 = vector.load %arg10[%c0_12, %c0_13] : memref<128x512xf32, #tpu.memory_space<vmem>>, vector<128x512xf32>
    %c0_14 = arith.constant 0 : index
    %c0_15 = arith.constant 0 : index
    %39 = vector.load %arg7[%c0_14, %c0_15] : memref<1x128xf32, #tpu.memory_space<vmem>>, vector<1x128xf32>
    %c0_16 = arith.constant 0 : index
    %c0_17 = arith.constant 0 : index
    %40 = vector.load %arg8[%c0_16, %c0_17] : memref<1x128xf32, #tpu.memory_space<vmem>>, vector<1x128xf32>
    %c0_18 = arith.constant 0 : index
    %c0_19 = arith.constant 0 : index
    %41 = vector.load %arg16[%c0_18, %c0_19] : memref<8x128xf32, #tpu.memory_space<vmem>>, vector<8x128xf32>
    %c0_20 = arith.constant 0 : index
    %c0_21 = arith.constant 0 : index
    %42 = vector.load %arg17[%c0_20, %c0_21] : memref<8x128xf32, #tpu.memory_space<vmem>>, vector<8x128xf32>
    %c0_i32_22 = arith.constant 0 : i32
    %c8_i32 = arith.constant 8 : i32
    %43 = arith.muli %c0_i32_22, %c8_i32 : i32
    %44 = tpu.assume_multiple %43, 8 : i32
    %45 = arith.index_cast %44 : i32 to index
    %c0_23 = arith.constant 0 : index
    %46 = vector.load %arg15[%45, %c0_23] : memref<64x512xf32, #tpu.memory_space<vmem>>, vector<8x512xf32>
    %47 = arith.index_cast %44 : i32 to index
    %c0_24 = arith.constant 0 : index
    %48 = vector.load %arg3[%47, %c0_24] : memref<64x1xf32, #tpu.memory_space<vmem>>, vector<8x1xf32>
    %49 = arith.index_cast %44 : i32 to index
    %c0_25 = arith.constant 0 : index
    %50 = vector.load %arg4[%49, %c0_25] : memref<64x1xf32, #tpu.memory_space<vmem>>, vector<8x1xf32>
    %51 = vector.broadcast %48 : vector<8x1xf32> to vector<8x128xf32>
    %52 = vector.broadcast %39 : vector<1x128xf32> to vector<8x128xf32>
    %53 = arith.mulf %51, %52 : vector<8x128xf32>
    %54 = vector.broadcast %40 : vector<1x128xf32> to vector<8x128xf32>
    %55 = arith.addf %53, %54 : vector<8x128xf32>
    %56 = arith.negf %55 : vector<8x128xf32>
    %57 = math.exp %56 : vector<8x128xf32>
    %cst_26 = arith.constant 1.000000e+00 : f32
    %58 = vector.broadcast %cst_26 : f32 to vector<8x128xf32>
    %59 = arith.addf %58, %57 : vector<8x128xf32>
    %60 = arith.divf %58, %59 : vector<8x128xf32>
    %61 = arith.mulf %42, %60 : vector<8x128xf32>
    %cst_27 = arith.constant dense<0.000000e+00> : vector<8x512xf32>
    %62 = tpu.matmul %41, %38, %cst_27 {dimension_numbers = #tpu.dot_dimension_numbers<[1], [0], [0], [1], [0, 0, 1, 1], [], []>} : vector<8x128xf32>, vector<128x512xf32>, vector<8x512xf32> -> vector<8x512xf32>
    %63 = arith.addf %46, %62 : vector<8x512xf32>
    %64 = vector.extract_strided_slice %63 {offsets = [0, 0], sizes = [8, 128], strides = [1, 1]} : vector<8x512xf32> to vector<8x128xf32>
    %65 = arith.negf %64 : vector<8x128xf32>
    %66 = math.exp %65 : vector<8x128xf32>
    %cst_28 = arith.constant 1.000000e+00 : f32
    %67 = vector.broadcast %cst_28 : f32 to vector<8x128xf32>
    %68 = arith.addf %67, %66 : vector<8x128xf32>
    %69 = arith.divf %67, %68 : vector<8x128xf32>
    %70 = vector.extract_strided_slice %63 {offsets = [0, 128], sizes = [8, 128], strides = [1, 1]} : vector<8x512xf32> to vector<8x128xf32>
    %71 = arith.negf %70 : vector<8x128xf32>
    %72 = math.exp %71 : vector<8x128xf32>
    %cst_29 = arith.constant 1.000000e+00 : f32
    %73 = vector.broadcast %cst_29 : f32 to vector<8x128xf32>
    %74 = arith.addf %73, %72 : vector<8x128xf32>
    %75 = arith.divf %73, %74 : vector<8x128xf32>
    %76 = vector.extract_strided_slice %63 {offsets = [0, 256], sizes = [8, 128], strides = [1, 1]} : vector<8x512xf32> to vector<8x128xf32>
    %77 = math.tanh %76 : vector<8x128xf32>
    %78 = vector.extract_strided_slice %63 {offsets = [0, 384], sizes = [8, 128], strides = [1, 1]} : vector<8x512xf32> to vector<8x128xf32>
    %79 = arith.negf %78 : vector<8x128xf32>
    %80 = math.exp %79 : vector<8x128xf32>
    %cst_30 = arith.constant 1.000000e+00 : f32
    %81 = vector.broadcast %cst_30 : f32 to vector<8x128xf32>
    %82 = arith.addf %81, %80 : vector<8x128xf32>
    %83 = arith.divf %81, %82 : vector<8x128xf32>
    %84 = arith.mulf %75, %61 : vector<8x128xf32>
    %85 = arith.mulf %69, %77 : vector<8x128xf32>
    %86 = arith.addf %84, %85 : vector<8x128xf32>
    %87 = math.tanh %86 : vector<8x128xf32>
    %88 = arith.mulf %83, %87 : vector<8x128xf32>
    %89 = vector.broadcast %50 : vector<8x1xf32> to vector<8x128xf32>
    %90 = arith.mulf %88, %89 : vector<8x128xf32>
    %91 = vector.broadcast %50 : vector<8x1xf32> to vector<8x128xf32>
    %92 = arith.mulf %86, %91 : vector<8x128xf32>
    %c1_i32 = arith.constant 1 : i32
    %c8_i32_31 = arith.constant 8 : i32
    %93 = arith.muli %c1_i32, %c8_i32_31 : i32
    %94 = tpu.assume_multiple %93, 8 : i32
    %95 = arith.index_cast %94 : i32 to index
    %c0_32 = arith.constant 0 : index
    %96 = vector.load %arg15[%95, %c0_32] : memref<64x512xf32, #tpu.memory_space<vmem>>, vector<8x512xf32>
    %97 = arith.index_cast %94 : i32 to index
    %c0_33 = arith.constant 0 : index
    %98 = vector.load %arg3[%97, %c0_33] : memref<64x1xf32, #tpu.memory_space<vmem>>, vector<8x1xf32>
    %99 = arith.index_cast %94 : i32 to index
    %c0_34 = arith.constant 0 : index
    %100 = vector.load %arg4[%99, %c0_34] : memref<64x1xf32, #tpu.memory_space<vmem>>, vector<8x1xf32>
    %101 = vector.broadcast %98 : vector<8x1xf32> to vector<8x128xf32>
    %102 = vector.broadcast %39 : vector<1x128xf32> to vector<8x128xf32>
    %103 = arith.mulf %101, %102 : vector<8x128xf32>
    %104 = vector.broadcast %40 : vector<1x128xf32> to vector<8x128xf32>
    %105 = arith.addf %103, %104 : vector<8x128xf32>
    %106 = arith.negf %105 : vector<8x128xf32>
    %107 = math.exp %106 : vector<8x128xf32>
    %cst_35 = arith.constant 1.000000e+00 : f32
    %108 = vector.broadcast %cst_35 : f32 to vector<8x128xf32>
    %109 = arith.addf %108, %107 : vector<8x128xf32>
    %110 = arith.divf %108, %109 : vector<8x128xf32>
    %111 = arith.mulf %92, %110 : vector<8x128xf32>
    %cst_36 = arith.constant dense<0.000000e+00> : vector<8x512xf32>
    %112 = tpu.matmul %90, %38, %cst_36 {dimension_numbers = #tpu.dot_dimension_numbers<[1], [0], [0], [1], [0, 0, 1, 1], [], []>} : vector<8x128xf32>, vector<128x512xf32>, vector<8x512xf32> -> vector<8x512xf32>
    %113 = arith.addf %96, %112 : vector<8x512xf32>
    %114 = vector.extract_strided_slice %113 {offsets = [0, 0], sizes = [8, 128], strides = [1, 1]} : vector<8x512xf32> to vector<8x128xf32>
    %115 = arith.negf %114 : vector<8x128xf32>
    %116 = math.exp %115 : vector<8x128xf32>
    %cst_37 = arith.constant 1.000000e+00 : f32
    %117 = vector.broadcast %cst_37 : f32 to vector<8x128xf32>
    %118 = arith.addf %117, %116 : vector<8x128xf32>
    %119 = arith.divf %117, %118 : vector<8x128xf32>
    %120 = vector.extract_strided_slice %113 {offsets = [0, 128], sizes = [8, 128], strides = [1, 1]} : vector<8x512xf32> to vector<8x128xf32>
    %121 = arith.negf %120 : vector<8x128xf32>
    %122 = math.exp %121 : vector<8x128xf32>
    %cst_38 = arith.constant 1.000000e+00 : f32
    %123 = vector.broadcast %cst_38 : f32 to vector<8x128xf32>
    %124 = arith.addf %123, %122 : vector<8x128xf32>
    %125 = arith.divf %123, %124 : vector<8x128xf32>
    %126 = vector.extract_strided_slice %113 {offsets = [0, 256], sizes = [8, 128], strides = [1, 1]} : vector<8x512xf32> to vector<8x128xf32>
    %127 = math.tanh %126 : vector<8x128xf32>
    %128 = vector.extract_strided_slice %113 {offsets = [0, 384], sizes = [8, 128], strides = [1, 1]} : vector<8x512xf32> to vector<8x128xf32>
    %129 = arith.negf %128 : vector<8x128xf32>
    %130 = math.exp %129 : vector<8x128xf32>
    %cst_39 = arith.constant 1.000000e+00 : f32
    %131 = vector.broadcast %cst_39 : f32 to vector<8x128xf32>
    %132 = arith.addf %131, %130 : vector<8x128xf32>
    %133 = arith.divf %131, %132 : vector<8x128xf32>
    %134 = arith.mulf %125, %111 : vector<8x128xf32>
    %135 = arith.mulf %119, %127 : vector<8x128xf32>
    %136 = arith.addf %134, %135 : vector<8x128xf32>
    %137 = math.tanh %136 : vector<8x128xf32>
    %138 = arith.mulf %133, %137 : vector<8x128xf32>
    %139 = vector.broadcast %100 : vector<8x1xf32> to vector<8x128xf32>
    %140 = arith.mulf %138, %139 : vector<8x128xf32>
    %141 = vector.broadcast %100 : vector<8x1xf32> to vector<8x128xf32>
    %142 = arith.mulf %136, %141 : vector<8x128xf32>
    %c2_i32 = arith.constant 2 : i32
    %c8_i32_40 = arith.constant 8 : i32
    %143 = arith.muli %c2_i32, %c8_i32_40 : i32
    %144 = tpu.assume_multiple %143, 8 : i32
    %145 = arith.index_cast %144 : i32 to index
    %c0_41 = arith.constant 0 : index
    %146 = vector.load %arg15[%145, %c0_41] : memref<64x512xf32, #tpu.memory_space<vmem>>, vector<8x512xf32>
    %147 = arith.index_cast %144 : i32 to index
    %c0_42 = arith.constant 0 : index
    %148 = vector.load %arg3[%147, %c0_42] : memref<64x1xf32, #tpu.memory_space<vmem>>, vector<8x1xf32>
    %149 = arith.index_cast %144 : i32 to index
    %c0_43 = arith.constant 0 : index
    %150 = vector.load %arg4[%149, %c0_43] : memref<64x1xf32, #tpu.memory_space<vmem>>, vector<8x1xf32>
    %151 = vector.broadcast %148 : vector<8x1xf32> to vector<8x128xf32>
    %152 = vector.broadcast %39 : vector<1x128xf32> to vector<8x128xf32>
    %153 = arith.mulf %151, %152 : vector<8x128xf32>
    %154 = vector.broadcast %40 : vector<1x128xf32> to vector<8x128xf32>
    %155 = arith.addf %153, %154 : vector<8x128xf32>
    %156 = arith.negf %155 : vector<8x128xf32>
    %157 = math.exp %156 : vector<8x128xf32>
    %cst_44 = arith.constant 1.000000e+00 : f32
    %158 = vector.broadcast %cst_44 : f32 to vector<8x128xf32>
    %159 = arith.addf %158, %157 : vector<8x128xf32>
    %160 = arith.divf %158, %159 : vector<8x128xf32>
    %161 = arith.mulf %142, %160 : vector<8x128xf32>
    %cst_45 = arith.constant dense<0.000000e+00> : vector<8x512xf32>
    %162 = tpu.matmul %140, %38, %cst_45 {dimension_numbers = #tpu.dot_dimension_numbers<[1], [0], [0], [1], [0, 0, 1, 1], [], []>} : vector<8x128xf32>, vector<128x512xf32>, vector<8x512xf32> -> vector<8x512xf32>
    %163 = arith.addf %146, %162 : vector<8x512xf32>
    %164 = vector.extract_strided_slice %163 {offsets = [0, 0], sizes = [8, 128], strides = [1, 1]} : vector<8x512xf32> to vector<8x128xf32>
    %165 = arith.negf %164 : vector<8x128xf32>
    %166 = math.exp %165 : vector<8x128xf32>
    %cst_46 = arith.constant 1.000000e+00 : f32
    %167 = vector.broadcast %cst_46 : f32 to vector<8x128xf32>
    %168 = arith.addf %167, %166 : vector<8x128xf32>
    %169 = arith.divf %167, %168 : vector<8x128xf32>
    %170 = vector.extract_strided_slice %163 {offsets = [0, 128], sizes = [8, 128], strides = [1, 1]} : vector<8x512xf32> to vector<8x128xf32>
    %171 = arith.negf %170 : vector<8x128xf32>
    %172 = math.exp %171 : vector<8x128xf32>
    %cst_47 = arith.constant 1.000000e+00 : f32
    %173 = vector.broadcast %cst_47 : f32 to vector<8x128xf32>
    %174 = arith.addf %173, %172 : vector<8x128xf32>
    %175 = arith.divf %173, %174 : vector<8x128xf32>
    %176 = vector.extract_strided_slice %163 {offsets = [0, 256], sizes = [8, 128], strides = [1, 1]} : vector<8x512xf32> to vector<8x128xf32>
    %177 = math.tanh %176 : vector<8x128xf32>
    %178 = vector.extract_strided_slice %163 {offsets = [0, 384], sizes = [8, 128], strides = [1, 1]} : vector<8x512xf32> to vector<8x128xf32>
    %179 = arith.negf %178 : vector<8x128xf32>
    %180 = math.exp %179 : vector<8x128xf32>
    %cst_48 = arith.constant 1.000000e+00 : f32
    %181 = vector.broadcast %cst_48 : f32 to vector<8x128xf32>
    %182 = arith.addf %181, %180 : vector<8x128xf32>
    %183 = arith.divf %181, %182 : vector<8x128xf32>
    %184 = arith.mulf %175, %161 : vector<8x128xf32>
    %185 = arith.mulf %169, %177 : vector<8x128xf32>
    %186 = arith.addf %184, %185 : vector<8x128xf32>
    %187 = math.tanh %186 : vector<8x128xf32>
    %188 = arith.mulf %183, %187 : vector<8x128xf32>
    %189 = vector.broadcast %150 : vector<8x1xf32> to vector<8x128xf32>
    %190 = arith.mulf %188, %189 : vector<8x128xf32>
    %191 = vector.broadcast %150 : vector<8x1xf32> to vector<8x128xf32>
    %192 = arith.mulf %186, %191 : vector<8x128xf32>
    %c3_i32 = arith.constant 3 : i32
    %c8_i32_49 = arith.constant 8 : i32
    %193 = arith.muli %c3_i32, %c8_i32_49 : i32
    %194 = tpu.assume_multiple %193, 8 : i32
    %195 = arith.index_cast %194 : i32 to index
    %c0_50 = arith.constant 0 : index
    %196 = vector.load %arg15[%195, %c0_50] : memref<64x512xf32, #tpu.memory_space<vmem>>, vector<8x512xf32>
    %197 = arith.index_cast %194 : i32 to index
    %c0_51 = arith.constant 0 : index
    %198 = vector.load %arg3[%197, %c0_51] : memref<64x1xf32, #tpu.memory_space<vmem>>, vector<8x1xf32>
    %199 = arith.index_cast %194 : i32 to index
    %c0_52 = arith.constant 0 : index
    %200 = vector.load %arg4[%199, %c0_52] : memref<64x1xf32, #tpu.memory_space<vmem>>, vector<8x1xf32>
    %201 = vector.broadcast %198 : vector<8x1xf32> to vector<8x128xf32>
    %202 = vector.broadcast %39 : vector<1x128xf32> to vector<8x128xf32>
    %203 = arith.mulf %201, %202 : vector<8x128xf32>
    %204 = vector.broadcast %40 : vector<1x128xf32> to vector<8x128xf32>
    %205 = arith.addf %203, %204 : vector<8x128xf32>
    %206 = arith.negf %205 : vector<8x128xf32>
    %207 = math.exp %206 : vector<8x128xf32>
    %cst_53 = arith.constant 1.000000e+00 : f32
    %208 = vector.broadcast %cst_53 : f32 to vector<8x128xf32>
    %209 = arith.addf %208, %207 : vector<8x128xf32>
    %210 = arith.divf %208, %209 : vector<8x128xf32>
    %211 = arith.mulf %192, %210 : vector<8x128xf32>
    %cst_54 = arith.constant dense<0.000000e+00> : vector<8x512xf32>
    %212 = tpu.matmul %190, %38, %cst_54 {dimension_numbers = #tpu.dot_dimension_numbers<[1], [0], [0], [1], [0, 0, 1, 1], [], []>} : vector<8x128xf32>, vector<128x512xf32>, vector<8x512xf32> -> vector<8x512xf32>
    %213 = arith.addf %196, %212 : vector<8x512xf32>
    %214 = vector.extract_strided_slice %213 {offsets = [0, 0], sizes = [8, 128], strides = [1, 1]} : vector<8x512xf32> to vector<8x128xf32>
    %215 = arith.negf %214 : vector<8x128xf32>
    %216 = math.exp %215 : vector<8x128xf32>
    %cst_55 = arith.constant 1.000000e+00 : f32
    %217 = vector.broadcast %cst_55 : f32 to vector<8x128xf32>
    %218 = arith.addf %217, %216 : vector<8x128xf32>
    %219 = arith.divf %217, %218 : vector<8x128xf32>
    %220 = vector.extract_strided_slice %213 {offsets = [0, 128], sizes = [8, 128], strides = [1, 1]} : vector<8x512xf32> to vector<8x128xf32>
    %221 = arith.negf %220 : vector<8x128xf32>
    %222 = math.exp %221 : vector<8x128xf32>
    %cst_56 = arith.constant 1.000000e+00 : f32
    %223 = vector.broadcast %cst_56 : f32 to vector<8x128xf32>
    %224 = arith.addf %223, %222 : vector<8x128xf32>
    %225 = arith.divf %223, %224 : vector<8x128xf32>
    %226 = vector.extract_strided_slice %213 {offsets = [0, 256], sizes = [8, 128], strides = [1, 1]} : vector<8x512xf32> to vector<8x128xf32>
    %227 = math.tanh %226 : vector<8x128xf32>
    %228 = vector.extract_strided_slice %213 {offsets = [0, 384], sizes = [8, 128], strides = [1, 1]} : vector<8x512xf32> to vector<8x128xf32>
    %229 = arith.negf %228 : vector<8x128xf32>
    %230 = math.exp %229 : vector<8x128xf32>
    %cst_57 = arith.constant 1.000000e+00 : f32
    %231 = vector.broadcast %cst_57 : f32 to vector<8x128xf32>
    %232 = arith.addf %231, %230 : vector<8x128xf32>
    %233 = arith.divf %231, %232 : vector<8x128xf32>
    %234 = arith.mulf %225, %211 : vector<8x128xf32>
    %235 = arith.mulf %219, %227 : vector<8x128xf32>
    %236 = arith.addf %234, %235 : vector<8x128xf32>
    %237 = math.tanh %236 : vector<8x128xf32>
    %238 = arith.mulf %233, %237 : vector<8x128xf32>
    %239 = vector.broadcast %200 : vector<8x1xf32> to vector<8x128xf32>
    %240 = arith.mulf %238, %239 : vector<8x128xf32>
    %241 = vector.broadcast %200 : vector<8x1xf32> to vector<8x128xf32>
    %242 = arith.mulf %236, %241 : vector<8x128xf32>
    %c4_i32 = arith.constant 4 : i32
    %c8_i32_58 = arith.constant 8 : i32
    %243 = arith.muli %c4_i32, %c8_i32_58 : i32
    %244 = tpu.assume_multiple %243, 8 : i32
    %245 = arith.index_cast %244 : i32 to index
    %c0_59 = arith.constant 0 : index
    %246 = vector.load %arg15[%245, %c0_59] : memref<64x512xf32, #tpu.memory_space<vmem>>, vector<8x512xf32>
    %247 = arith.index_cast %244 : i32 to index
    %c0_60 = arith.constant 0 : index
    %248 = vector.load %arg3[%247, %c0_60] : memref<64x1xf32, #tpu.memory_space<vmem>>, vector<8x1xf32>
    %249 = arith.index_cast %244 : i32 to index
    %c0_61 = arith.constant 0 : index
    %250 = vector.load %arg4[%249, %c0_61] : memref<64x1xf32, #tpu.memory_space<vmem>>, vector<8x1xf32>
    %251 = vector.broadcast %248 : vector<8x1xf32> to vector<8x128xf32>
    %252 = vector.broadcast %39 : vector<1x128xf32> to vector<8x128xf32>
    %253 = arith.mulf %251, %252 : vector<8x128xf32>
    %254 = vector.broadcast %40 : vector<1x128xf32> to vector<8x128xf32>
    %255 = arith.addf %253, %254 : vector<8x128xf32>
    %256 = arith.negf %255 : vector<8x128xf32>
    %257 = math.exp %256 : vector<8x128xf32>
    %cst_62 = arith.constant 1.000000e+00 : f32
    %258 = vector.broadcast %cst_62 : f32 to vector<8x128xf32>
    %259 = arith.addf %258, %257 : vector<8x128xf32>
    %260 = arith.divf %258, %259 : vector<8x128xf32>
    %261 = arith.mulf %242, %260 : vector<8x128xf32>
    %cst_63 = arith.constant dense<0.000000e+00> : vector<8x512xf32>
    %262 = tpu.matmul %240, %38, %cst_63 {dimension_numbers = #tpu.dot_dimension_numbers<[1], [0], [0], [1], [0, 0, 1, 1], [], []>} : vector<8x128xf32>, vector<128x512xf32>, vector<8x512xf32> -> vector<8x512xf32>
    %263 = arith.addf %246, %262 : vector<8x512xf32>
    %264 = vector.extract_strided_slice %263 {offsets = [0, 0], sizes = [8, 128], strides = [1, 1]} : vector<8x512xf32> to vector<8x128xf32>
    %265 = arith.negf %264 : vector<8x128xf32>
    %266 = math.exp %265 : vector<8x128xf32>
    %cst_64 = arith.constant 1.000000e+00 : f32
    %267 = vector.broadcast %cst_64 : f32 to vector<8x128xf32>
    %268 = arith.addf %267, %266 : vector<8x128xf32>
    %269 = arith.divf %267, %268 : vector<8x128xf32>
    %270 = vector.extract_strided_slice %263 {offsets = [0, 128], sizes = [8, 128], strides = [1, 1]} : vector<8x512xf32> to vector<8x128xf32>
    %271 = arith.negf %270 : vector<8x128xf32>
    %272 = math.exp %271 : vector<8x128xf32>
    %cst_65 = arith.constant 1.000000e+00 : f32
    %273 = vector.broadcast %cst_65 : f32 to vector<8x128xf32>
    %274 = arith.addf %273, %272 : vector<8x128xf32>
    %275 = arith.divf %273, %274 : vector<8x128xf32>
    %276 = vector.extract_strided_slice %263 {offsets = [0, 256], sizes = [8, 128], strides = [1, 1]} : vector<8x512xf32> to vector<8x128xf32>
    %277 = math.tanh %276 : vector<8x128xf32>
    %278 = vector.extract_strided_slice %263 {offsets = [0, 384], sizes = [8, 128], strides = [1, 1]} : vector<8x512xf32> to vector<8x128xf32>
    %279 = arith.negf %278 : vector<8x128xf32>
    %280 = math.exp %279 : vector<8x128xf32>
    %cst_66 = arith.constant 1.000000e+00 : f32
    %281 = vector.broadcast %cst_66 : f32 to vector<8x128xf32>
    %282 = arith.addf %281, %280 : vector<8x128xf32>
    %283 = arith.divf %281, %282 : vector<8x128xf32>
    %284 = arith.mulf %275, %261 : vector<8x128xf32>
    %285 = arith.mulf %269, %277 : vector<8x128xf32>
    %286 = arith.addf %284, %285 : vector<8x128xf32>
    %287 = math.tanh %286 : vector<8x128xf32>
    %288 = arith.mulf %283, %287 : vector<8x128xf32>
    %289 = vector.broadcast %250 : vector<8x1xf32> to vector<8x128xf32>
    %290 = arith.mulf %288, %289 : vector<8x128xf32>
    %291 = vector.broadcast %250 : vector<8x1xf32> to vector<8x128xf32>
    %292 = arith.mulf %286, %291 : vector<8x128xf32>
    %c5_i32 = arith.constant 5 : i32
    %c8_i32_67 = arith.constant 8 : i32
    %293 = arith.muli %c5_i32, %c8_i32_67 : i32
    %294 = tpu.assume_multiple %293, 8 : i32
    %295 = arith.index_cast %294 : i32 to index
    %c0_68 = arith.constant 0 : index
    %296 = vector.load %arg15[%295, %c0_68] : memref<64x512xf32, #tpu.memory_space<vmem>>, vector<8x512xf32>
    %297 = arith.index_cast %294 : i32 to index
    %c0_69 = arith.constant 0 : index
    %298 = vector.load %arg3[%297, %c0_69] : memref<64x1xf32, #tpu.memory_space<vmem>>, vector<8x1xf32>
    %299 = arith.index_cast %294 : i32 to index
    %c0_70 = arith.constant 0 : index
    %300 = vector.load %arg4[%299, %c0_70] : memref<64x1xf32, #tpu.memory_space<vmem>>, vector<8x1xf32>
    %301 = vector.broadcast %298 : vector<8x1xf32> to vector<8x128xf32>
    %302 = vector.broadcast %39 : vector<1x128xf32> to vector<8x128xf32>
    %303 = arith.mulf %301, %302 : vector<8x128xf32>
    %304 = vector.broadcast %40 : vector<1x128xf32> to vector<8x128xf32>
    %305 = arith.addf %303, %304 : vector<8x128xf32>
    %306 = arith.negf %305 : vector<8x128xf32>
    %307 = math.exp %306 : vector<8x128xf32>
    %cst_71 = arith.constant 1.000000e+00 : f32
    %308 = vector.broadcast %cst_71 : f32 to vector<8x128xf32>
    %309 = arith.addf %308, %307 : vector<8x128xf32>
    %310 = arith.divf %308, %309 : vector<8x128xf32>
    %311 = arith.mulf %292, %310 : vector<8x128xf32>
    %cst_72 = arith.constant dense<0.000000e+00> : vector<8x512xf32>
    %312 = tpu.matmul %290, %38, %cst_72 {dimension_numbers = #tpu.dot_dimension_numbers<[1], [0], [0], [1], [0, 0, 1, 1], [], []>} : vector<8x128xf32>, vector<128x512xf32>, vector<8x512xf32> -> vector<8x512xf32>
    %313 = arith.addf %296, %312 : vector<8x512xf32>
    %314 = vector.extract_strided_slice %313 {offsets = [0, 0], sizes = [8, 128], strides = [1, 1]} : vector<8x512xf32> to vector<8x128xf32>
    %315 = arith.negf %314 : vector<8x128xf32>
    %316 = math.exp %315 : vector<8x128xf32>
    %cst_73 = arith.constant 1.000000e+00 : f32
    %317 = vector.broadcast %cst_73 : f32 to vector<8x128xf32>
    %318 = arith.addf %317, %316 : vector<8x128xf32>
    %319 = arith.divf %317, %318 : vector<8x128xf32>
    %320 = vector.extract_strided_slice %313 {offsets = [0, 128], sizes = [8, 128], strides = [1, 1]} : vector<8x512xf32> to vector<8x128xf32>
    %321 = arith.negf %320 : vector<8x128xf32>
    %322 = math.exp %321 : vector<8x128xf32>
    %cst_74 = arith.constant 1.000000e+00 : f32
    %323 = vector.broadcast %cst_74 : f32 to vector<8x128xf32>
    %324 = arith.addf %323, %322 : vector<8x128xf32>
    %325 = arith.divf %323, %324 : vector<8x128xf32>
    %326 = vector.extract_strided_slice %313 {offsets = [0, 256], sizes = [8, 128], strides = [1, 1]} : vector<8x512xf32> to vector<8x128xf32>
    %327 = math.tanh %326 : vector<8x128xf32>
    %328 = vector.extract_strided_slice %313 {offsets = [0, 384], sizes = [8, 128], strides = [1, 1]} : vector<8x512xf32> to vector<8x128xf32>
    %329 = arith.negf %328 : vector<8x128xf32>
    %330 = math.exp %329 : vector<8x128xf32>
    %cst_75 = arith.constant 1.000000e+00 : f32
    %331 = vector.broadcast %cst_75 : f32 to vector<8x128xf32>
    %332 = arith.addf %331, %330 : vector<8x128xf32>
    %333 = arith.divf %331, %332 : vector<8x128xf32>
    %334 = arith.mulf %325, %311 : vector<8x128xf32>
    %335 = arith.mulf %319, %327 : vector<8x128xf32>
    %336 = arith.addf %334, %335 : vector<8x128xf32>
    %337 = math.tanh %336 : vector<8x128xf32>
    %338 = arith.mulf %333, %337 : vector<8x128xf32>
    %339 = vector.broadcast %300 : vector<8x1xf32> to vector<8x128xf32>
    %340 = arith.mulf %338, %339 : vector<8x128xf32>
    %341 = vector.broadcast %300 : vector<8x1xf32> to vector<8x128xf32>
    %342 = arith.mulf %336, %341 : vector<8x128xf32>
    %c6_i32 = arith.constant 6 : i32
    %c8_i32_76 = arith.constant 8 : i32
    %343 = arith.muli %c6_i32, %c8_i32_76 : i32
    %344 = tpu.assume_multiple %343, 8 : i32
    %345 = arith.index_cast %344 : i32 to index
    %c0_77 = arith.constant 0 : index
    %346 = vector.load %arg15[%345, %c0_77] : memref<64x512xf32, #tpu.memory_space<vmem>>, vector<8x512xf32>
    %347 = arith.index_cast %344 : i32 to index
    %c0_78 = arith.constant 0 : index
    %348 = vector.load %arg3[%347, %c0_78] : memref<64x1xf32, #tpu.memory_space<vmem>>, vector<8x1xf32>
    %349 = arith.index_cast %344 : i32 to index
    %c0_79 = arith.constant 0 : index
    %350 = vector.load %arg4[%349, %c0_79] : memref<64x1xf32, #tpu.memory_space<vmem>>, vector<8x1xf32>
    %351 = vector.broadcast %348 : vector<8x1xf32> to vector<8x128xf32>
    %352 = vector.broadcast %39 : vector<1x128xf32> to vector<8x128xf32>
    %353 = arith.mulf %351, %352 : vector<8x128xf32>
    %354 = vector.broadcast %40 : vector<1x128xf32> to vector<8x128xf32>
    %355 = arith.addf %353, %354 : vector<8x128xf32>
    %356 = arith.negf %355 : vector<8x128xf32>
    %357 = math.exp %356 : vector<8x128xf32>
    %cst_80 = arith.constant 1.000000e+00 : f32
    %358 = vector.broadcast %cst_80 : f32 to vector<8x128xf32>
    %359 = arith.addf %358, %357 : vector<8x128xf32>
    %360 = arith.divf %358, %359 : vector<8x128xf32>
    %361 = arith.mulf %342, %360 : vector<8x128xf32>
    %cst_81 = arith.constant dense<0.000000e+00> : vector<8x512xf32>
    %362 = tpu.matmul %340, %38, %cst_81 {dimension_numbers = #tpu.dot_dimension_numbers<[1], [0], [0], [1], [0, 0, 1, 1], [], []>} : vector<8x128xf32>, vector<128x512xf32>, vector<8x512xf32> -> vector<8x512xf32>
    %363 = arith.addf %346, %362 : vector<8x512xf32>
    %364 = vector.extract_strided_slice %363 {offsets = [0, 0], sizes = [8, 128], strides = [1, 1]} : vector<8x512xf32> to vector<8x128xf32>
    %365 = arith.negf %364 : vector<8x128xf32>
    %366 = math.exp %365 : vector<8x128xf32>
    %cst_82 = arith.constant 1.000000e+00 : f32
    %367 = vector.broadcast %cst_82 : f32 to vector<8x128xf32>
    %368 = arith.addf %367, %366 : vector<8x128xf32>
    %369 = arith.divf %367, %368 : vector<8x128xf32>
    %370 = vector.extract_strided_slice %363 {offsets = [0, 128], sizes = [8, 128], strides = [1, 1]} : vector<8x512xf32> to vector<8x128xf32>
    %371 = arith.negf %370 : vector<8x128xf32>
    %372 = math.exp %371 : vector<8x128xf32>
    %cst_83 = arith.constant 1.000000e+00 : f32
    %373 = vector.broadcast %cst_83 : f32 to vector<8x128xf32>
    %374 = arith.addf %373, %372 : vector<8x128xf32>
    %375 = arith.divf %373, %374 : vector<8x128xf32>
    %376 = vector.extract_strided_slice %363 {offsets = [0, 256], sizes = [8, 128], strides = [1, 1]} : vector<8x512xf32> to vector<8x128xf32>
    %377 = math.tanh %376 : vector<8x128xf32>
    %378 = vector.extract_strided_slice %363 {offsets = [0, 384], sizes = [8, 128], strides = [1, 1]} : vector<8x512xf32> to vector<8x128xf32>
    %379 = arith.negf %378 : vector<8x128xf32>
    %380 = math.exp %379 : vector<8x128xf32>
    %cst_84 = arith.constant 1.000000e+00 : f32
    %381 = vector.broadcast %cst_84 : f32 to vector<8x128xf32>
    %382 = arith.addf %381, %380 : vector<8x128xf32>
    %383 = arith.divf %381, %382 : vector<8x128xf32>
    %384 = arith.mulf %375, %361 : vector<8x128xf32>
    %385 = arith.mulf %369, %377 : vector<8x128xf32>
    %386 = arith.addf %384, %385 : vector<8x128xf32>
    %387 = math.tanh %386 : vector<8x128xf32>
    %388 = arith.mulf %383, %387 : vector<8x128xf32>
    %389 = vector.broadcast %350 : vector<8x1xf32> to vector<8x128xf32>
    %390 = arith.mulf %388, %389 : vector<8x128xf32>
    %391 = vector.broadcast %350 : vector<8x1xf32> to vector<8x128xf32>
    %392 = arith.mulf %386, %391 : vector<8x128xf32>
    %c7_i32 = arith.constant 7 : i32
    %c8_i32_85 = arith.constant 8 : i32
    %393 = arith.muli %c7_i32, %c8_i32_85 : i32
    %394 = tpu.assume_multiple %393, 8 : i32
    %395 = arith.index_cast %394 : i32 to index
    %c0_86 = arith.constant 0 : index
    %396 = vector.load %arg15[%395, %c0_86] : memref<64x512xf32, #tpu.memory_space<vmem>>, vector<8x512xf32>
    %397 = arith.index_cast %394 : i32 to index
    %c0_87 = arith.constant 0 : index
    %398 = vector.load %arg3[%397, %c0_87] : memref<64x1xf32, #tpu.memory_space<vmem>>, vector<8x1xf32>
    %399 = arith.index_cast %394 : i32 to index
    %c0_88 = arith.constant 0 : index
    %400 = vector.load %arg4[%399, %c0_88] : memref<64x1xf32, #tpu.memory_space<vmem>>, vector<8x1xf32>
    %401 = vector.broadcast %398 : vector<8x1xf32> to vector<8x128xf32>
    %402 = vector.broadcast %39 : vector<1x128xf32> to vector<8x128xf32>
    %403 = arith.mulf %401, %402 : vector<8x128xf32>
    %404 = vector.broadcast %40 : vector<1x128xf32> to vector<8x128xf32>
    %405 = arith.addf %403, %404 : vector<8x128xf32>
    %406 = arith.negf %405 : vector<8x128xf32>
    %407 = math.exp %406 : vector<8x128xf32>
    %cst_89 = arith.constant 1.000000e+00 : f32
    %408 = vector.broadcast %cst_89 : f32 to vector<8x128xf32>
    %409 = arith.addf %408, %407 : vector<8x128xf32>
    %410 = arith.divf %408, %409 : vector<8x128xf32>
    %411 = arith.mulf %392, %410 : vector<8x128xf32>
    %cst_90 = arith.constant dense<0.000000e+00> : vector<8x512xf32>
    %412 = tpu.matmul %390, %38, %cst_90 {dimension_numbers = #tpu.dot_dimension_numbers<[1], [0], [0], [1], [0, 0, 1, 1], [], []>} : vector<8x128xf32>, vector<128x512xf32>, vector<8x512xf32> -> vector<8x512xf32>
    %413 = arith.addf %396, %412 : vector<8x512xf32>
    %414 = vector.extract_strided_slice %413 {offsets = [0, 0], sizes = [8, 128], strides = [1, 1]} : vector<8x512xf32> to vector<8x128xf32>
    %415 = arith.negf %414 : vector<8x128xf32>
    %416 = math.exp %415 : vector<8x128xf32>
    %cst_91 = arith.constant 1.000000e+00 : f32
    %417 = vector.broadcast %cst_91 : f32 to vector<8x128xf32>
    %418 = arith.addf %417, %416 : vector<8x128xf32>
    %419 = arith.divf %417, %418 : vector<8x128xf32>
    %420 = vector.extract_strided_slice %413 {offsets = [0, 128], sizes = [8, 128], strides = [1, 1]} : vector<8x512xf32> to vector<8x128xf32>
    %421 = arith.negf %420 : vector<8x128xf32>
    %422 = math.exp %421 : vector<8x128xf32>
    %cst_92 = arith.constant 1.000000e+00 : f32
    %423 = vector.broadcast %cst_92 : f32 to vector<8x128xf32>
    %424 = arith.addf %423, %422 : vector<8x128xf32>
    %425 = arith.divf %423, %424 : vector<8x128xf32>
    %426 = vector.extract_strided_slice %413 {offsets = [0, 256], sizes = [8, 128], strides = [1, 1]} : vector<8x512xf32> to vector<8x128xf32>
    %427 = math.tanh %426 : vector<8x128xf32>
    %428 = vector.extract_strided_slice %413 {offsets = [0, 384], sizes = [8, 128], strides = [1, 1]} : vector<8x512xf32> to vector<8x128xf32>
    %429 = arith.negf %428 : vector<8x128xf32>
    %430 = math.exp %429 : vector<8x128xf32>
    %cst_93 = arith.constant 1.000000e+00 : f32
    %431 = vector.broadcast %cst_93 : f32 to vector<8x128xf32>
    %432 = arith.addf %431, %430 : vector<8x128xf32>
    %433 = arith.divf %431, %432 : vector<8x128xf32>
    %434 = arith.mulf %425, %411 : vector<8x128xf32>
    %435 = arith.mulf %419, %427 : vector<8x128xf32>
    %436 = arith.addf %434, %435 : vector<8x128xf32>
    %437 = math.tanh %436 : vector<8x128xf32>
    %438 = arith.mulf %433, %437 : vector<8x128xf32>
    %439 = vector.broadcast %400 : vector<8x1xf32> to vector<8x128xf32>
    %440 = arith.mulf %438, %439 : vector<8x128xf32>
    %441 = vector.broadcast %400 : vector<8x1xf32> to vector<8x128xf32>
    %442 = arith.mulf %436, %441 : vector<8x128xf32>
    %c8_i32_94 = arith.constant 8 : i32
    %c0_95 = arith.constant 0 : index
    %c0_96 = arith.constant 0 : index
    %443 = vector.load %arg16[%c0_95, %c0_96] : memref<8x128xf32, #tpu.memory_space<vmem>>, vector<8x128xf32>
    tpu.vector_store %arg16[%c0_95, %c0_96], %440 {strides = array<i32>} : memref<8x128xf32, #tpu.memory_space<vmem>>, vector<8x128xf32>,
    %c0_97 = arith.constant 0 : index
    %c0_98 = arith.constant 0 : index
    %444 = vector.load %arg17[%c0_97, %c0_98] : memref<8x128xf32, #tpu.memory_space<vmem>>, vector<8x128xf32>
    tpu.vector_store %arg17[%c0_97, %c0_98], %442 {strides = array<i32>} : memref<8x128xf32, #tpu.memory_space<vmem>>, vector<8x128xf32>,
    %c0_i32_99 = arith.constant 0 : i32
    %445 = arith.cmpi eq, %arg1, %c0_i32_99 : i32
    %446 = arith.extui %445 : i1 to i32
    %c0_i32_100 = arith.constant 0 : i32
    %447 = arith.cmpi ne, %446, %c0_i32_100 : i32
    scf.if %447 {
      %c0_101 = arith.constant 0 : index
      %c0_102 = arith.constant 0 : index
      %448 = vector.load %arg12[%c0_101, %c0_102] : memref<128x128xf32, #tpu.memory_space<vmem>>, vector<128x128xf32>
      %cst_103 = arith.constant dense<0.000000e+00> : vector<8x128xf32>
      %449 = tpu.matmul %440, %448, %cst_103 {dimension_numbers = #tpu.dot_dimension_numbers<[1], [0], [0], [1], [0, 0, 1, 1], [], []>} : vector<8x128xf32>, vector<128x128xf32>, vector<8x128xf32> -> vector<8x128xf32>
      %c0_104 = arith.constant 0 : index
      %c0_105 = arith.constant 0 : index
      %450 = vector.load %arg13[%c0_104, %c0_105] : memref<1x128xf32, #tpu.memory_space<vmem>>, vector<1x128xf32>
      %451 = vector.broadcast %450 : vector<1x128xf32> to vector<8x128xf32>
      %452 = arith.addf %449, %451 : vector<8x128xf32>
      %c0_106 = arith.constant 0 : index
      %c0_107 = arith.constant 0 : index
      %453 = vector.load %arg14[%c0_106, %c0_107] : memref<8x128xf32, #tpu.memory_space<vmem>>, vector<8x128xf32>
      tpu.vector_store %arg14[%c0_106, %c0_107], %452 {strides = array<i32>} : memref<8x128xf32, #tpu.memory_space<vmem>>, vector<8x128xf32>,
    } else {
    }
    return
  }
  func.func @transform_0(%arg0: i32, %arg1: i32) -> (i32, i32) {
    %c1_i32 = arith.constant 1 : i32
    %0 = arith.muli %arg0, %c1_i32 : i32
    %1 = arith.addi %0, %arg1 : i32
    %c0_i32 = arith.constant 0 : i32
    %c0_i32_0 = arith.constant 0 : i32
    return %1, %c0_i32 : i32, i32
  }
  func.func @transform_1(%arg0: i32, %arg1: i32) -> (i32, i32) {
    %c1_i32 = arith.constant 1 : i32
    %0 = arith.muli %arg0, %c1_i32 : i32
    %1 = arith.addi %0, %arg1 : i32
    %c0_i32 = arith.constant 0 : i32
    %c0_i32_0 = arith.constant 0 : i32
    return %1, %c0_i32 : i32, i32
  }
  func.func @transform_2(%arg0: i32, %arg1: i32) -> (i32, i32) {
    %c1_i32 = arith.constant 1 : i32
    %0 = arith.muli %arg0, %c1_i32 : i32
    %1 = arith.addi %0, %arg1 : i32
    %c0_i32 = arith.constant 0 : i32
    %c0_i32_0 = arith.constant 0 : i32
    return %1, %c0_i32 : i32, i32
  }
  func.func @transform_3(%arg0: i32, %arg1: i32) -> (i32, i32) {
    %c0_i32 = arith.constant 0 : i32
    %c0_i32_0 = arith.constant 0 : i32
    %c0_i32_1 = arith.constant 0 : i32
    return %c0_i32, %c0_i32_0 : i32, i32
  }
  func.func @transform_4(%arg0: i32, %arg1: i32) -> (i32, i32) {
    %c0_i32 = arith.constant 0 : i32
    %c0_i32_0 = arith.constant 0 : i32
    %c0_i32_1 = arith.constant 0 : i32
    return %c0_i32, %c0_i32_0 : i32, i32
  }
  func.func @transform_5(%arg0: i32, %arg1: i32) -> (i32, i32) {
    %c0_i32 = arith.constant 0 : i32
    %c0_i32_0 = arith.constant 0 : i32
    %c0_i32_1 = arith.constant 0 : i32
    return %c0_i32, %c0_i32_0 : i32, i32
  }
  func.func @transform_6(%arg0: i32, %arg1: i32) -> (i32, i32) {
    %c0_i32 = arith.constant 0 : i32
    %c0_i32_0 = arith.constant 0 : i32
    %c0_i32_1 = arith.constant 0 : i32
    return %c0_i32, %c0_i32_0 : i32, i32
  }
  func.func @transform_7(%arg0: i32, %arg1: i32) -> (i32, i32) {
    %c0_i32 = arith.constant 0 : i32
    %c0_i32_0 = arith.constant 0 : i32
    %c0_i32_1 = arith.constant 0 : i32
    return %c0_i32, %c0_i32_0 : i32, i32
  }
  func.func @transform_8(%arg0: i32, %arg1: i32) -> (i32, i32) {
    %c0_i32 = arith.constant 0 : i32
    %c0_i32_0 = arith.constant 0 : i32
    %c0_i32_1 = arith.constant 0 : i32
    return %c0_i32, %c0_i32_0 : i32, i32
  }
  func.func @transform_9(%arg0: i32, %arg1: i32) -> (i32, i32) {
    %c0_i32 = arith.constant 0 : i32
    %c0_i32_0 = arith.constant 0 : i32
    %c0_i32_1 = arith.constant 0 : i32
    return %c0_i32, %c0_i32_0 : i32, i32
  }
  func.func @transform_10(%arg0: i32, %arg1: i32) -> (i32, i32) {
    %c0_i32 = arith.constant 0 : i32
    %c0_i32_0 = arith.constant 0 : i32
    %c0_i32_1 = arith.constant 0 : i32
    return %c0_i32, %c0_i32_0 : i32, i32
  }
  func.func @transform_11(%arg0: i32, %arg1: i32) -> (i32, i32) {
    %c0_i32 = arith.constant 0 : i32
    %c0_i32_0 = arith.constant 0 : i32
    %c0_i32_1 = arith.constant 0 : i32
    return %c0_i32, %c0_i32_0 : i32, i32
  }
  func.func @transform_12(%arg0: i32, %arg1: i32) -> (i32, i32) {
    %c0_i32 = arith.constant 0 : i32
    %c0_i32_0 = arith.constant 0 : i32
    return %arg0, %c0_i32 : i32, i32
  }
}

</mosaic_0001>

<llo_original>
// kernel: tlstm_forward.1
$region0: #{tlstm_forward.1}
  #allocation0 [shape = 'u32[]', space=smem, size = 0x4, offset = 0x4, fixed_abs, tag = 'smem constant byte address 0x4 - core index']
  #allocation1 [shape = 'u32[72,128]{1,0:T(1,128)}', space=vmem, size = 0x9000, scoped, tag = 'internal scratch']
  #allocation2 [shape = 'f32[64,512]{1,0:T(8,128)}', space=vmem, size = 0x20000, scoped, tag = 'scratch operand']
  #allocation3 [shape = 'f32[8,128]{1,0:T(8,128)}', space=vmem, size = 0x1000, scoped, tag = 'scratch operand']
  #allocation4 [shape = 'f32[8,128]{1,0:T(8,128)}', space=vmem, size = 0x1000, scoped, tag = 'scratch operand']
  %s0 = inlined_call_operand.vmem [shape: f32[64,4], index: 0, kind: input, shape index: {}]
  %s1 = inlined_call_operand.vmem [shape: f32[64,1], index: 1, kind: input, shape index: {}]
  %s2 = inlined_call_operand.vmem [shape: f32[64,1], index: 2, kind: input, shape index: {}]
  %s3 = inlined_call_operand.vmem [shape: f32[4,128], index: 3, kind: input, shape index: {}]
  %s4 = inlined_call_operand.vmem [shape: f32[1,128], index: 4, kind: input, shape index: {}]
  %s5 = inlined_call_operand.vmem [shape: f32[1,128], index: 5, kind: input, shape index: {}]
  %s6 = inlined_call_operand.vmem [shape: f32[1,128], index: 6, kind: input, shape index: {}]
  %s7 = inlined_call_operand.vmem [shape: f32[128,512], index: 7, kind: input, shape index: {}]
  %s8 = inlined_call_operand.vmem [shape: f32[128,512], index: 8, kind: input, shape index: {}]
  %s9 = inlined_call_operand.vmem [shape: f32[1,512], index: 9, kind: input, shape index: {}]
  %s10 = inlined_call_operand.vmem [shape: f32[128,128], index: 10, kind: input, shape index: {}]
  %s11 = inlined_call_operand.vmem [shape: f32[1,128], index: 11, kind: input, shape index: {}]
  %s12 = inlined_call_operand.vmem [shape: f32[8,128], index: 12, kind: output, shape index: {}]
  %s13 = sld [smem:[#allocation0]]
  $region66: #{tlstm_forward.1} parent=0
    _
  %s15 = ssub.s32 1, %s13
  %s16 = scalar_select 0, %s15, %s13
  // Predicated region
  $region2: #{tlstm_forward.1} parent=0 // pred_check
    _
  $region3: #{tlstm_forward.1} parent=0 // pred_check_branch
    %18 = sbr.rel (0) target = $region5
  $region4: #{tlstm_forward.1} parent=0 // pred_region
    %s19 = sadd.s32 0, 0
    %s20 = smul.u32 8, %s19
    %p21 = scmp.lt.s32.totalorder %s20, 7
    %s22 = scalar_select %p21, %s20, 7
    %s23 = smul.addr %s22, 8
    %s24 = scalar_lea.vmem %s0, %s23
    %s25 = sadd.s32 0, 0
    %s26 = smul.u32 8, %s25
  $region5: #{tlstm_forward.1} parent=0 // pred_fallthru
    _
  // Predicated region
  $region6: #{tlstm_forward.1} parent=0 // pred_check
    _
  $region7: #{tlstm_forward.1} parent=0 // pred_check_branch
    %28 = sbr.rel (0) target = $region9
  $region8: #{tlstm_forward.1} parent=0 // pred_region
    %s29 = sadd.s32 0, 0
    %s30 = smul.u32 8, %s29
    %p31 = scmp.lt.s32.totalorder %s30, 7
    %s32 = scalar_select %p31, %s30, 7
    %s33 = smul.addr %s32, 8
    %s34 = scalar_lea.vmem %s1, %s33
    %s35 = sadd.s32 0, 0
    %s36 = smul.u32 8, %s35
  $region9: #{tlstm_forward.1} parent=0 // pred_fallthru
    _
  // Predicated region
  $region10: #{tlstm_forward.1} parent=0 // pred_check
    _
  $region11: #{tlstm_forward.1} parent=0 // pred_check_branch
    %38 = sbr.rel (0) target = $region13
  $region12: #{tlstm_forward.1} parent=0 // pred_region
    %s39 = sadd.s32 0, 0
    %s40 = smul.u32 8, %s39
    %p41 = scmp.lt.s32.totalorder %s40, 7
    %s42 = scalar_select %p41, %s40, 7
    %s43 = smul.addr %s42, 8
    %s44 = scalar_lea.vmem %s2, %s43
    %s45 = sadd.s32 0, 0
    %s46 = smul.u32 8, %s45
  $region13: #{tlstm_forward.1} parent=0 // pred_fallthru
    _
  // Predicated region
  $region14: #{tlstm_forward.1} parent=0 // pred_check
    _
  $region15: #{tlstm_forward.1} parent=0 // pred_check_branch
    %48 = sbr.rel (0) target = $region17
  $region16: #{tlstm_forward.1} parent=0 // pred_region
    _
  $region17: #{tlstm_forward.1} parent=0 // pred_fallthru
    _
  // Predicated region
  $region18: #{tlstm_forward.1} parent=0 // pred_check
    _
  $region19: #{tlstm_forward.1} parent=0 // pred_check_branch
    %50 = sbr.rel (0) target = $region21
  $region20: #{tlstm_forward.1} parent=0 // pred_region
    _
  $region21: #{tlstm_forward.1} parent=0 // pred_fallthru
    _
  // Predicated region
  $region22: #{tlstm_forward.1} parent=0 // pred_check
    _
  $region23: #{tlstm_forward.1} parent=0 // pred_check_branch
    %52 = sbr.rel (0) target = $region25
  $region24: #{tlstm_forward.1} parent=0 // pred_region
    _
  $region25: #{tlstm_forward.1} parent=0 // pred_fallthru
    _
  // Predicated region
  $region26: #{tlstm_forward.1} parent=0 // pred_check
    _
  $region27: #{tlstm_forward.1} parent=0 // pred_check_branch
    %54 = sbr.rel (0) target = $region29
  $region28: #{tlstm_forward.1} parent=0 // pred_region
    _
  $region29: #{tlstm_forward.1} parent=0 // pred_fallthru
    _
  // Predicated region
  $region30: #{tlstm_forward.1} parent=0 // pred_check
    _
  $region31: #{tlstm_forward.1} parent=0 // pred_check_branch
    %56 = sbr.rel (0) target = $region33
  $region32: #{tlstm_forward.1} parent=0 // pred_region
    _
  $region33: #{tlstm_forward.1} parent=0 // pred_fallthru
    _
  // Predicated region
  $region34: #{tlstm_forward.1} parent=0 // pred_check
    _
  $region35: #{tlstm_forward.1} parent=0 // pred_check_branch
    %58 = sbr.rel (0) target = $region37
  $region36: #{tlstm_forward.1} parent=0 // pred_region
    _
  $region37: #{tlstm_forward.1} parent=0 // pred_fallthru
    _
  // Predicated region
  $region38: #{tlstm_forward.1} parent=0 // pred_check
    _
  $region39: #{tlstm_forward.1} parent=0 // pred_check_branch
    %60 = sbr.rel (0) target = $region41
  $region40: #{tlstm_forward.1} parent=0 // pred_region
    _
  $region41: #{tlstm_forward.1} parent=0 // pred_fallthru
    _
  // Predicated region
  $region42: #{tlstm_forward.1} parent=0 // pred_check
    _
  $region43: #{tlstm_forward.1} parent=0 // pred_check_branch
    %62 = sbr.rel (0) target = $region45
  $region44: #{tlstm_forward.1} parent=0 // pred_region
    _
  $region45: #{tlstm_forward.1} parent=0 // pred_fallthru
    _
  // Predicated region
  $region46: #{tlstm_forward.1} parent=0 // pred_check
    _
  $region47: #{tlstm_forward.1} parent=0 // pred_check_branch
    %64 = sbr.rel (0) target = $region49
  $region48: #{tlstm_forward.1} parent=0 // pred_region
    _
  $region49: #{tlstm_forward.1} parent=0 // pred_fallthru
    _
  %s65 = sadd.s32 0, 0
  %s66 = smul.u32 8, %s65
  %p67 = scmp.lt.s32.totalorder %s66, 7
  %s68 = scalar_select %p67, %s66, 7
  %s69 = smul.addr %s68, 8
  %s70 = scalar_lea.vmem %s0, %s69
  %s71 = sadd.s32 0, 0
  %s72 = smul.u32 8, %s71
  %p73 = scmp.lt.s32.totalorder %s72, 7
  %s74 = scalar_select %p73, %s72, 7
  %s75 = smul.addr %s74, 8
  %s76 = scalar_lea.vmem %s1, %s75
  %s77 = sadd.s32 0, 0
  %s78 = smul.u32 8, %s77
  %p79 = scmp.lt.s32.totalorder %s78, 7
  %s80 = scalar_select %p79, %s78, 7
  %s81 = smul.addr %s80, 8
  %s82 = scalar_lea.vmem %s2, %s81
  %s83 = sadd.s32 0, 0
  %s84 = smul.u32 8, %s83
  %p85 = scmp.lt.s32.totalorder %s84, 7
  %s86 = scalar_select %p85, %s84, 7
  %s87 = smul.addr %s86, 8
  %s88 = scalar_lea.vmem %s0, %s87
  %s89 = sadd.s32 0, 0
  %s90 = smul.u32 8, %s89
  %s91 = sadd.s32 0, 0
  %s92 = smul.u32 8, %s91
  %p93 = scmp.lt.s32.totalorder %s92, 7
  %s94 = scalar_select %p93, %s92, 7
  %s95 = smul.addr %s94, 8
  %s96 = scalar_lea.vmem %s1, %s95
  %s97 = sadd.s32 0, 0
  %s98 = smul.u32 8, %s97
  %s99 = sadd.s32 0, 0
  %s100 = smul.u32 8, %s99
  %p101 = scmp.lt.s32.totalorder %s100, 7
  %s102 = scalar_select %p101, %s100, 7
  %s103 = smul.addr %s102, 8
  %s104 = scalar_lea.vmem %s2, %s103
  %s105 = sadd.s32 0, 0
  %s106 = smul.u32 8, %s105
  %p107 = scmp.eq.s32.totalorder 0, 0
  // Predicated region
  $region50: #{tlstm_forward.1} parent=0 // pred_check
    %p108 = pneg %p107
  $region51: #{tlstm_forward.1} parent=0 // pred_check_branch
    %110 = sbr.rel (%p108) target = $region53
  $region52: #{tlstm_forward.1} parent=0 // pred_region
    %111 = vst [vmem:[#allocation3] sm:$0xff] 0.0
    %112 = vst [vmem:[#allocation4] sm:$0xff] 0.0
  $region53: #{tlstm_forward.1} parent=0 // pred_fallthru
    _
  %v113 = vld [vmem:[%s88] sm:$0xff]
  %v114 = vld [vmem:[%s88 + $0x8] sm:$0xff]
  %v115 = vld [vmem:[%s88 + $0x10] sm:$0xff]
  %v116 = vld [vmem:[%s88 + $0x18] sm:$0xff]
  %v117 = vld [vmem:[%s88 + $0x20] sm:$0xff]
  %v118 = vld [vmem:[%s88 + $0x28] sm:$0xff]
  %v119 = vld [vmem:[%s88 + $0x30] sm:$0xff]
  %v120 = vld [vmem:[%s88 + $0x38] sm:$0xff]
  %v121 = vld [vmem:[%s3] sm:$0xf]
  %123 = vset.pattern.permute.xlu0 0
  %124 = vperm.xlu0 %123, %v113
  %v125 = vpop.permute.xlu0 %124
  %128 = vset.pattern.permute.xlu0 0
  %129 = vperm.xlu0 %128, %v114
  %v130 = vpop.permute.xlu0 %129
  %133 = vset.pattern.permute.xlu0 0
  %134 = vperm.xlu0 %133, %v115
  %v135 = vpop.permute.xlu0 %134
  %138 = vset.pattern.permute.xlu0 0
  %139 = vperm.xlu0 %138, %v116
  %v140 = vpop.permute.xlu0 %139
  %143 = vset.pattern.permute.xlu0 0
  %144 = vperm.xlu0 %143, %v117
  %v145 = vpop.permute.xlu0 %144
  %148 = vset.pattern.permute.xlu0 0
  %149 = vperm.xlu0 %148, %v118
  %v150 = vpop.permute.xlu0 %149
  %153 = vset.pattern.permute.xlu0 0
  %154 = vperm.xlu0 %153, %v119
  %v155 = vpop.permute.xlu0 %154
  %158 = vset.pattern.permute.xlu0 0
  %159 = vperm.xlu0 %158, %v120
  %v160 = vpop.permute.xlu0 %159
  %v162 = vperm.slane %v121, 0
  %v163 = vmul.f32 %v125, %v162
  %v164 = vmul.f32 %v130, %v162
  %v165 = vmul.f32 %v135, %v162
  %v166 = vmul.f32 %v140, %v162
  %v167 = vmul.f32 %v145, %v162
  %v168 = vmul.f32 %v150, %v162
  %v169 = vmul.f32 %v155, %v162
  %v170 = vmul.f32 %v160, %v162
  %v171 = vld [vmem:[%s4] sm:$0x1]
  %v173 = vperm.slane %v171, 0
  %v175 = vadd.f32 %v163, %v173
  %v176 = vadd.f32 %v164, %v173
  %v177 = vadd.f32 %v165, %v173
  %v178 = vadd.f32 %v166, %v173
  %v179 = vadd.f32 %v167, %v173
  %v180 = vadd.f32 %v168, %v173
  %v181 = vadd.f32 %v169, %v173
  %v182 = vadd.f32 %v170, %v173
  %183 = vset.pattern.permute.xlu0 1
  %184 = vperm.xlu0 %183, %v113
  %v185 = vpop.permute.xlu0 %184
  %187 = vset.pattern.permute.xlu0 1
  %188 = vperm.xlu0 %187, %v114
  %v189 = vpop.permute.xlu0 %188
  %191 = vset.pattern.permute.xlu0 1
  %192 = vperm.xlu0 %191, %v115
  %v193 = vpop.permute.xlu0 %192
  %195 = vset.pattern.permute.xlu0 1
  %196 = vperm.xlu0 %195, %v116
  %v197 = vpop.permute.xlu0 %196
  %199 = vset.pattern.permute.xlu0 1
  %200 = vperm.xlu0 %199, %v117
  %v201 = vpop.permute.xlu0 %200
  %203 = vset.pattern.permute.xlu0 1
  %204 = vperm.xlu0 %203, %v118
  %v205 = vpop.permute.xlu0 %204
  %207 = vset.pattern.permute.xlu0 1
  %208 = vperm.xlu0 %207, %v119
  %v209 = vpop.permute.xlu0 %208
  %211 = vset.pattern.permute.xlu0 1
  %212 = vperm.xlu0 %211, %v120
  %v213 = vpop.permute.xlu0 %212
  %v215 = vperm.slane %v121, 1
  %v216 = vmul.f32 %v185, %v215
  %v217 = vmul.f32 %v189, %v215
  %v218 = vmul.f32 %v193, %v215
  %v219 = vmul.f32 %v197, %v215
  %v220 = vmul.f32 %v201, %v215
  %v221 = vmul.f32 %v205, %v215
  %v222 = vmul.f32 %v209, %v215
  %v223 = vmul.f32 %v213, %v215
  %v224 = vadd.f32 %v175, %v216
  %v225 = vadd.f32 %v176, %v217
  %v226 = vadd.f32 %v177, %v218
  %v227 = vadd.f32 %v178, %v219
  %v228 = vadd.f32 %v179, %v220
  %v229 = vadd.f32 %v180, %v221
  %v230 = vadd.f32 %v181, %v222
  %v231 = vadd.f32 %v182, %v223
  %232 = vset.pattern.permute.xlu0 2
  %233 = vperm.xlu0 %232, %v113
  %v234 = vpop.permute.xlu0 %233
  %236 = vset.pattern.permute.xlu0 2
  %237 = vperm.xlu0 %236, %v114
  %v238 = vpop.permute.xlu0 %237
  %240 = vset.pattern.permute.xlu0 2
  %241 = vperm.xlu0 %240, %v115
  %v242 = vpop.permute.xlu0 %241
  %244 = vset.pattern.permute.xlu0 2
  %245 = vperm.xlu0 %244, %v116
  %v246 = vpop.permute.xlu0 %245
  %248 = vset.pattern.permute.xlu0 2
  %249 = vperm.xlu0 %248, %v117
  %v250 = vpop.permute.xlu0 %249
  %252 = vset.pattern.permute.xlu0 2
  %253 = vperm.xlu0 %252, %v118
  %v254 = vpop.permute.xlu0 %253
  %256 = vset.pattern.permute.xlu0 2
  %257 = vperm.xlu0 %256, %v119
  %v258 = vpop.permute.xlu0 %257
  %260 = vset.pattern.permute.xlu0 2
  %261 = vperm.xlu0 %260, %v120
  %v262 = vpop.permute.xlu0 %261
  %v264 = vperm.slane %v121, 2
  %v265 = vmul.f32 %v234, %v264
  %v266 = vmul.f32 %v238, %v264
  %v267 = vmul.f32 %v242, %v264
  %v268 = vmul.f32 %v246, %v264
  %v269 = vmul.f32 %v250, %v264
  %v270 = vmul.f32 %v254, %v264
  %v271 = vmul.f32 %v258, %v264
  %v272 = vmul.f32 %v262, %v264
  %v273 = vadd.f32 %v224, %v265
  %v274 = vadd.f32 %v225, %v266
  %v275 = vadd.f32 %v226, %v267
  %v276 = vadd.f32 %v227, %v268
  %v277 = vadd.f32 %v228, %v269
  %v278 = vadd.f32 %v229, %v270
  %v279 = vadd.f32 %v230, %v271
  %v280 = vadd.f32 %v231, %v272
  %281 = vset.pattern.permute.xlu0 3
  %282 = vperm.xlu0 %281, %v113
  %v283 = vpop.permute.xlu0 %282
  %285 = vset.pattern.permute.xlu0 3
  %286 = vperm.xlu0 %285, %v114
  %v287 = vpop.permute.xlu0 %286
  %289 = vset.pattern.permute.xlu0 3
  %290 = vperm.xlu0 %289, %v115
  %v291 = vpop.permute.xlu0 %290
  %293 = vset.pattern.permute.xlu0 3
  %294 = vperm.xlu0 %293, %v116
  %v295 = vpop.permute.xlu0 %294
  %297 = vset.pattern.permute.xlu0 3
  %298 = vperm.xlu0 %297, %v117
  %v299 = vpop.permute.xlu0 %298
  %301 = vset.pattern.permute.xlu0 3
  %302 = vperm.xlu0 %301, %v118
  %v303 = vpop.permute.xlu0 %302
  %305 = vset.pattern.permute.xlu0 3
  %306 = vperm.xlu0 %305, %v119
  %v307 = vpop.permute.xlu0 %306
  %309 = vset.pattern.permute.xlu0 3
  %310 = vperm.xlu0 %309, %v120
  %v311 = vpop.permute.xlu0 %310
  %v313 = vperm.slane %v121, 3
  %v314 = vmul.f32 %v283, %v313
  %v315 = vmul.f32 %v287, %v313
  %v316 = vmul.f32 %v291, %v313
  %v317 = vmul.f32 %v295, %v313
  %v318 = vmul.f32 %v299, %v313
  %v319 = vmul.f32 %v303, %v313
  %v320 = vmul.f32 %v307, %v313
  %v321 = vmul.f32 %v311, %v313
  %v322 = vadd.f32 %v273, %v314
  %v323 = vadd.f32 %v274, %v315
  %v324 = vadd.f32 %v275, %v316
  %v325 = vadd.f32 %v276, %v317
  %v326 = vadd.f32 %v277, %v318
  %v327 = vadd.f32 %v278, %v319
  %v328 = vadd.f32 %v279, %v320
  %v329 = vadd.f32 %v280, %v321
  %v330 = vtanh.pop %v322
  %v331 = vtanh.pop %v323
  %v332 = vtanh.pop %v324
  %v333 = vtanh.pop %v325
  %v334 = vtanh.pop %v326
  %v335 = vtanh.pop %v327
  %v336 = vtanh.pop %v328
  %v337 = vtanh.pop %v329
  %v338 = vld [vmem:[%s7] sm:$0xff]
  %v339 = vld [vmem:[%s7 + $0x8] sm:$0xff]
  %v340 = vld [vmem:[%s7 + $0x10] sm:$0xff]
  %v341 = vld [vmem:[%s7 + $0x18] sm:$0xff]
  %v342 = vld [vmem:[%s7 + $0x20] sm:$0xff]
  %v343 = vld [vmem:[%s7 + $0x28] sm:$0xff]
  %v344 = vld [vmem:[%s7 + $0x30] sm:$0xff]
  %v345 = vld [vmem:[%s7 + $0x38] sm:$0xff]
  %v346 = vld [vmem:[%s7 + $0x40] sm:$0xff]
  %v347 = vld [vmem:[%s7 + $0x48] sm:$0xff]
  %v348 = vld [vmem:[%s7 + $0x50] sm:$0xff]
  %v349 = vld [vmem:[%s7 + $0x58] sm:$0xff]
  %v350 = vld [vmem:[%s7 + $0x60] sm:$0xff]
  %v351 = vld [vmem:[%s7 + $0x68] sm:$0xff]
  %v352 = vld [vmem:[%s7 + $0x70] sm:$0xff]
  %v353 = vld [vmem:[%s7 + $0x78] sm:$0xff]
  %v354 = vld [vmem:[%s7 + $0x80] sm:$0xff]
  %v355 = vld [vmem:[%s7 + $0x88] sm:$0xff]
  %v356 = vld [vmem:[%s7 + $0x90] sm:$0xff]
  %v357 = vld [vmem:[%s7 + $0x98] sm:$0xff]
  %v358 = vld [vmem:[%s7 + $0xa0] sm:$0xff]
  %v359 = vld [vmem:[%s7 + $0xa8] sm:$0xff]
  %v360 = vld [vmem:[%s7 + $0xb0] sm:$0xff]
  %v361 = vld [vmem:[%s7 + $0xb8] sm:$0xff]
  %v362 = vld [vmem:[%s7 + $0xc0] sm:$0xff]
  %v363 = vld [vmem:[%s7 + $0xc8] sm:$0xff]
  %v364 = vld [vmem:[%s7 + $0xd0] sm:$0xff]
  %v365 = vld [vmem:[%s7 + $0xd8] sm:$0xff]
  %v366 = vld [vmem:[%s7 + $0xe0] sm:$0xff]
  %v367 = vld [vmem:[%s7 + $0xe8] sm:$0xff]
  %v368 = vld [vmem:[%s7 + $0xf0] sm:$0xff]
  %v369 = vld [vmem:[%s7 + $0xf8] sm:$0xff]
  %v370 = vld [vmem:[%s7 + $0x100] sm:$0xff]
  %v371 = vld [vmem:[%s7 + $0x108] sm:$0xff]
  %v372 = vld [vmem:[%s7 + $0x110] sm:$0xff]
  %v373 = vld [vmem:[%s7 + $0x118] sm:$0xff]
  %v374 = vld [vmem:[%s7 + $0x120] sm:$0xff]
  %v375 = vld [vmem:[%s7 + $0x128] sm:$0xff]
  %v376 = vld [vmem:[%s7 + $0x130] sm:$0xff]
  %v377 = vld [vmem:[%s7 + $0x138] sm:$0xff]
  %v378 = vld [vmem:[%s7 + $0x140] sm:$0xff]
  %v379 = vld [vmem:[%s7 + $0x148] sm:$0xff]
  %v380 = vld [vmem:[%s7 + $0x150] sm:$0xff]
  %v381 = vld [vmem:[%s7 + $0x158] sm:$0xff]
  %v382 = vld [vmem:[%s7 + $0x160] sm:$0xff]
  %v383 = vld [vmem:[%s7 + $0x168] sm:$0xff]
  %v384 = vld [vmem:[%s7 + $0x170] sm:$0xff]
  %v385 = vld [vmem:[%s7 + $0x178] sm:$0xff]
  %v386 = vld [vmem:[%s7 + $0x180] sm:$0xff]
  %v387 = vld [vmem:[%s7 + $0x188] sm:$0xff]
  %v388 = vld [vmem:[%s7 + $0x190] sm:$0xff]
  %v389 = vld [vmem:[%s7 + $0x198] sm:$0xff]
  %v390 = vld [vmem:[%s7 + $0x1a0] sm:$0xff]
  %v391 = vld [vmem:[%s7 + $0x1a8] sm:$0xff]
  %v392 = vld [vmem:[%s7 + $0x1b0] sm:$0xff]
  %v393 = vld [vmem:[%s7 + $0x1b8] sm:$0xff]
  %v394 = vld [vmem:[%s7 + $0x1c0] sm:$0xff]
  %v395 = vld [vmem:[%s7 + $0x1c8] sm:$0xff]
  %v396 = vld [vmem:[%s7 + $0x1d0] sm:$0xff]
  %v397 = vld [vmem:[%s7 + $0x1d8] sm:$0xff]
  %v398 = vld [vmem:[%s7 + $0x1e0] sm:$0xff]
  %v399 = vld [vmem:[%s7 + $0x1e8] sm:$0xff]
  %v400 = vld [vmem:[%s7 + $0x1f0] sm:$0xff]
  %v401 = vld [vmem:[%s7 + $0x1f8] sm:$0xff]
  %v402 = vld [vmem:[%s9] sm:$0xf]
  %v404 = vperm.slane %v402, 0
  %v405 = vperm.slane %v402, 1
  %v406 = vperm.slane %v402, 2
  %v407 = vperm.slane %v402, 3
  %412 = vmatpush.msra.mxu0 %v398
  %413 = vmatpush.msra.mxu0 %v394
  %414 = vmatpush.msra.mxu0 %v390
  %415 = vmatpush.msra.mxu0 %v386
  %416 = vmatpush.msra.mxu0 %v382
  %417 = vmatpush.msra.mxu0 %v378
  %418 = vmatpush.msra.mxu0 %v374
  %419 = vmatpush.msra.mxu0 %v370
  %420 = vmatpush.msra.mxu0 %v366
  %421 = vmatpush.msra.mxu0 %v362
  %422 = vmatpush.msra.mxu0 %v358
  %423 = vmatpush.msra.mxu0 %v354
  %424 = vmatpush.msra.mxu0 %v350
  %425 = vmatpush.msra.mxu0 %v346
  %426 = vmatpush.msra.mxu0 %v342
  %427 = vmatpush.msra.mxu0 %v338
  %428 = vmatmul.f32.gmra.mxu0 %v330
  %v429 = vpop.f32.mrf.mxu0
  %v430 = vadd.f32 %v404, %v429
  %431 = vmatmul.f32.gmra.mxu0 %v331
  %v432 = vpop.f32.mrf.mxu0
  %v433 = vadd.f32 %v404, %v432
  %434 = vmatmul.f32.gmra.mxu0 %v332
  %v435 = vpop.f32.mrf.mxu0
  %v436 = vadd.f32 %v404, %v435
  %437 = vmatmul.f32.gmra.mxu0 %v333
  %v438 = vpop.f32.mrf.mxu0
  %v439 = vadd.f32 %v404, %v438
  %440 = vmatmul.f32.gmra.mxu0 %v334
  %v441 = vpop.f32.mrf.mxu0
  %v442 = vadd.f32 %v404, %v441
  %443 = vmatmul.f32.gmra.mxu0 %v335
  %v444 = vpop.f32.mrf.mxu0
  %v445 = vadd.f32 %v404, %v444
  %446 = vmatmul.f32.gmra.mxu0 %v336
  %v447 = vpop.f32.mrf.mxu0
  %v448 = vadd.f32 %v404, %v447
  %449 = vmatmul.f32.gmra.mxu0 %v337
  %v450 = vpop.f32.mrf.mxu0
  %v451 = vadd.f32 %v404, %v450
  %452 = vdwg.mxu0
  %453 = vmatpush.msra.mxu0 %v399
  %454 = vmatpush.msra.mxu0 %v395
  %455 = vmatpush.msra.mxu0 %v391
  %456 = vmatpush.msra.mxu0 %v387
  %457 = vmatpush.msra.mxu0 %v383
  %458 = vmatpush.msra.mxu0 %v379
  %459 = vmatpush.msra.mxu0 %v375
  %460 = vmatpush.msra.mxu0 %v371
  %461 = vmatpush.msra.mxu0 %v367
  %462 = vmatpush.msra.mxu0 %v363
  %463 = vmatpush.msra.mxu0 %v359
  %464 = vmatpush.msra.mxu0 %v355
  %465 = vmatpush.msra.mxu0 %v351
  %466 = vmatpush.msra.mxu0 %v347
  %467 = vmatpush.msra.mxu0 %v343
  %468 = vmatpush.msra.mxu0 %v339
  %469 = vmatmul.f32.gmra.mxu0 %v330
  %v470 = vpop.f32.mrf.mxu0
  %v471 = vadd.f32 %v405, %v470
  %472 = vmatmul.f32.gmra.mxu0 %v331
  %v473 = vpop.f32.mrf.mxu0
  %v474 = vadd.f32 %v405, %v473
  %475 = vmatmul.f32.gmra.mxu0 %v332
  %v476 = vpop.f32.mrf.mxu0
  %v477 = vadd.f32 %v405, %v476
  %478 = vmatmul.f32.gmra.mxu0 %v333
  %v479 = vpop.f32.mrf.mxu0
  %v480 = vadd.f32 %v405, %v479
  %481 = vmatmul.f32.gmra.mxu0 %v334
  %v482 = vpop.f32.mrf.mxu0
  %v483 = vadd.f32 %v405, %v482
  %484 = vmatmul.f32.gmra.mxu0 %v335
  %v485 = vpop.f32.mrf.mxu0
  %v486 = vadd.f32 %v405, %v485
  %487 = vmatmul.f32.gmra.mxu0 %v336
  %v488 = vpop.f32.mrf.mxu0
  %v489 = vadd.f32 %v405, %v488
  %490 = vmatmul.f32.gmra.mxu0 %v337
  %v491 = vpop.f32.mrf.mxu0
  %v492 = vadd.f32 %v405, %v491
  %493 = vdwg.mxu0
  %494 = vmatpush.msra.mxu0 %v400
  %495 = vmatpush.msra.mxu0 %v396
  %496 = vmatpush.msra.mxu0 %v392
  %497 = vmatpush.msra.mxu0 %v388
  %498 = vmatpush.msra.mxu0 %v384
  %499 = vmatpush.msra.mxu0 %v380
  %500 = vmatpush.msra.mxu0 %v376
  %501 = vmatpush.msra.mxu0 %v372
  %502 = vmatpush.msra.mxu0 %v368
  %503 = vmatpush.msra.mxu0 %v364
  %504 = vmatpush.msra.mxu0 %v360
  %505 = vmatpush.msra.mxu0 %v356
  %506 = vmatpush.msra.mxu0 %v352
  %507 = vmatpush.msra.mxu0 %v348
  %508 = vmatpush.msra.mxu0 %v344
  %509 = vmatpush.msra.mxu0 %v340
  %510 = vmatmul.f32.gmra.mxu0 %v330
  %v511 = vpop.f32.mrf.mxu0
  %v512 = vadd.f32 %v406, %v511
  %513 = vmatmul.f32.gmra.mxu0 %v331
  %v514 = vpop.f32.mrf.mxu0
  %v515 = vadd.f32 %v406, %v514
  %516 = vmatmul.f32.gmra.mxu0 %v332
  %v517 = vpop.f32.mrf.mxu0
  %v518 = vadd.f32 %v406, %v517
  %519 = vmatmul.f32.gmra.mxu0 %v333
  %v520 = vpop.f32.mrf.mxu0
  %v521 = vadd.f32 %v406, %v520
  %522 = vmatmul.f32.gmra.mxu0 %v334
  %v523 = vpop.f32.mrf.mxu0
  %v524 = vadd.f32 %v406, %v523
  %525 = vmatmul.f32.gmra.mxu0 %v335
  %v526 = vpop.f32.mrf.mxu0
  %v527 = vadd.f32 %v406, %v526
  %528 = vmatmul.f32.gmra.mxu0 %v336
  %v529 = vpop.f32.mrf.mxu0
  %v530 = vadd.f32 %v406, %v529
  %531 = vmatmul.f32.gmra.mxu0 %v337
  %v532 = vpop.f32.mrf.mxu0
  %v533 = vadd.f32 %v406, %v532
  %534 = vdwg.mxu0
  %535 = vmatpush.msra.mxu0 %v401
  %536 = vmatpush.msra.mxu0 %v397
  %537 = vmatpush.msra.mxu0 %v393
  %538 = vmatpush.msra.mxu0 %v389
  %539 = vmatpush.msra.mxu0 %v385
  %540 = vmatpush.msra.mxu0 %v381
  %541 = vmatpush.msra.mxu0 %v377
  %542 = vmatpush.msra.mxu0 %v373
  %543 = vmatpush.msra.mxu0 %v369
  %544 = vmatpush.msra.mxu0 %v365
  %545 = vmatpush.msra.mxu0 %v361
  %546 = vmatpush.msra.mxu0 %v357
  %547 = vmatpush.msra.mxu0 %v353
  %548 = vmatpush.msra.mxu0 %v349
  %549 = vmatpush.msra.mxu0 %v345
  %550 = vmatpush.msra.mxu0 %v341
  %551 = vmatmul.f32.gmra.mxu0 %v330
  %v552 = vpop.f32.mrf.mxu0
  %v553 = vadd.f32 %v407, %v552
  %554 = vmatmul.f32.gmra.mxu0 %v331
  %v555 = vpop.f32.mrf.mxu0
  %v556 = vadd.f32 %v407, %v555
  %557 = vmatmul.f32.gmra.mxu0 %v332
  %v558 = vpop.f32.mrf.mxu0
  %v559 = vadd.f32 %v407, %v558
  %560 = vmatmul.f32.gmra.mxu0 %v333
  %v561 = vpop.f32.mrf.mxu0
  %v562 = vadd.f32 %v407, %v561
  %563 = vmatmul.f32.gmra.mxu0 %v334
  %v564 = vpop.f32.mrf.mxu0
  %v565 = vadd.f32 %v407, %v564
  %566 = vmatmul.f32.gmra.mxu0 %v335
  %v567 = vpop.f32.mrf.mxu0
  %v568 = vadd.f32 %v407, %v567
  %569 = vmatmul.f32.gmra.mxu0 %v336
  %v570 = vpop.f32.mrf.mxu0
  %v571 = vadd.f32 %v407, %v570
  %572 = vmatmul.f32.gmra.mxu0 %v337
  %v573 = vpop.f32.mrf.mxu0
  %v574 = vadd.f32 %v407, %v573
  %575 = vdwg.mxu0
  %576 = vst [vmem:[#allocation2] sm:$0xff] %v430
  %577 = vst [vmem:[#allocation2 + $0x8] sm:$0xff] %v471
  %578 = vst [vmem:[#allocation2 + $0x10] sm:$0xff] %v512
  %579 = vst [vmem:[#allocation2 + $0x18] sm:$0xff] %v553
  %580 = vst [vmem:[#allocation2 + $0x20] sm:$0xff] %v433
  %581 = vst [vmem:[#allocation2 + $0x28] sm:$0xff] %v474
  %582 = vst [vmem:[#allocation2 + $0x30] sm:$0xff] %v515
  %583 = vst [vmem:[#allocation2 + $0x38] sm:$0xff] %v556
  %584 = vst [vmem:[#allocation2 + $0x40] sm:$0xff] %v436
  %585 = vst [vmem:[#allocation2 + $0x48] sm:$0xff] %v477
  %586 = vst [vmem:[#allocation2 + $0x50] sm:$0xff] %v518
  %587 = vst [vmem:[#allocation2 + $0x58] sm:$0xff] %v559
  %588 = vst [vmem:[#allocation2 + $0x60] sm:$0xff] %v439
  %589 = vst [vmem:[#allocation2 + $0x68] sm:$0xff] %v480
  %590 = vst [vmem:[#allocation2 + $0x70] sm:$0xff] %v521
  %591 = vst [vmem:[#allocation2 + $0x78] sm:$0xff] %v562
  %592 = vst [vmem:[#allocation2 + $0x80] sm:$0xff] %v442
  %593 = vst [vmem:[#allocation2 + $0x88] sm:$0xff] %v483
  %594 = vst [vmem:[#allocation2 + $0x90] sm:$0xff] %v524
  %595 = vst [vmem:[#allocation2 + $0x98] sm:$0xff] %v565
  %596 = vst [vmem:[#allocation2 + $0xa0] sm:$0xff] %v445
  %597 = vst [vmem:[#allocation2 + $0xa8] sm:$0xff] %v486
  %598 = vst [vmem:[#allocation2 + $0xb0] sm:$0xff] %v527
  %599 = vst [vmem:[#allocation2 + $0xb8] sm:$0xff] %v568
  %600 = vst [vmem:[#allocation2 + $0xc0] sm:$0xff] %v448
  %601 = vst [vmem:[#allocation2 + $0xc8] sm:$0xff] %v489
  %602 = vst [vmem:[#allocation2 + $0xd0] sm:$0xff] %v530
  %603 = vst [vmem:[#allocation2 + $0xd8] sm:$0xff] %v571
  %604 = vst [vmem:[#allocation2 + $0xe0] sm:$0xff] %v451
  %605 = vst [vmem:[#allocation2 + $0xe8] sm:$0xff] %v492
  %606 = vst [vmem:[#allocation2 + $0xf0] sm:$0xff] %v533
  %607 = vst [vmem:[#allocation2 + $0xf8] sm:$0xff] %v574
  %v608 = vld [vmem:[%s8] sm:$0xff]
  %v609 = vld [vmem:[%s8 + $0x8] sm:$0xff]
  %v610 = vld [vmem:[%s8 + $0x10] sm:$0xff]
  %v611 = vld [vmem:[%s8 + $0x18] sm:$0xff]
  %v612 = vld [vmem:[%s8 + $0x20] sm:$0xff]
  %v613 = vld [vmem:[%s8 + $0x28] sm:$0xff]
  %v614 = vld [vmem:[%s8 + $0x30] sm:$0xff]
  %v615 = vld [vmem:[%s8 + $0x38] sm:$0xff]
  %v616 = vld [vmem:[%s8 + $0x40] sm:$0xff]
  %v617 = vld [vmem:[%s8 + $0x48] sm:$0xff]
  %v618 = vld [vmem:[%s8 + $0x50] sm:$0xff]
  %v619 = vld [vmem:[%s8 + $0x58] sm:$0xff]
  %v620 = vld [vmem:[%s8 + $0x60] sm:$0xff]
  %v621 = vld [vmem:[%s8 + $0x68] sm:$0xff]
  %v622 = vld [vmem:[%s8 + $0x70] sm:$0xff]
  %v623 = vld [vmem:[%s8 + $0x78] sm:$0xff]
  %v624 = vld [vmem:[%s8 + $0x80] sm:$0xff]
  %v625 = vld [vmem:[%s8 + $0x88] sm:$0xff]
  %v626 = vld [vmem:[%s8 + $0x90] sm:$0xff]
  %v627 = vld [vmem:[%s8 + $0x98] sm:$0xff]
  %v628 = vld [vmem:[%s8 + $0xa0] sm:$0xff]
  %v629 = vld [vmem:[%s8 + $0xa8] sm:$0xff]
  %v630 = vld [vmem:[%s8 + $0xb0] sm:$0xff]
  %v631 = vld [vmem:[%s8 + $0xb8] sm:$0xff]
  %v632 = vld [vmem:[%s8 + $0xc0] sm:$0xff]
  %v633 = vld [vmem:[%s8 + $0xc8] sm:$0xff]
  %v634 = vld [vmem:[%s8 + $0xd0] sm:$0xff]
  %v635 = vld [vmem:[%s8 + $0xd8] sm:$0xff]
  %v636 = vld [vmem:[%s8 + $0xe0] sm:$0xff]
  %v637 = vld [vmem:[%s8 + $0xe8] sm:$0xff]
  %v638 = vld [vmem:[%s8 + $0xf0] sm:$0xff]
  %v639 = vld [vmem:[%s8 + $0xf8] sm:$0xff]
  %v640 = vld [vmem:[%s8 + $0x100] sm:$0xff]
  %v641 = vld [vmem:[%s8 + $0x108] sm:$0xff]
  %v642 = vld [vmem:[%s8 + $0x110] sm:$0xff]
  %v643 = vld [vmem:[%s8 + $0x118] sm:$0xff]
  %v644 = vld [vmem:[%s8 + $0x120] sm:$0xff]
  %v645 = vld [vmem:[%s8 + $0x128] sm:$0xff]
  %v646 = vld [vmem:[%s8 + $0x130] sm:$0xff]
  %v647 = vld [vmem:[%s8 + $0x138] sm:$0xff]
  %v648 = vld [vmem:[%s8 + $0x140] sm:$0xff]
  %v649 = vld [vmem:[%s8 + $0x148] sm:$0xff]
  %v650 = vld [vmem:[%s8 + $0x150] sm:$0xff]
  %v651 = vld [vmem:[%s8 + $0x158] sm:$0xff]
  %v652 = vld [vmem:[%s8 + $0x160] sm:$0xff]
  %v653 = vld [vmem:[%s8 + $0x168] sm:$0xff]
  %v654 = vld [vmem:[%s8 + $0x170] sm:$0xff]
  %v655 = vld [vmem:[%s8 + $0x178] sm:$0xff]
  %v656 = vld [vmem:[%s8 + $0x180] sm:$0xff]
  %v657 = vld [vmem:[%s8 + $0x188] sm:$0xff]
  %v658 = vld [vmem:[%s8 + $0x190] sm:$0xff]
  %v659 = vld [vmem:[%s8 + $0x198] sm:$0xff]
  %v660 = vld [vmem:[%s8 + $0x1a0] sm:$0xff]
  %v661 = vld [vmem:[%s8 + $0x1a8] sm:$0xff]
  %v662 = vld [vmem:[%s8 + $0x1b0] sm:$0xff]
  %v663 = vld [vmem:[%s8 + $0x1b8] sm:$0xff]
  %v664 = vld [vmem:[%s8 + $0x1c0] sm:$0xff]
  %v665 = vld [vmem:[%s8 + $0x1c8] sm:$0xff]
  %v666 = vld [vmem:[%s8 + $0x1d0] sm:$0xff]
  %v667 = vld [vmem:[%s8 + $0x1d8] sm:$0xff]
  %v668 = vld [vmem:[%s8 + $0x1e0] sm:$0xff]
  %v669 = vld [vmem:[%s8 + $0x1e8] sm:$0xff]
  %v670 = vld [vmem:[%s8 + $0x1f0] sm:$0xff]
  %v671 = vld [vmem:[%s8 + $0x1f8] sm:$0xff]
  %v672 = vld [vmem:[%s5] sm:$0x1]
  %v673 = vld [vmem:[%s6] sm:$0x1]
  %v674 = vld [vmem:[#allocation3] sm:$0xff]
  %v675 = vld [vmem:[#allocation4] sm:$0xff]
  %s676 = smul.u32 0, 4
  %s677 = smul.addr %s676, 8
  %s678 = scalar_lea.vmem [#allocation2], %s677
  %v679 = vld [vmem:[%s678] sm:$0xff]
  %v680 = vld [vmem:[%s678 + $0x8] sm:$0xff]
  %v681 = vld [vmem:[%s678 + $0x10] sm:$0xff]
  %v682 = vld [vmem:[%s678 + $0x18] sm:$0xff]
  %v683 = vld [vmem:[%s96] sm:$0xff]
  %v684 = vld [vmem:[%s104] sm:$0xff]
  %686 = vset.pattern.permute.xlu0 0
  %687 = vperm.xlu0 %686, %v683
  %v688 = vpop.permute.xlu0 %687
  %v691 = vperm.slane %v672, 0
  %v693 = vmul.f32 %v688, %v691
  %v695 = vperm.slane %v673, 0
  %v697 = vadd.f32 %v693, %v695
  %v698 = vxor.u32 %v697, 2147483648
  %v699 = vmul.f32 %v698, 1.442695
  %v700 = vpow.pop %v699
  %v701 = vadd.f32 %v700, 1.0
  %v702 = vrcp.pop %v701
  %v703 = vmul.f32 %v701, %v702
  %v704 = vsub.f32 1.0, %v703
  %v705 = vmul.f32 %v702, %v704
  %v706 = vadd.f32 %v702, %v705
  %vm707 = vweird.f32 %v701
  %vm708 = vweird.f32 %v702
  %vm709 = vmor %vm707, %vm708
  %v710 = vsel %vm709, %v702, %v706
  %v711 = vand.u32 2147483647, %v701
  %vm712 = vcmp.eq.f32.partialorder %v711, 8.507059e+37
  %v713 = vand.u32 %v701, 2147483648
  %v714 = vor.u32 1.1754944e-38, %v713
  %v715 = vsel %vm712, %v714, %v710
  %v716 = vmul.f32 1.0, %v715
  %v717 = vmul.f32 %v675, %v716
  %718 = vmatpush.msra.mxu0 %v668
  %719 = vmatpush.msra.mxu0 %v664
  %720 = vmatpush.msra.mxu0 %v660
  %721 = vmatpush.msra.mxu0 %v656
  %722 = vmatpush.msra.mxu0 %v652
  %723 = vmatpush.msra.mxu0 %v648
  %724 = vmatpush.msra.mxu0 %v644
  %725 = vmatpush.msra.mxu0 %v640
  %726 = vmatpush.msra.mxu0 %v636
  %727 = vmatpush.msra.mxu0 %v632
  %728 = vmatpush.msra.mxu0 %v628
  %729 = vmatpush.msra.mxu0 %v624
  %730 = vmatpush.msra.mxu0 %v620
  %731 = vmatpush.msra.mxu0 %v616
  %732 = vmatpush.msra.mxu0 %v612
  %733 = vmatpush.msra.mxu0 %v608
  %734 = vmatmul.f32.gmra.mxu0 %v674
  %v735 = vpop.f32.mrf.mxu0
  %v736 = vadd.f32 0.0, %v735
  %737 = vdwg.mxu0
  %738 = vmatpush.msra.mxu0 %v669
  %739 = vmatpush.msra.mxu0 %v665
  %740 = vmatpush.msra.mxu0 %v661
  %741 = vmatpush.msra.mxu0 %v657
  %742 = vmatpush.msra.mxu0 %v653
  %743 = vmatpush.msra.mxu0 %v649
  %744 = vmatpush.msra.mxu0 %v645
  %745 = vmatpush.msra.mxu0 %v641
  %746 = vmatpush.msra.mxu0 %v637
  %747 = vmatpush.msra.mxu0 %v633
  %748 = vmatpush.msra.mxu0 %v629
  %749 = vmatpush.msra.mxu0 %v625
  %750 = vmatpush.msra.mxu0 %v621
  %751 = vmatpush.msra.mxu0 %v617
  %752 = vmatpush.msra.mxu0 %v613
  %753 = vmatpush.msra.mxu0 %v609
  %754 = vmatmul.f32.gmra.mxu0 %v674
  %v755 = vpop.f32.mrf.mxu0
  %v756 = vadd.f32 0.0, %v755
  %757 = vdwg.mxu0
  %758 = vmatpush.msra.mxu0 %v670
  %759 = vmatpush.msra.mxu0 %v666
  %760 = vmatpush.msra.mxu0 %v662
  %761 = vmatpush.msra.mxu0 %v658
  %762 = vmatpush.msra.mxu0 %v654
  %763 = vmatpush.msra.mxu0 %v650
  %764 = vmatpush.msra.mxu0 %v646
  %765 = vmatpush.msra.mxu0 %v642
  %766 = vmatpush.msra.mxu0 %v638
  %767 = vmatpush.msra.mxu0 %v634
  %768 = vmatpush.msra.mxu0 %v630
  %769 = vmatpush.msra.mxu0 %v626
  %770 = vmatpush.msra.mxu0 %v622
  %771 = vmatpush.msra.mxu0 %v618
  %772 = vmatpush.msra.mxu0 %v614
  %773 = vmatpush.msra.mxu0 %v610
  %774 = vmatmul.f32.gmra.mxu0 %v674
  %v775 = vpop.f32.mrf.mxu0
  %v776 = vadd.f32 0.0, %v775
  %777 = vdwg.mxu0
  %778 = vmatpush.msra.mxu0 %v671
  %779 = vmatpush.msra.mxu0 %v667
  %780 = vmatpush.msra.mxu0 %v663
  %781 = vmatpush.msra.mxu0 %v659
  %782 = vmatpush.msra.mxu0 %v655
  %783 = vmatpush.msra.mxu0 %v651
  %784 = vmatpush.msra.mxu0 %v647
  %785 = vmatpush.msra.mxu0 %v643
  %786 = vmatpush.msra.mxu0 %v639
  %787 = vmatpush.msra.mxu0 %v635
  %788 = vmatpush.msra.mxu0 %v631
  %789 = vmatpush.msra.mxu0 %v627
  %790 = vmatpush.msra.mxu0 %v623
  %791 = vmatpush.msra.mxu0 %v619
  %792 = vmatpush.msra.mxu0 %v615
  %793 = vmatpush.msra.mxu0 %v611
  %794 = vmatmul.f32.gmra.mxu0 %v674
  %v795 = vpop.f32.mrf.mxu0
  %v796 = vadd.f32 0.0, %v795
  %797 = vdwg.mxu0
  %v798 = vadd.f32 %v679, %v736
  %v799 = vadd.f32 %v680, %v756
  %v800 = vadd.f32 %v681, %v776
  %v801 = vadd.f32 %v682, %v796
  %v802 = vxor.u32 %v798, 2147483648
  %v803 = vmul.f32 %v802, 1.442695
  %v804 = vpow.pop %v803
  %v805 = vadd.f32 %v804, 1.0
  %v806 = vrcp.pop %v805
  %v807 = vmul.f32 %v805, %v806
  %v808 = vsub.f32 1.0, %v807
  %v809 = vmul.f32 %v806, %v808
  %v810 = vadd.f32 %v806, %v809
  %vm811 = vweird.f32 %v805
  %vm812 = vweird.f32 %v806
  %vm813 = vmor %vm811, %vm812
  %v814 = vsel %vm813, %v806, %v810
  %v815 = vand.u32 2147483647, %v805
  %vm816 = vcmp.eq.f32.partialorder %v815, 8.507059e+37
  %v817 = vand.u32 %v805, 2147483648
  %v818 = vor.u32 1.1754944e-38, %v817
  %v819 = vsel %vm816, %v818, %v814
  %v820 = vmul.f32 1.0, %v819
  %v821 = vxor.u32 %v799, 2147483648
  %v822 = vmul.f32 %v821, 1.442695
  %v823 = vpow.pop %v822
  %v824 = vadd.f32 %v823, 1.0
  %v825 = vrcp.pop %v824
  %v826 = vmul.f32 %v824, %v825
  %v827 = vsub.f32 1.0, %v826
  %v828 = vmul.f32 %v825, %v827
  %v829 = vadd.f32 %v825, %v828
  %vm830 = vweird.f32 %v824
  %vm831 = vweird.f32 %v825
  %vm832 = vmor %vm830, %vm831
  %v833 = vsel %vm832, %v825, %v829
  %v834 = vand.u32 2147483647, %v824
  %vm835 = vcmp.eq.f32.partialorder %v834, 8.507059e+37
  %v836 = vand.u32 %v824, 2147483648
  %v837 = vor.u32 1.1754944e-38, %v836
  %v838 = vsel %vm835, %v837, %v833
  %v839 = vmul.f32 1.0, %v838
  %v840 = vtanh.pop %v800
  %v841 = vxor.u32 %v801, 2147483648
  %v842 = vmul.f32 %v841, 1.442695
  %v843 = vpow.pop %v842
  %v844 = vadd.f32 %v843, 1.0
  %v845 = vrcp.pop %v844
  %v846 = vmul.f32 %v844, %v845
  %v847 = vsub.f32 1.0, %v846
  %v848 = vmul.f32 %v845, %v847
  %v849 = vadd.f32 %v845, %v848
  %vm850 = vweird.f32 %v844
  %vm851 = vweird.f32 %v845
  %vm852 = vmor %vm850, %vm851
  %v853 = vsel %vm852, %v845, %v849
  %v854 = vand.u32 2147483647, %v844
  %vm855 = vcmp.eq.f32.partialorder %v854, 8.507059e+37
  %v856 = vand.u32 %v844, 2147483648
  %v857 = vor.u32 1.1754944e-38, %v856
  %v858 = vsel %vm855, %v857, %v853
  %v859 = vmul.f32 1.0, %v858
  %v860 = vmul.f32 %v839, %v717
  %v861 = vmul.f32 %v820, %v840
  %v862 = vadd.f32 %v860, %v861
  %v863 = vtanh.pop %v862
  %v864 = vmul.f32 %v859, %v863
  %866 = vset.pattern.permute.xlu0 0
  %867 = vperm.xlu0 %866, %v684
  %v868 = vpop.permute.xlu0 %867
  %v870 = vmul.f32 %v864, %v868
  %v871 = vmul.f32 %v862, %v868
  %s872 = smul.u32 1, 4
  %s873 = smul.addr %s872, 8
  %s874 = scalar_lea.vmem [#allocation2], %s873
  %v875 = vld [vmem:[%s874] sm:$0xff]
  %v876 = vld [vmem:[%s874 + $0x8] sm:$0xff]
  %v877 = vld [vmem:[%s874 + $0x10] sm:$0xff]
  %v878 = vld [vmem:[%s874 + $0x18] sm:$0xff]
  %s879 = scalar_lea.vmem %s96, 8
  %v880 = vld [vmem:[%s879] sm:$0xff]
  %s881 = scalar_lea.vmem %s104, 8
  %v882 = vld [vmem:[%s881] sm:$0xff]
  %884 = vset.pattern.permute.xlu0 0
  %885 = vperm.xlu0 %884, %v880
  %v886 = vpop.permute.xlu0 %885
  %v888 = vmul.f32 %v886, %v691
  %v889 = vadd.f32 %v888, %v695
  %v890 = vxor.u32 %v889, 2147483648
  %v891 = vmul.f32 %v890, 1.442695
  %v892 = vpow.pop %v891
  %v893 = vadd.f32 %v892, 1.0
  %v894 = vrcp.pop %v893
  %v895 = vmul.f32 %v893, %v894
  %v896 = vsub.f32 1.0, %v895
  %v897 = vmul.f32 %v894, %v896
  %v898 = vadd.f32 %v894, %v897
  %vm899 = vweird.f32 %v893
  %vm900 = vweird.f32 %v894
  %vm901 = vmor %vm899, %vm900
  %v902 = vsel %vm901, %v894, %v898
  %v903 = vand.u32 2147483647, %v893
  %vm904 = vcmp.eq.f32.partialorder %v903, 8.507059e+37
  %v905 = vand.u32 %v893, 2147483648
  %v906 = vor.u32 1.1754944e-38, %v905
  %v907 = vsel %vm904, %v906, %v902
  %v908 = vmul.f32 1.0, %v907
  %v909 = vmul.f32 %v871, %v908
  %910 = vmatpush.msra.mxu0 %v668
  %911 = vmatpush.msra.mxu0 %v664
  %912 = vmatpush.msra.mxu0 %v660
  %913 = vmatpush.msra.mxu0 %v656
  %914 = vmatpush.msra.mxu0 %v652
  %915 = vmatpush.msra.mxu0 %v648
  %916 = vmatpush.msra.mxu0 %v644
  %917 = vmatpush.msra.mxu0 %v640
  %918 = vmatpush.msra.mxu0 %v636
  %919 = vmatpush.msra.mxu0 %v632
  %920 = vmatpush.msra.mxu0 %v628
  %921 = vmatpush.msra.mxu0 %v624
  %922 = vmatpush.msra.mxu0 %v620
  %923 = vmatpush.msra.mxu0 %v616
  %924 = vmatpush.msra.mxu0 %v612
  %925 = vmatpush.msra.mxu0 %v608
  %926 = vmatmul.f32.gmra.mxu0 %v870
  %v927 = vpop.f32.mrf.mxu0
  %v928 = vadd.f32 0.0, %v927
  %929 = vdwg.mxu0
  %930 = vmatpush.msra.mxu0 %v669
  %931 = vmatpush.msra.mxu0 %v665
  %932 = vmatpush.msra.mxu0 %v661
  %933 = vmatpush.msra.mxu0 %v657
  %934 = vmatpush.msra.mxu0 %v653
  %935 = vmatpush.msra.mxu0 %v649
  %936 = vmatpush.msra.mxu0 %v645
  %937 = vmatpush.msra.mxu0 %v641
  %938 = vmatpush.msra.mxu0 %v637
  %939 = vmatpush.msra.mxu0 %v633
  %940 = vmatpush.msra.mxu0 %v629
  %941 = vmatpush.msra.mxu0 %v625
  %942 = vmatpush.msra.mxu0 %v621
  %943 = vmatpush.msra.mxu0 %v617
  %944 = vmatpush.msra.mxu0 %v613
  %945 = vmatpush.msra.mxu0 %v609
  %946 = vmatmul.f32.gmra.mxu0 %v870
  %v947 = vpop.f32.mrf.mxu0
  %v948 = vadd.f32 0.0, %v947
  %949 = vdwg.mxu0
  %950 = vmatpush.msra.mxu0 %v670
  %951 = vmatpush.msra.mxu0 %v666
  %952 = vmatpush.msra.mxu0 %v662
  %953 = vmatpush.msra.mxu0 %v658
  %954 = vmatpush.msra.mxu0 %v654
  %955 = vmatpush.msra.mxu0 %v650
  %956 = vmatpush.msra.mxu0 %v646
  %957 = vmatpush.msra.mxu0 %v642
  %958 = vmatpush.msra.mxu0 %v638
  %959 = vmatpush.msra.mxu0 %v634
  %960 = vmatpush.msra.mxu0 %v630
  %961 = vmatpush.msra.mxu0 %v626
  %962 = vmatpush.msra.mxu0 %v622
  %963 = vmatpush.msra.mxu0 %v618
  %964 = vmatpush.msra.mxu0 %v614
  %965 = vmatpush.msra.mxu0 %v610
  %966 = vmatmul.f32.gmra.mxu0 %v870
  %v967 = vpop.f32.mrf.mxu0
  %v968 = vadd.f32 0.0, %v967
  %969 = vdwg.mxu0
  %970 = vmatpush.msra.mxu0 %v671
  %971 = vmatpush.msra.mxu0 %v667
  %972 = vmatpush.msra.mxu0 %v663
  %973 = vmatpush.msra.mxu0 %v659
  %974 = vmatpush.msra.mxu0 %v655
  %975 = vmatpush.msra.mxu0 %v651
  %976 = vmatpush.msra.mxu0 %v647
  %977 = vmatpush.msra.mxu0 %v643
  %978 = vmatpush.msra.mxu0 %v639
  %979 = vmatpush.msra.mxu0 %v635
  %980 = vmatpush.msra.mxu0 %v631
  %981 = vmatpush.msra.mxu0 %v627
  %982 = vmatpush.msra.mxu0 %v623
  %983 = vmatpush.msra.mxu0 %v619
  %984 = vmatpush.msra.mxu0 %v615
  %985 = vmatpush.msra.mxu0 %v611
  %986 = vmatmul.f32.gmra.mxu0 %v870
  %v987 = vpop.f32.mrf.mxu0
  %v988 = vadd.f32 0.0, %v987
  %989 = vdwg.mxu0
  %v990 = vadd.f32 %v875, %v928
  %v991 = vadd.f32 %v876, %v948
  %v992 = vadd.f32 %v877, %v968
  %v993 = vadd.f32 %v878, %v988
  %v994 = vxor.u32 %v990, 2147483648
  %v995 = vmul.f32 %v994, 1.442695
  %v996 = vpow.pop %v995
  %v997 = vadd.f32 %v996, 1.0
  %v998 = vrcp.pop %v997
  %v999 = vmul.f32 %v997, %v998
  %v1000 = vsub.f32 1.0, %v999
  %v1001 = vmul.f32 %v998, %v1000
  %v1002 = vadd.f32 %v998, %v1001
  %vm1003 = vweird.f32 %v997
  %vm1004 = vweird.f32 %v998
  %vm1005 = vmor %vm1003, %vm1004
  %v1006 = vsel %vm1005, %v998, %v1002
  %v1007 = vand.u32 2147483647, %v997
  %vm1008 = vcmp.eq.f32.partialorder %v1007, 8.507059e+37
  %v1009 = vand.u32 %v997, 2147483648
  %v1010 = vor.u32 1.1754944e-38, %v1009
  %v1011 = vsel %vm1008, %v1010, %v1006
  %v1012 = vmul.f32 1.0, %v1011
  %v1013 = vxor.u32 %v991, 2147483648
  %v1014 = vmul.f32 %v1013, 1.442695
  %v1015 = vpow.pop %v1014
  %v1016 = vadd.f32 %v1015, 1.0
  %v1017 = vrcp.pop %v1016
  %v1018 = vmul.f32 %v1016, %v1017
  %v1019 = vsub.f32 1.0, %v1018
  %v1020 = vmul.f32 %v1017, %v1019
  %v1021 = vadd.f32 %v1017, %v1020
  %vm1022 = vweird.f32 %v1016
  %vm1023 = vweird.f32 %v1017
  %vm1024 = vmor %vm1022, %vm1023
  %v1025 = vsel %vm1024, %v1017, %v1021
  %v1026 = vand.u32 2147483647, %v1016
  %vm1027 = vcmp.eq.f32.partialorder %v1026, 8.507059e+37
  %v1028 = vand.u32 %v1016, 2147483648
  %v1029 = vor.u32 1.1754944e-38, %v1028
  %v1030 = vsel %vm1027, %v1029, %v1025
  %v1031 = vmul.f32 1.0, %v1030
  %v1032 = vtanh.pop %v992
  %v1033 = vxor.u32 %v993, 2147483648
  %v1034 = vmul.f32 %v1033, 1.442695
  %v1035 = vpow.pop %v1034
  %v1036 = vadd.f32 %v1035, 1.0
  %v1037 = vrcp.pop %v1036
  %v1038 = vmul.f32 %v1036, %v1037
  %v1039 = vsub.f32 1.0, %v1038
  %v1040 = vmul.f32 %v1037, %v1039
  %v1041 = vadd.f32 %v1037, %v1040
  %vm1042 = vweird.f32 %v1036
  %vm1043 = vweird.f32 %v1037
  %vm1044 = vmor %vm1042, %vm1043
  %v1045 = vsel %vm1044, %v1037, %v1041
  %v1046 = vand.u32 2147483647, %v1036
  %vm1047 = vcmp.eq.f32.partialorder %v1046, 8.507059e+37
  %v1048 = vand.u32 %v1036, 2147483648
  %v1049 = vor.u32 1.1754944e-38, %v1048
  %v1050 = vsel %vm1047, %v1049, %v1045
  %v1051 = vmul.f32 1.0, %v1050
  %v1052 = vmul.f32 %v1031, %v909
  %v1053 = vmul.f32 %v1012, %v1032
  %v1054 = vadd.f32 %v1052, %v1053
  %v1055 = vtanh.pop %v1054
  %v1056 = vmul.f32 %v1051, %v1055
  %1058 = vset.pattern.permute.xlu0 0
  %1059 = vperm.xlu0 %1058, %v882
  %v1060 = vpop.permute.xlu0 %1059
  %v1062 = vmul.f32 %v1056, %v1060
  %v1063 = vmul.f32 %v1054, %v1060
  %s1064 = smul.u32 2, 4
  %s1065 = smul.addr %s1064, 8
  %s1066 = scalar_lea.vmem [#allocation2], %s1065
  %v1067 = vld [vmem:[%s1066] sm:$0xff]
  %v1068 = vld [vmem:[%s1066 + $0x8] sm:$0xff]
  %v1069 = vld [vmem:[%s1066 + $0x10] sm:$0xff]
  %v1070 = vld [vmem:[%s1066 + $0x18] sm:$0xff]
  %s1071 = scalar_lea.vmem %s96, 16
  %v1072 = vld [vmem:[%s1071] sm:$0xff]
  %s1073 = scalar_lea.vmem %s104, 16
  %v1074 = vld [vmem:[%s1073] sm:$0xff]
  %1076 = vset.pattern.permute.xlu0 0
  %1077 = vperm.xlu0 %1076, %v1072
  %v1078 = vpop.permute.xlu0 %1077
  %v1080 = vmul.f32 %v1078, %v691
  %v1081 = vadd.f32 %v1080, %v695
  %v1082 = vxor.u32 %v1081, 2147483648
  %v1083 = vmul.f32 %v1082, 1.442695
  %v1084 = vpow.pop %v1083
  %v1085 = vadd.f32 %v1084, 1.0
  %v1086 = vrcp.pop %v1085
  %v1087 = vmul.f32 %v1085, %v1086
  %v1088 = vsub.f32 1.0, %v1087
  %v1089 = vmul.f32 %v1086, %v1088
  %v1090 = vadd.f32 %v1086, %v1089
  %vm1091 = vweird.f32 %v1085
  %vm1092 = vweird.f32 %v1086
  %vm1093 = vmor %vm1091, %vm1092
  %v1094 = vsel %vm1093, %v1086, %v1090
  %v1095 = vand.u32 2147483647, %v1085
  %vm1096 = vcmp.eq.f32.partialorder %v1095, 8.507059e+37
  %v1097 = vand.u32 %v1085, 2147483648
  %v1098 = vor.u32 1.1754944e-38, %v1097
  %v1099 = vsel %vm1096, %v1098, %v1094
  %v1100 = vmul.f32 1.0, %v1099
  %v1101 = vmul.f32 %v1063, %v1100
  %1102 = vmatpush.msra.mxu0 %v668
  %1103 = vmatpush.msra.mxu0 %v664
  %1104 = vmatpush.msra.mxu0 %v660
  %1105 = vmatpush.msra.mxu0 %v656
  %1106 = vmatpush.msra.mxu0 %v652
  %1107 = vmatpush.msra.mxu0 %v648
  %1108 = vmatpush.msra.mxu0 %v644
  %1109 = vmatpush.msra.mxu0 %v640
  %1110 = vmatpush.msra.mxu0 %v636
  %1111 = vmatpush.msra.mxu0 %v632
  %1112 = vmatpush.msra.mxu0 %v628
  %1113 = vmatpush.msra.mxu0 %v624
  %1114 = vmatpush.msra.mxu0 %v620
  %1115 = vmatpush.msra.mxu0 %v616
  %1116 = vmatpush.msra.mxu0 %v612
  %1117 = vmatpush.msra.mxu0 %v608
  %1118 = vmatmul.f32.gmra.mxu0 %v1062
  %v1119 = vpop.f32.mrf.mxu0
  %v1120 = vadd.f32 0.0, %v1119
  %1121 = vdwg.mxu0
  %1122 = vmatpush.msra.mxu0 %v669
  %1123 = vmatpush.msra.mxu0 %v665
  %1124 = vmatpush.msra.mxu0 %v661
  %1125 = vmatpush.msra.mxu0 %v657
  %1126 = vmatpush.msra.mxu0 %v653
  %1127 = vmatpush.msra.mxu0 %v649
  %1128 = vmatpush.msra.mxu0 %v645
  %1129 = vmatpush.msra.mxu0 %v641
  %1130 = vmatpush.msra.mxu0 %v637
  %1131 = vmatpush.msra.mxu0 %v633
  %1132 = vmatpush.msra.mxu0 %v629
  %1133 = vmatpush.msra.mxu0 %v625
  %1134 = vmatpush.msra.mxu0 %v621
  %1135 = vmatpush.msra.mxu0 %v617
  %1136 = vmatpush.msra.mxu0 %v613
  %1137 = vmatpush.msra.mxu0 %v609
  %1138 = vmatmul.f32.gmra.mxu0 %v1062
  %v1139 = vpop.f32.mrf.mxu0
  %v1140 = vadd.f32 0.0, %v1139
  %1141 = vdwg.mxu0
  %1142 = vmatpush.msra.mxu0 %v670
  %1143 = vmatpush.msra.mxu0 %v666
  %1144 = vmatpush.msra.mxu0 %v662
  %1145 = vmatpush.msra.mxu0 %v658
  %1146 = vmatpush.msra.mxu0 %v654
  %1147 = vmatpush.msra.mxu0 %v650
  %1148 = vmatpush.msra.mxu0 %v646
  %1149 = vmatpush.msra.mxu0 %v642
  %1150 = vmatpush.msra.mxu0 %v638
  %1151 = vmatpush.msra.mxu0 %v634
  %1152 = vmatpush.msra.mxu0 %v630
  %1153 = vmatpush.msra.mxu0 %v626
  %1154 = vmatpush.msra.mxu0 %v622
  %1155 = vmatpush.msra.mxu0 %v618
  %1156 = vmatpush.msra.mxu0 %v614
  %1157 = vmatpush.msra.mxu0 %v610
  %1158 = vmatmul.f32.gmra.mxu0 %v1062
  %v1159 = vpop.f32.mrf.mxu0
  %v1160 = vadd.f32 0.0, %v1159
  %1161 = vdwg.mxu0
  %1162 = vmatpush.msra.mxu0 %v671
  %1163 = vmatpush.msra.mxu0 %v667
  %1164 = vmatpush.msra.mxu0 %v663
  %1165 = vmatpush.msra.mxu0 %v659
  %1166 = vmatpush.msra.mxu0 %v655
  %1167 = vmatpush.msra.mxu0 %v651
  %1168 = vmatpush.msra.mxu0 %v647
  %1169 = vmatpush.msra.mxu0 %v643
  %1170 = vmatpush.msra.mxu0 %v639
  %1171 = vmatpush.msra.mxu0 %v635
  %1172 = vmatpush.msra.mxu0 %v631
  %1173 = vmatpush.msra.mxu0 %v627
  %1174 = vmatpush.msra.mxu0 %v623
  %1175 = vmatpush.msra.mxu0 %v619
  %1176 = vmatpush.msra.mxu0 %v615
  %1177 = vmatpush.msra.mxu0 %v611
  %1178 = vmatmul.f32.gmra.mxu0 %v1062
  %v1179 = vpop.f32.mrf.mxu0
  %v1180 = vadd.f32 0.0, %v1179
  %1181 = vdwg.mxu0
  %v1182 = vadd.f32 %v1067, %v1120
  %v1183 = vadd.f32 %v1068, %v1140
  %v1184 = vadd.f32 %v1069, %v1160
  %v1185 = vadd.f32 %v1070, %v1180
  %v1186 = vxor.u32 %v1182, 2147483648
  %v1187 = vmul.f32 %v1186, 1.442695
  %v1188 = vpow.pop %v1187
  %v1189 = vadd.f32 %v1188, 1.0
  %v1190 = vrcp.pop %v1189
  %v1191 = vmul.f32 %v1189, %v1190
  %v1192 = vsub.f32 1.0, %v1191
  %v1193 = vmul.f32 %v1190, %v1192
  %v1194 = vadd.f32 %v1190, %v1193
  %vm1195 = vweird.f32 %v1189
  %vm1196 = vweird.f32 %v1190
  %vm1197 = vmor %vm1195, %vm1196
  %v1198 = vsel %vm1197, %v1190, %v1194
  %v1199 = vand.u32 2147483647, %v1189
  %vm1200 = vcmp.eq.f32.partialorder %v1199, 8.507059e+37
  %v1201 = vand.u32 %v1189, 2147483648
  %v1202 = vor.u32 1.1754944e-38, %v1201
  %v1203 = vsel %vm1200, %v1202, %v1198
  %v1204 = vmul.f32 1.0, %v1203
  %v1205 = vxor.u32 %v1183, 2147483648
  %v1206 = vmul.f32 %v1205, 1.442695
  %v1207 = vpow.pop %v1206
  %v1208 = vadd.f32 %v1207, 1.0
  %v1209 = vrcp.pop %v1208
  %v1210 = vmul.f32 %v1208, %v1209
  %v1211 = vsub.f32 1.0, %v1210
  %v1212 = vmul.f32 %v1209, %v1211
  %v1213 = vadd.f32 %v1209, %v1212
  %vm1214 = vweird.f32 %v1208
  %vm1215 = vweird.f32 %v1209
  %vm1216 = vmor %vm1214, %vm1215
  %v1217 = vsel %vm1216, %v1209, %v1213
  %v1218 = vand.u32 2147483647, %v1208
  %vm1219 = vcmp.eq.f32.partialorder %v1218, 8.507059e+37
  %v1220 = vand.u32 %v1208, 2147483648
  %v1221 = vor.u32 1.1754944e-38, %v1220
  %v1222 = vsel %vm1219, %v1221, %v1217
  %v1223 = vmul.f32 1.0, %v1222
  %v1224 = vtanh.pop %v1184
  %v1225 = vxor.u32 %v1185, 2147483648
  %v1226 = vmul.f32 %v1225, 1.442695
  %v1227 = vpow.pop %v1226
  %v1228 = vadd.f32 %v1227, 1.0
  %v1229 = vrcp.pop %v1228
  %v1230 = vmul.f32 %v1228, %v1229
  %v1231 = vsub.f32 1.0, %v1230
  %v1232 = vmul.f32 %v1229, %v1231
  %v1233 = vadd.f32 %v1229, %v1232
  %vm1234 = vweird.f32 %v1228
  %vm1235 = vweird.f32 %v1229
  %vm1236 = vmor %vm1234, %vm1235
  %v1237 = vsel %vm1236, %v1229, %v1233
  %v1238 = vand.u32 2147483647, %v1228
  %vm1239 = vcmp.eq.f32.partialorder %v1238, 8.507059e+37
  %v1240 = vand.u32 %v1228, 2147483648
  %v1241 = vor.u32 1.1754944e-38, %v1240
  %v1242 = vsel %vm1239, %v1241, %v1237
  %v1243 = vmul.f32 1.0, %v1242
  %v1244 = vmul.f32 %v1223, %v1101
  %v1245 = vmul.f32 %v1204, %v1224
  %v1246 = vadd.f32 %v1244, %v1245
  %v1247 = vtanh.pop %v1246
  %v1248 = vmul.f32 %v1243, %v1247
  %1250 = vset.pattern.permute.xlu0 0
  %1251 = vperm.xlu0 %1250, %v1074
  %v1252 = vpop.permute.xlu0 %1251
  %v1254 = vmul.f32 %v1248, %v1252
  %v1255 = vmul.f32 %v1246, %v1252
  %s1256 = smul.u32 3, 4
  %s1257 = smul.addr %s1256, 8
  %s1258 = scalar_lea.vmem [#allocation2], %s1257
  %v1259 = vld [vmem:[%s1258] sm:$0xff]
  %v1260 = vld [vmem:[%s1258 + $0x8] sm:$0xff]
  %v1261 = vld [vmem:[%s1258 + $0x10] sm:$0xff]
  %v1262 = vld [vmem:[%s1258 + $0x18] sm:$0xff]
  %s1263 = scalar_lea.vmem %s96, 24
  %v1264 = vld [vmem:[%s1263] sm:$0xff]
  %s1265 = scalar_lea.vmem %s104, 24
  %v1266 = vld [vmem:[%s1265] sm:$0xff]
  %1268 = vset.pattern.permute.xlu0 0
  %1269 = vperm.xlu0 %1268, %v1264
  %v1270 = vpop.permute.xlu0 %1269
  %v1272 = vmul.f32 %v1270, %v691
  %v1273 = vadd.f32 %v1272, %v695
  %v1274 = vxor.u32 %v1273, 2147483648
  %v1275 = vmul.f32 %v1274, 1.442695
  %v1276 = vpow.pop %v1275
  %v1277 = vadd.f32 %v1276, 1.0
  %v1278 = vrcp.pop %v1277
  %v1279 = vmul.f32 %v1277, %v1278
  %v1280 = vsub.f32 1.0, %v1279
  %v1281 = vmul.f32 %v1278, %v1280
  %v1282 = vadd.f32 %v1278, %v1281
  %vm1283 = vweird.f32 %v1277
  %vm1284 = vweird.f32 %v1278
  %vm1285 = vmor %vm1283, %vm1284
  %v1286 = vsel %vm1285, %v1278, %v1282
  %v1287 = vand.u32 2147483647, %v1277
  %vm1288 = vcmp.eq.f32.partialorder %v1287, 8.507059e+37
  %v1289 = vand.u32 %v1277, 2147483648
  %v1290 = vor.u32 1.1754944e-38, %v1289
  %v1291 = vsel %vm1288, %v1290, %v1286
  %v1292 = vmul.f32 1.0, %v1291
  %v1293 = vmul.f32 %v1255, %v1292
  %1294 = vmatpush.msra.mxu0 %v668
  %1295 = vmatpush.msra.mxu0 %v664
  %1296 = vmatpush.msra.mxu0 %v660
  %1297 = vmatpush.msra.mxu0 %v656
  %1298 = vmatpush.msra.mxu0 %v652
  %1299 = vmatpush.msra.mxu0 %v648
  %1300 = vmatpush.msra.mxu0 %v644
  %1301 = vmatpush.msra.mxu0 %v640
  %1302 = vmatpush.msra.mxu0 %v636
  %1303 = vmatpush.msra.mxu0 %v632
  %1304 = vmatpush.msra.mxu0 %v628
  %1305 = vmatpush.msra.mxu0 %v624
  %1306 = vmatpush.msra.mxu0 %v620
  %1307 = vmatpush.msra.mxu0 %v616
  %1308 = vmatpush.msra.mxu0 %v612
  %1309 = vmatpush.msra.mxu0 %v608
  %1310 = vmatmul.f32.gmra.mxu0 %v1254
  %v1311 = vpop.f32.mrf.mxu0
  %v1312 = vadd.f32 0.0, %v1311
  %1313 = vdwg.mxu0
  %1314 = vmatpush.msra.mxu0 %v669
  %1315 = vmatpush.msra.mxu0 %v665
  %1316 = vmatpush.msra.mxu0 %v661
  %1317 = vmatpush.msra.mxu0 %v657
  %1318 = vmatpush.msra.mxu0 %v653
  %1319 = vmatpush.msra.mxu0 %v649
  %1320 = vmatpush.msra.mxu0 %v645
  %1321 = vmatpush.msra.mxu0 %v641
  %1322 = vmatpush.msra.mxu0 %v637
  %1323 = vmatpush.msra.mxu0 %v633
  %1324 = vmatpush.msra.mxu0 %v629
  %1325 = vmatpush.msra.mxu0 %v625
  %1326 = vmatpush.msra.mxu0 %v621
  %1327 = vmatpush.msra.mxu0 %v617
  %1328 = vmatpush.msra.mxu0 %v613
  %1329 = vmatpush.msra.mxu0 %v609
  %1330 = vmatmul.f32.gmra.mxu0 %v1254
  %v1331 = vpop.f32.mrf.mxu0
  %v1332 = vadd.f32 0.0, %v1331
  %1333 = vdwg.mxu0
  %1334 = vmatpush.msra.mxu0 %v670
  %1335 = vmatpush.msra.mxu0 %v666
  %1336 = vmatpush.msra.mxu0 %v662
  %1337 = vmatpush.msra.mxu0 %v658
  %1338 = vmatpush.msra.mxu0 %v654
  %1339 = vmatpush.msra.mxu0 %v650
  %1340 = vmatpush.msra.mxu0 %v646
  %1341 = vmatpush.msra.mxu0 %v642
  %1342 = vmatpush.msra.mxu0 %v638
  %1343 = vmatpush.msra.mxu0 %v634
  %1344 = vmatpush.msra.mxu0 %v630
  %1345 = vmatpush.msra.mxu0 %v626
  %1346 = vmatpush.msra.mxu0 %v622
  %1347 = vmatpush.msra.mxu0 %v618
  %1348 = vmatpush.msra.mxu0 %v614
  %1349 = vmatpush.msra.mxu0 %v610
  %1350 = vmatmul.f32.gmra.mxu0 %v1254
  %v1351 = vpop.f32.mrf.mxu0
  %v1352 = vadd.f32 0.0, %v1351
  %1353 = vdwg.mxu0
  %1354 = vmatpush.msra.mxu0 %v671
  %1355 = vmatpush.msra.mxu0 %v667
  %1356 = vmatpush.msra.mxu0 %v663
  %1357 = vmatpush.msra.mxu0 %v659
  %1358 = vmatpush.msra.mxu0 %v655
  %1359 = vmatpush.msra.mxu0 %v651
  %1360 = vmatpush.msra.mxu0 %v647
  %1361 = vmatpush.msra.mxu0 %v643
  %1362 = vmatpush.msra.mxu0 %v639
  %1363 = vmatpush.msra.mxu0 %v635
  %1364 = vmatpush.msra.mxu0 %v631
  %1365 = vmatpush.msra.mxu0 %v627
  %1366 = vmatpush.msra.mxu0 %v623
  %1367 = vmatpush.msra.mxu0 %v619
  %1368 = vmatpush.msra.mxu0 %v615
  %1369 = vmatpush.msra.mxu0 %v611
  %1370 = vmatmul.f32.gmra.mxu0 %v1254
  %v1371 = vpop.f32.mrf.mxu0
  %v1372 = vadd.f32 0.0, %v1371
  %1373 = vdwg.mxu0
  %v1374 = vadd.f32 %v1259, %v1312
  %v1375 = vadd.f32 %v1260, %v1332
  %v1376 = vadd.f32 %v1261, %v1352
  %v1377 = vadd.f32 %v1262, %v1372
  %v1378 = vxor.u32 %v1374, 2147483648
  %v1379 = vmul.f32 %v1378, 1.442695
  %v1380 = vpow.pop %v1379
  %v1381 = vadd.f32 %v1380, 1.0
  %v1382 = vrcp.pop %v1381
  %v1383 = vmul.f32 %v1381, %v1382
  %v1384 = vsub.f32 1.0, %v1383
  %v1385 = vmul.f32 %v1382, %v1384
  %v1386 = vadd.f32 %v1382, %v1385
  %vm1387 = vweird.f32 %v1381
  %vm1388 = vweird.f32 %v1382
  %vm1389 = vmor %vm1387, %vm1388
  %v1390 = vsel %vm1389, %v1382, %v1386
  %v1391 = vand.u32 2147483647, %v1381
  %vm1392 = vcmp.eq.f32.partialorder %v1391, 8.507059e+37
  %v1393 = vand.u32 %v1381, 2147483648
  %v1394 = vor.u32 1.1754944e-38, %v1393
  %v1395 = vsel %vm1392, %v1394, %v1390
  %v1396 = vmul.f32 1.0, %v1395
  %v1397 = vxor.u32 %v1375, 2147483648
  %v1398 = vmul.f32 %v1397, 1.442695
  %v1399 = vpow.pop %v1398
  %v1400 = vadd.f32 %v1399, 1.0
  %v1401 = vrcp.pop %v1400
  %v1402 = vmul.f32 %v1400, %v1401
  %v1403 = vsub.f32 1.0, %v1402
  %v1404 = vmul.f32 %v1401, %v1403
  %v1405 = vadd.f32 %v1401, %v1404
  %vm1406 = vweird.f32 %v1400
  %vm1407 = vweird.f32 %v1401
  %vm1408 = vmor %vm1406, %vm1407
  %v1409 = vsel %vm1408, %v1401, %v1405
  %v1410 = vand.u32 2147483647, %v1400
  %vm1411 = vcmp.eq.f32.partialorder %v1410, 8.507059e+37
  %v1412 = vand.u32 %v1400, 2147483648
  %v1413 = vor.u32 1.1754944e-38, %v1412
  %v1414 = vsel %vm1411, %v1413, %v1409
  %v1415 = vmul.f32 1.0, %v1414
  %v1416 = vtanh.pop %v1376
  %v1417 = vxor.u32 %v1377, 2147483648
  %v1418 = vmul.f32 %v1417, 1.442695
  %v1419 = vpow.pop %v1418
  %v1420 = vadd.f32 %v1419, 1.0
  %v1421 = vrcp.pop %v1420
  %v1422 = vmul.f32 %v1420, %v1421
  %v1423 = vsub.f32 1.0, %v1422
  %v1424 = vmul.f32 %v1421, %v1423
  %v1425 = vadd.f32 %v1421, %v1424
  %vm1426 = vweird.f32 %v1420
  %vm1427 = vweird.f32 %v1421
  %vm1428 = vmor %vm1426, %vm1427
  %v1429 = vsel %vm1428, %v1421, %v1425
  %v1430 = vand.u32 2147483647, %v1420
  %vm1431 = vcmp.eq.f32.partialorder %v1430, 8.507059e+37
  %v1432 = vand.u32 %v1420, 2147483648
  %v1433 = vor.u32 1.1754944e-38, %v1432
  %v1434 = vsel %vm1431, %v1433, %v1429
  %v1435 = vmul.f32 1.0, %v1434
  %v1436 = vmul.f32 %v1415, %v1293
  %v1437 = vmul.f32 %v1396, %v1416
  %v1438 = vadd.f32 %v1436, %v1437
  %v1439 = vtanh.pop %v1438
  %v1440 = vmul.f32 %v1435, %v1439
  %1442 = vset.pattern.permute.xlu0 0
  %1443 = vperm.xlu0 %1442, %v1266
  %v1444 = vpop.permute.xlu0 %1443
  %v1446 = vmul.f32 %v1440, %v1444
  %v1447 = vmul.f32 %v1438, %v1444
  %s1448 = smul.u32 4, 4
  %s1449 = smul.addr %s1448, 8
  %s1450 = scalar_lea.vmem [#allocation2], %s1449
  %v1451 = vld [vmem:[%s1450] sm:$0xff]
  %v1452 = vld [vmem:[%s1450 + $0x8] sm:$0xff]
  %v1453 = vld [vmem:[%s1450 + $0x10] sm:$0xff]
  %v1454 = vld [vmem:[%s1450 + $0x18] sm:$0xff]
  %s1455 = scalar_lea.vmem %s96, 32
  %v1456 = vld [vmem:[%s1455] sm:$0xff]
  %s1457 = scalar_lea.vmem %s104, 32
  %v1458 = vld [vmem:[%s1457] sm:$0xff]
  %1460 = vset.pattern.permute.xlu0 0
  %1461 = vperm.xlu0 %1460, %v1456
  %v1462 = vpop.permute.xlu0 %1461
  %v1464 = vmul.f32 %v1462, %v691
  %v1465 = vadd.f32 %v1464, %v695
  %v1466 = vxor.u32 %v1465, 2147483648
  %v1467 = vmul.f32 %v1466, 1.442695
  %v1468 = vpow.pop %v1467
  %v1469 = vadd.f32 %v1468, 1.0
  %v1470 = vrcp.pop %v1469
  %v1471 = vmul.f32 %v1469, %v1470
  %v1472 = vsub.f32 1.0, %v1471
  %v1473 = vmul.f32 %v1470, %v1472
  %v1474 = vadd.f32 %v1470, %v1473
  %vm1475 = vweird.f32 %v1469
  %vm1476 = vweird.f32 %v1470
  %vm1477 = vmor %vm1475, %vm1476
  %v1478 = vsel %vm1477, %v1470, %v1474
  %v1479 = vand.u32 2147483647, %v1469
  %vm1480 = vcmp.eq.f32.partialorder %v1479, 8.507059e+37
  %v1481 = vand.u32 %v1469, 2147483648
  %v1482 = vor.u32 1.1754944e-38, %v1481
  %v1483 = vsel %vm1480, %v1482, %v1478
  %v1484 = vmul.f32 1.0, %v1483
  %v1485 = vmul.f32 %v1447, %v1484
  %1486 = vmatpush.msra.mxu0 %v668
  %1487 = vmatpush.msra.mxu0 %v664
  %1488 = vmatpush.msra.mxu0 %v660
  %1489 = vmatpush.msra.mxu0 %v656
  %1490 = vmatpush.msra.mxu0 %v652
  %1491 = vmatpush.msra.mxu0 %v648
  %1492 = vmatpush.msra.mxu0 %v644
  %1493 = vmatpush.msra.mxu0 %v640
  %1494 = vmatpush.msra.mxu0 %v636
  %1495 = vmatpush.msra.mxu0 %v632
  %1496 = vmatpush.msra.mxu0 %v628
  %1497 = vmatpush.msra.mxu0 %v624
  %1498 = vmatpush.msra.mxu0 %v620
  %1499 = vmatpush.msra.mxu0 %v616
  %1500 = vmatpush.msra.mxu0 %v612
  %1501 = vmatpush.msra.mxu0 %v608
  %1502 = vmatmul.f32.gmra.mxu0 %v1446
  %v1503 = vpop.f32.mrf.mxu0
  %v1504 = vadd.f32 0.0, %v1503
  %1505 = vdwg.mxu0
  %1506 = vmatpush.msra.mxu0 %v669
  %1507 = vmatpush.msra.mxu0 %v665
  %1508 = vmatpush.msra.mxu0 %v661
  %1509 = vmatpush.msra.mxu0 %v657
  %1510 = vmatpush.msra.mxu0 %v653
  %1511 = vmatpush.msra.mxu0 %v649
  %1512 = vmatpush.msra.mxu0 %v645
  %1513 = vmatpush.msra.mxu0 %v641
  %1514 = vmatpush.msra.mxu0 %v637
  %1515 = vmatpush.msra.mxu0 %v633
  %1516 = vmatpush.msra.mxu0 %v629
  %1517 = vmatpush.msra.mxu0 %v625
  %1518 = vmatpush.msra.mxu0 %v621
  %1519 = vmatpush.msra.mxu0 %v617
  %1520 = vmatpush.msra.mxu0 %v613
  %1521 = vmatpush.msra.mxu0 %v609
  %1522 = vmatmul.f32.gmra.mxu0 %v1446
  %v1523 = vpop.f32.mrf.mxu0
  %v1524 = vadd.f32 0.0, %v1523
  %1525 = vdwg.mxu0
  %1526 = vmatpush.msra.mxu0 %v670
  %1527 = vmatpush.msra.mxu0 %v666
  %1528 = vmatpush.msra.mxu0 %v662
  %1529 = vmatpush.msra.mxu0 %v658
  %1530 = vmatpush.msra.mxu0 %v654
  %1531 = vmatpush.msra.mxu0 %v650
  %1532 = vmatpush.msra.mxu0 %v646
  %1533 = vmatpush.msra.mxu0 %v642
  %1534 = vmatpush.msra.mxu0 %v638
  %1535 = vmatpush.msra.mxu0 %v634
  %1536 = vmatpush.msra.mxu0 %v630
  %1537 = vmatpush.msra.mxu0 %v626
  %1538 = vmatpush.msra.mxu0 %v622
  %1539 = vmatpush.msra.mxu0 %v618
  %1540 = vmatpush.msra.mxu0 %v614
  %1541 = vmatpush.msra.mxu0 %v610
  %1542 = vmatmul.f32.gmra.mxu0 %v1446
  %v1543 = vpop.f32.mrf.mxu0
  %v1544 = vadd.f32 0.0, %v1543
  %1545 = vdwg.mxu0
  %1546 = vmatpush.msra.mxu0 %v671
  %1547 = vmatpush.msra.mxu0 %v667
  %1548 = vmatpush.msra.mxu0 %v663
  %1549 = vmatpush.msra.mxu0 %v659
  %1550 = vmatpush.msra.mxu0 %v655
  %1551 = vmatpush.msra.mxu0 %v651
  %1552 = vmatpush.msra.mxu0 %v647
  %1553 = vmatpush.msra.mxu0 %v643
  %1554 = vmatpush.msra.mxu0 %v639
  %1555 = vmatpush.msra.mxu0 %v635
  %1556 = vmatpush.msra.mxu0 %v631
  %1557 = vmatpush.msra.mxu0 %v627
  %1558 = vmatpush.msra.mxu0 %v623
  %1559 = vmatpush.msra.mxu0 %v619
  %1560 = vmatpush.msra.mxu0 %v615
  %1561 = vmatpush.msra.mxu0 %v611
  %1562 = vmatmul.f32.gmra.mxu0 %v1446
  %v1563 = vpop.f32.mrf.mxu0
  %v1564 = vadd.f32 0.0, %v1563
  %1565 = vdwg.mxu0
  %v1566 = vadd.f32 %v1451, %v1504
  %v1567 = vadd.f32 %v1452, %v1524
  %v1568 = vadd.f32 %v1453, %v1544
  %v1569 = vadd.f32 %v1454, %v1564
  %v1570 = vxor.u32 %v1566, 2147483648
  %v1571 = vmul.f32 %v1570, 1.442695
  %v1572 = vpow.pop %v1571
  %v1573 = vadd.f32 %v1572, 1.0
  %v1574 = vrcp.pop %v1573
  %v1575 = vmul.f32 %v1573, %v1574
  %v1576 = vsub.f32 1.0, %v1575
  %v1577 = vmul.f32 %v1574, %v1576
  %v1578 = vadd.f32 %v1574, %v1577
  %vm1579 = vweird.f32 %v1573
  %vm1580 = vweird.f32 %v1574
  %vm1581 = vmor %vm1579, %vm1580
  %v1582 = vsel %vm1581, %v1574, %v1578
  %v1583 = vand.u32 2147483647, %v1573
  %vm1584 = vcmp.eq.f32.partialorder %v1583, 8.507059e+37
  %v1585 = vand.u32 %v1573, 2147483648
  %v1586 = vor.u32 1.1754944e-38, %v1585
  %v1587 = vsel %vm1584, %v1586, %v1582
  %v1588 = vmul.f32 1.0, %v1587
  %v1589 = vxor.u32 %v1567, 2147483648
  %v1590 = vmul.f32 %v1589, 1.442695
  %v1591 = vpow.pop %v1590
  %v1592 = vadd.f32 %v1591, 1.0
  %v1593 = vrcp.pop %v1592
  %v1594 = vmul.f32 %v1592, %v1593
  %v1595 = vsub.f32 1.0, %v1594
  %v1596 = vmul.f32 %v1593, %v1595
  %v1597 = vadd.f32 %v1593, %v1596
  %vm1598 = vweird.f32 %v1592
  %vm1599 = vweird.f32 %v1593
  %vm1600 = vmor %vm1598, %vm1599
  %v1601 = vsel %vm1600, %v1593, %v1597
  %v1602 = vand.u32 2147483647, %v1592
  %vm1603 = vcmp.eq.f32.partialorder %v1602, 8.507059e+37
  %v1604 = vand.u32 %v1592, 2147483648
  %v1605 = vor.u32 1.1754944e-38, %v1604
  %v1606 = vsel %vm1603, %v1605, %v1601
  %v1607 = vmul.f32 1.0, %v1606
  %v1608 = vtanh.pop %v1568
  %v1609 = vxor.u32 %v1569, 2147483648
  %v1610 = vmul.f32 %v1609, 1.442695
  %v1611 = vpow.pop %v1610
  %v1612 = vadd.f32 %v1611, 1.0
  %v1613 = vrcp.pop %v1612
  %v1614 = vmul.f32 %v1612, %v1613
  %v1615 = vsub.f32 1.0, %v1614
  %v1616 = vmul.f32 %v1613, %v1615
  %v1617 = vadd.f32 %v1613, %v1616
  %vm1618 = vweird.f32 %v1612
  %vm1619 = vweird.f32 %v1613
  %vm1620 = vmor %vm1618, %vm1619
  %v1621 = vsel %vm1620, %v1613, %v1617
  %v1622 = vand.u32 2147483647, %v1612
  %vm1623 = vcmp.eq.f32.partialorder %v1622, 8.507059e+37
  %v1624 = vand.u32 %v1612, 2147483648
  %v1625 = vor.u32 1.1754944e-38, %v1624
  %v1626 = vsel %vm1623, %v1625, %v1621
  %v1627 = vmul.f32 1.0, %v1626
  %v1628 = vmul.f32 %v1607, %v1485
  %v1629 = vmul.f32 %v1588, %v1608
  %v1630 = vadd.f32 %v1628, %v1629
  %v1631 = vtanh.pop %v1630
  %v1632 = vmul.f32 %v1627, %v1631
  %1634 = vset.pattern.permute.xlu0 0
  %1635 = vperm.xlu0 %1634, %v1458
  %v1636 = vpop.permute.xlu0 %1635
  %v1638 = vmul.f32 %v1632, %v1636
  %v1639 = vmul.f32 %v1630, %v1636
  %s1640 = smul.u32 5, 4
  %s1641 = smul.addr %s1640, 8
  %s1642 = scalar_lea.vmem [#allocation2], %s1641
  %v1643 = vld [vmem:[%s1642] sm:$0xff]
  %v1644 = vld [vmem:[%s1642 + $0x8] sm:$0xff]
  %v1645 = vld [vmem:[%s1642 + $0x10] sm:$0xff]
  %v1646 = vld [vmem:[%s1642 + $0x18] sm:$0xff]
  %s1647 = scalar_lea.vmem %s96, 40
  %v1648 = vld [vmem:[%s1647] sm:$0xff]
  %s1649 = scalar_lea.vmem %s104, 40
  %v1650 = vld [vmem:[%s1649] sm:$0xff]
  %1652 = vset.pattern.permute.xlu0 0
  %1653 = vperm.xlu0 %1652, %v1648
  %v1654 = vpop.permute.xlu0 %1653
  %v1656 = vmul.f32 %v1654, %v691
  %v1657 = vadd.f32 %v1656, %v695
  %v1658 = vxor.u32 %v1657, 2147483648
  %v1659 = vmul.f32 %v1658, 1.442695
  %v1660 = vpow.pop %v1659
  %v1661 = vadd.f32 %v1660, 1.0
  %v1662 = vrcp.pop %v1661
  %v1663 = vmul.f32 %v1661, %v1662
  %v1664 = vsub.f32 1.0, %v1663
  %v1665 = vmul.f32 %v1662, %v1664
  %v1666 = vadd.f32 %v1662, %v1665
  %vm1667 = vweird.f32 %v1661
  %vm1668 = vweird.f32 %v1662
  %vm1669 = vmor %vm1667, %vm1668
  %v1670 = vsel %vm1669, %v1662, %v1666
  %v1671 = vand.u32 2147483647, %v1661
  %vm1672 = vcmp.eq.f32.partialorder %v1671, 8.507059e+37
  %v1673 = vand.u32 %v1661, 2147483648
  %v1674 = vor.u32 1.1754944e-38, %v1673
  %v1675 = vsel %vm1672, %v1674, %v1670
  %v1676 = vmul.f32 1.0, %v1675
  %v1677 = vmul.f32 %v1639, %v1676
  %1678 = vmatpush.msra.mxu0 %v668
  %1679 = vmatpush.msra.mxu0 %v664
  %1680 = vmatpush.msra.mxu0 %v660
  %1681 = vmatpush.msra.mxu0 %v656
  %1682 = vmatpush.msra.mxu0 %v652
  %1683 = vmatpush.msra.mxu0 %v648
  %1684 = vmatpush.msra.mxu0 %v644
  %1685 = vmatpush.msra.mxu0 %v640
  %1686 = vmatpush.msra.mxu0 %v636
  %1687 = vmatpush.msra.mxu0 %v632
  %1688 = vmatpush.msra.mxu0 %v628
  %1689 = vmatpush.msra.mxu0 %v624
  %1690 = vmatpush.msra.mxu0 %v620
  %1691 = vmatpush.msra.mxu0 %v616
  %1692 = vmatpush.msra.mxu0 %v612
  %1693 = vmatpush.msra.mxu0 %v608
  %1694 = vmatmul.f32.gmra.mxu0 %v1638
  %v1695 = vpop.f32.mrf.mxu0
  %v1696 = vadd.f32 0.0, %v1695
  %1697 = vdwg.mxu0
  %1698 = vmatpush.msra.mxu0 %v669
  %1699 = vmatpush.msra.mxu0 %v665
  %1700 = vmatpush.msra.mxu0 %v661
  %1701 = vmatpush.msra.mxu0 %v657
  %1702 = vmatpush.msra.mxu0 %v653
  %1703 = vmatpush.msra.mxu0 %v649
  %1704 = vmatpush.msra.mxu0 %v645
  %1705 = vmatpush.msra.mxu0 %v641
  %1706 = vmatpush.msra.mxu0 %v637
  %1707 = vmatpush.msra.mxu0 %v633
  %1708 = vmatpush.msra.mxu0 %v629
  %1709 = vmatpush.msra.mxu0 %v625
  %1710 = vmatpush.msra.mxu0 %v621
  %1711 = vmatpush.msra.mxu0 %v617
  %1712 = vmatpush.msra.mxu0 %v613
  %1713 = vmatpush.msra.mxu0 %v609
  %1714 = vmatmul.f32.gmra.mxu0 %v1638
  %v1715 = vpop.f32.mrf.mxu0
  %v1716 = vadd.f32 0.0, %v1715
  %1717 = vdwg.mxu0
  %1718 = vmatpush.msra.mxu0 %v670
  %1719 = vmatpush.msra.mxu0 %v666
  %1720 = vmatpush.msra.mxu0 %v662
  %1721 = vmatpush.msra.mxu0 %v658
  %1722 = vmatpush.msra.mxu0 %v654
  %1723 = vmatpush.msra.mxu0 %v650
  %1724 = vmatpush.msra.mxu0 %v646
  %1725 = vmatpush.msra.mxu0 %v642
  %1726 = vmatpush.msra.mxu0 %v638
  %1727 = vmatpush.msra.mxu0 %v634
  %1728 = vmatpush.msra.mxu0 %v630
  %1729 = vmatpush.msra.mxu0 %v626
  %1730 = vmatpush.msra.mxu0 %v622
  %1731 = vmatpush.msra.mxu0 %v618
  %1732 = vmatpush.msra.mxu0 %v614
  %1733 = vmatpush.msra.mxu0 %v610
  %1734 = vmatmul.f32.gmra.mxu0 %v1638
  %v1735 = vpop.f32.mrf.mxu0
  %v1736 = vadd.f32 0.0, %v1735
  %1737 = vdwg.mxu0
  %1738 = vmatpush.msra.mxu0 %v671
  %1739 = vmatpush.msra.mxu0 %v667
  %1740 = vmatpush.msra.mxu0 %v663
  %1741 = vmatpush.msra.mxu0 %v659
  %1742 = vmatpush.msra.mxu0 %v655
  %1743 = vmatpush.msra.mxu0 %v651
  %1744 = vmatpush.msra.mxu0 %v647
  %1745 = vmatpush.msra.mxu0 %v643
  %1746 = vmatpush.msra.mxu0 %v639
  %1747 = vmatpush.msra.mxu0 %v635
  %1748 = vmatpush.msra.mxu0 %v631
  %1749 = vmatpush.msra.mxu0 %v627
  %1750 = vmatpush.msra.mxu0 %v623
  %1751 = vmatpush.msra.mxu0 %v619
  %1752 = vmatpush.msra.mxu0 %v615
  %1753 = vmatpush.msra.mxu0 %v611
  %1754 = vmatmul.f32.gmra.mxu0 %v1638
  %v1755 = vpop.f32.mrf.mxu0
  %v1756 = vadd.f32 0.0, %v1755
  %1757 = vdwg.mxu0
  %v1758 = vadd.f32 %v1643, %v1696
  %v1759 = vadd.f32 %v1644, %v1716
  %v1760 = vadd.f32 %v1645, %v1736
  %v1761 = vadd.f32 %v1646, %v1756
  %v1762 = vxor.u32 %v1758, 2147483648
  %v1763 = vmul.f32 %v1762, 1.442695
  %v1764 = vpow.pop %v1763
  %v1765 = vadd.f32 %v1764, 1.0
  %v1766 = vrcp.pop %v1765
  %v1767 = vmul.f32 %v1765, %v1766
  %v1768 = vsub.f32 1.0, %v1767
  %v1769 = vmul.f32 %v1766, %v1768
  %v1770 = vadd.f32 %v1766, %v1769
  %vm1771 = vweird.f32 %v1765
  %vm1772 = vweird.f32 %v1766
  %vm1773 = vmor %vm1771, %vm1772
  %v1774 = vsel %vm1773, %v1766, %v1770
  %v1775 = vand.u32 2147483647, %v1765
  %vm1776 = vcmp.eq.f32.partialorder %v1775, 8.507059e+37
  %v1777 = vand.u32 %v1765, 2147483648
  %v1778 = vor.u32 1.1754944e-38, %v1777
  %v1779 = vsel %vm1776, %v1778, %v1774
  %v1780 = vmul.f32 1.0, %v1779
  %v1781 = vxor.u32 %v1759, 2147483648
  %v1782 = vmul.f32 %v1781, 1.442695
  %v1783 = vpow.pop %v1782
  %v1784 = vadd.f32 %v1783, 1.0
  %v1785 = vrcp.pop %v1784
  %v1786 = vmul.f32 %v1784, %v1785
  %v1787 = vsub.f32 1.0, %v1786
  %v1788 = vmul.f32 %v1785, %v1787
  %v1789 = vadd.f32 %v1785, %v1788
  %vm1790 = vweird.f32 %v1784
  %vm1791 = vweird.f32 %v1785
  %vm1792 = vmor %vm1790, %vm1791
  %v1793 = vsel %vm1792, %v1785, %v1789
  %v1794 = vand.u32 2147483647, %v1784
  %vm1795 = vcmp.eq.f32.partialorder %v1794, 8.507059e+37
  %v1796 = vand.u32 %v1784, 2147483648
  %v1797 = vor.u32 1.1754944e-38, %v1796
  %v1798 = vsel %vm1795, %v1797, %v1793
  %v1799 = vmul.f32 1.0, %v1798
  %v1800 = vtanh.pop %v1760
  %v1801 = vxor.u32 %v1761, 2147483648
  %v1802 = vmul.f32 %v1801, 1.442695
  %v1803 = vpow.pop %v1802
  %v1804 = vadd.f32 %v1803, 1.0
  %v1805 = vrcp.pop %v1804
  %v1806 = vmul.f32 %v1804, %v1805
  %v1807 = vsub.f32 1.0, %v1806
  %v1808 = vmul.f32 %v1805, %v1807
  %v1809 = vadd.f32 %v1805, %v1808
  %vm1810 = vweird.f32 %v1804
  %vm1811 = vweird.f32 %v1805
  %vm1812 = vmor %vm1810, %vm1811
  %v1813 = vsel %vm1812, %v1805, %v1809
  %v1814 = vand.u32 2147483647, %v1804
  %vm1815 = vcmp.eq.f32.partialorder %v1814, 8.507059e+37
  %v1816 = vand.u32 %v1804, 2147483648
  %v1817 = vor.u32 1.1754944e-38, %v1816
  %v1818 = vsel %vm1815, %v1817, %v1813
  %v1819 = vmul.f32 1.0, %v1818
  %v1820 = vmul.f32 %v1799, %v1677
  %v1821 = vmul.f32 %v1780, %v1800
  %v1822 = vadd.f32 %v1820, %v1821
  %v1823 = vtanh.pop %v1822
  %v1824 = vmul.f32 %v1819, %v1823
  %1826 = vset.pattern.permute.xlu0 0
  %1827 = vperm.xlu0 %1826, %v1650
  %v1828 = vpop.permute.xlu0 %1827
  %v1830 = vmul.f32 %v1824, %v1828
  %v1831 = vmul.f32 %v1822, %v1828
  %s1832 = smul.u32 6, 4
  %s1833 = smul.addr %s1832, 8
  %s1834 = scalar_lea.vmem [#allocation2], %s1833
  %v1835 = vld [vmem:[%s1834] sm:$0xff]
  %v1836 = vld [vmem:[%s1834 + $0x8] sm:$0xff]
  %v1837 = vld [vmem:[%s1834 + $0x10] sm:$0xff]
  %v1838 = vld [vmem:[%s1834 + $0x18] sm:$0xff]
  %s1839 = scalar_lea.vmem %s96, 48
  %v1840 = vld [vmem:[%s1839] sm:$0xff]
  %s1841 = scalar_lea.vmem %s104, 48
  %v1842 = vld [vmem:[%s1841] sm:$0xff]
  %1844 = vset.pattern.permute.xlu0 0
  %1845 = vperm.xlu0 %1844, %v1840
  %v1846 = vpop.permute.xlu0 %1845
  %v1848 = vmul.f32 %v1846, %v691
  %v1849 = vadd.f32 %v1848, %v695
  %v1850 = vxor.u32 %v1849, 2147483648
  %v1851 = vmul.f32 %v1850, 1.442695
  %v1852 = vpow.pop %v1851
  %v1853 = vadd.f32 %v1852, 1.0
  %v1854 = vrcp.pop %v1853
  %v1855 = vmul.f32 %v1853, %v1854
  %v1856 = vsub.f32 1.0, %v1855
  %v1857 = vmul.f32 %v1854, %v1856
  %v1858 = vadd.f32 %v1854, %v1857
  %vm1859 = vweird.f32 %v1853
  %vm1860 = vweird.f32 %v1854
  %vm1861 = vmor %vm1859, %vm1860
  %v1862 = vsel %vm1861, %v1854, %v1858
  %v1863 = vand.u32 2147483647, %v1853
  %vm1864 = vcmp.eq.f32.partialorder %v1863, 8.507059e+37
  %v1865 = vand.u32 %v1853, 2147483648
  %v1866 = vor.u32 1.1754944e-38, %v1865
  %v1867 = vsel %vm1864, %v1866, %v1862
  %v1868 = vmul.f32 1.0, %v1867
  %v1869 = vmul.f32 %v1831, %v1868
  %1870 = vmatpush.msra.mxu0 %v668
  %1871 = vmatpush.msra.mxu0 %v664
  %1872 = vmatpush.msra.mxu0 %v660
  %1873 = vmatpush.msra.mxu0 %v656
  %1874 = vmatpush.msra.mxu0 %v652
  %1875 = vmatpush.msra.mxu0 %v648
  %1876 = vmatpush.msra.mxu0 %v644
  %1877 = vmatpush.msra.mxu0 %v640
  %1878 = vmatpush.msra.mxu0 %v636
  %1879 = vmatpush.msra.mxu0 %v632
  %1880 = vmatpush.msra.mxu0 %v628
  %1881 = vmatpush.msra.mxu0 %v624
  %1882 = vmatpush.msra.mxu0 %v620
  %1883 = vmatpush.msra.mxu0 %v616
  %1884 = vmatpush.msra.mxu0 %v612
  %1885 = vmatpush.msra.mxu0 %v608
  %1886 = vmatmul.f32.gmra.mxu0 %v1830
  %v1887 = vpop.f32.mrf.mxu0
  %v1888 = vadd.f32 0.0, %v1887
  %1889 = vdwg.mxu0
  %1890 = vmatpush.msra.mxu0 %v669
  %1891 = vmatpush.msra.mxu0 %v665
  %1892 = vmatpush.msra.mxu0 %v661
  %1893 = vmatpush.msra.mxu0 %v657
  %1894 = vmatpush.msra.mxu0 %v653
  %1895 = vmatpush.msra.mxu0 %v649
  %1896 = vmatpush.msra.mxu0 %v645
  %1897 = vmatpush.msra.mxu0 %v641
  %1898 = vmatpush.msra.mxu0 %v637
  %1899 = vmatpush.msra.mxu0 %v633
  %1900 = vmatpush.msra.mxu0 %v629
  %1901 = vmatpush.msra.mxu0 %v625
  %1902 = vmatpush.msra.mxu0 %v621
  %1903 = vmatpush.msra.mxu0 %v617
  %1904 = vmatpush.msra.mxu0 %v613
  %1905 = vmatpush.msra.mxu0 %v609
  %1906 = vmatmul.f32.gmra.mxu0 %v1830
  %v1907 = vpop.f32.mrf.mxu0
  %v1908 = vadd.f32 0.0, %v1907
  %1909 = vdwg.mxu0
  %1910 = vmatpush.msra.mxu0 %v670
  %1911 = vmatpush.msra.mxu0 %v666
  %1912 = vmatpush.msra.mxu0 %v662
  %1913 = vmatpush.msra.mxu0 %v658
  %1914 = vmatpush.msra.mxu0 %v654
  %1915 = vmatpush.msra.mxu0 %v650
  %1916 = vmatpush.msra.mxu0 %v646
  %1917 = vmatpush.msra.mxu0 %v642
  %1918 = vmatpush.msra.mxu0 %v638
  %1919 = vmatpush.msra.mxu0 %v634
  %1920 = vmatpush.msra.mxu0 %v630
  %1921 = vmatpush.msra.mxu0 %v626
  %1922 = vmatpush.msra.mxu0 %v622
  %1923 = vmatpush.msra.mxu0 %v618
  %1924 = vmatpush.msra.mxu0 %v614
  %1925 = vmatpush.msra.mxu0 %v610
  %1926 = vmatmul.f32.gmra.mxu0 %v1830
  %v1927 = vpop.f32.mrf.mxu0
  %v1928 = vadd.f32 0.0, %v1927
  %1929 = vdwg.mxu0
  %1930 = vmatpush.msra.mxu0 %v671
  %1931 = vmatpush.msra.mxu0 %v667
  %1932 = vmatpush.msra.mxu0 %v663
  %1933 = vmatpush.msra.mxu0 %v659
  %1934 = vmatpush.msra.mxu0 %v655
  %1935 = vmatpush.msra.mxu0 %v651
  %1936 = vmatpush.msra.mxu0 %v647
  %1937 = vmatpush.msra.mxu0 %v643
  %1938 = vmatpush.msra.mxu0 %v639
  %1939 = vmatpush.msra.mxu0 %v635
  %1940 = vmatpush.msra.mxu0 %v631
  %1941 = vmatpush.msra.mxu0 %v627
  %1942 = vmatpush.msra.mxu0 %v623
  %1943 = vmatpush.msra.mxu0 %v619
  %1944 = vmatpush.msra.mxu0 %v615
  %1945 = vmatpush.msra.mxu0 %v611
  %1946 = vmatmul.f32.gmra.mxu0 %v1830
  %v1947 = vpop.f32.mrf.mxu0
  %v1948 = vadd.f32 0.0, %v1947
  %1949 = vdwg.mxu0
  %v1950 = vadd.f32 %v1835, %v1888
  %v1951 = vadd.f32 %v1836, %v1908
  %v1952 = vadd.f32 %v1837, %v1928
  %v1953 = vadd.f32 %v1838, %v1948
  %v1954 = vxor.u32 %v1950, 2147483648
  %v1955 = vmul.f32 %v1954, 1.442695
  %v1956 = vpow.pop %v1955
  %v1957 = vadd.f32 %v1956, 1.0
  %v1958 = vrcp.pop %v1957
  %v1959 = vmul.f32 %v1957, %v1958
  %v1960 = vsub.f32 1.0, %v1959
  %v1961 = vmul.f32 %v1958, %v1960
  %v1962 = vadd.f32 %v1958, %v1961
  %vm1963 = vweird.f32 %v1957
  %vm1964 = vweird.f32 %v1958
  %vm1965 = vmor %vm1963, %vm1964
  %v1966 = vsel %vm1965, %v1958, %v1962
  %v1967 = vand.u32 2147483647, %v1957
  %vm1968 = vcmp.eq.f32.partialorder %v1967, 8.507059e+37
  %v1969 = vand.u32 %v1957, 2147483648
  %v1970 = vor.u32 1.1754944e-38, %v1969
  %v1971 = vsel %vm1968, %v1970, %v1966
  %v1972 = vmul.f32 1.0, %v1971
  %v1973 = vxor.u32 %v1951, 2147483648
  %v1974 = vmul.f32 %v1973, 1.442695
  %v1975 = vpow.pop %v1974
  %v1976 = vadd.f32 %v1975, 1.0
  %v1977 = vrcp.pop %v1976
  %v1978 = vmul.f32 %v1976, %v1977
  %v1979 = vsub.f32 1.0, %v1978
  %v1980 = vmul.f32 %v1977, %v1979
  %v1981 = vadd.f32 %v1977, %v1980
  %vm1982 = vweird.f32 %v1976
  %vm1983 = vweird.f32 %v1977
  %vm1984 = vmor %vm1982, %vm1983
  %v1985 = vsel %vm1984, %v1977, %v1981
  %v1986 = vand.u32 2147483647, %v1976
  %vm1987 = vcmp.eq.f32.partialorder %v1986, 8.507059e+37
  %v1988 = vand.u32 %v1976, 2147483648
  %v1989 = vor.u32 1.1754944e-38, %v1988
  %v1990 = vsel %vm1987, %v1989, %v1985
  %v1991 = vmul.f32 1.0, %v1990
  %v1992 = vtanh.pop %v1952
  %v1993 = vxor.u32 %v1953, 2147483648
  %v1994 = vmul.f32 %v1993, 1.442695
  %v1995 = vpow.pop %v1994
  %v1996 = vadd.f32 %v1995, 1.0
  %v1997 = vrcp.pop %v1996
  %v1998 = vmul.f32 %v1996, %v1997
  %v1999 = vsub.f32 1.0, %v1998
  %v2000 = vmul.f32 %v1997, %v1999
  %v2001 = vadd.f32 %v1997, %v2000
  %vm2002 = vweird.f32 %v1996
  %vm2003 = vweird.f32 %v1997
  %vm2004 = vmor %vm2002, %vm2003
  %v2005 = vsel %vm2004, %v1997, %v2001
  %v2006 = vand.u32 2147483647, %v1996
  %vm2007 = vcmp.eq.f32.partialorder %v2006, 8.507059e+37
  %v2008 = vand.u32 %v1996, 2147483648
  %v2009 = vor.u32 1.1754944e-38, %v2008
  %v2010 = vsel %vm2007, %v2009, %v2005
  %v2011 = vmul.f32 1.0, %v2010
  %v2012 = vmul.f32 %v1991, %v1869
  %v2013 = vmul.f32 %v1972, %v1992
  %v2014 = vadd.f32 %v2012, %v2013
  %v2015 = vtanh.pop %v2014
  %v2016 = vmul.f32 %v2011, %v2015
  %2018 = vset.pattern.permute.xlu0 0
  %2019 = vperm.xlu0 %2018, %v1842
  %v2020 = vpop.permute.xlu0 %2019
  %v2022 = vmul.f32 %v2016, %v2020
  %v2023 = vmul.f32 %v2014, %v2020
  %s2024 = smul.u32 7, 4
  %s2025 = smul.addr %s2024, 8
  %s2026 = scalar_lea.vmem [#allocation2], %s2025
  %v2027 = vld [vmem:[%s2026] sm:$0xff]
  %v2028 = vld [vmem:[%s2026 + $0x8] sm:$0xff]
  %v2029 = vld [vmem:[%s2026 + $0x10] sm:$0xff]
  %v2030 = vld [vmem:[%s2026 + $0x18] sm:$0xff]
  %s2031 = scalar_lea.vmem %s96, 56
  %v2032 = vld [vmem:[%s2031] sm:$0xff]
  %s2033 = scalar_lea.vmem %s104, 56
  %v2034 = vld [vmem:[%s2033] sm:$0xff]
  %2036 = vset.pattern.permute.xlu0 0
  %2037 = vperm.xlu0 %2036, %v2032
  %v2038 = vpop.permute.xlu0 %2037
  %v2040 = vmul.f32 %v2038, %v691
  %v2041 = vadd.f32 %v2040, %v695
  %v2042 = vxor.u32 %v2041, 2147483648
  %v2043 = vmul.f32 %v2042, 1.442695
  %v2044 = vpow.pop %v2043
  %v2045 = vadd.f32 %v2044, 1.0
  %v2046 = vrcp.pop %v2045
  %v2047 = vmul.f32 %v2045, %v2046
  %v2048 = vsub.f32 1.0, %v2047
  %v2049 = vmul.f32 %v2046, %v2048
  %v2050 = vadd.f32 %v2046, %v2049
  %vm2051 = vweird.f32 %v2045
  %vm2052 = vweird.f32 %v2046
  %vm2053 = vmor %vm2051, %vm2052
  %v2054 = vsel %vm2053, %v2046, %v2050
  %v2055 = vand.u32 2147483647, %v2045
  %vm2056 = vcmp.eq.f32.partialorder %v2055, 8.507059e+37
  %v2057 = vand.u32 %v2045, 2147483648
  %v2058 = vor.u32 1.1754944e-38, %v2057
  %v2059 = vsel %vm2056, %v2058, %v2054
  %v2060 = vmul.f32 1.0, %v2059
  %v2061 = vmul.f32 %v2023, %v2060
  %2062 = vmatpush.msra.mxu0 %v668
  %2063 = vmatpush.msra.mxu0 %v664
  %2064 = vmatpush.msra.mxu0 %v660
  %2065 = vmatpush.msra.mxu0 %v656
  %2066 = vmatpush.msra.mxu0 %v652
  %2067 = vmatpush.msra.mxu0 %v648
  %2068 = vmatpush.msra.mxu0 %v644
  %2069 = vmatpush.msra.mxu0 %v640
  %2070 = vmatpush.msra.mxu0 %v636
  %2071 = vmatpush.msra.mxu0 %v632
  %2072 = vmatpush.msra.mxu0 %v628
  %2073 = vmatpush.msra.mxu0 %v624
  %2074 = vmatpush.msra.mxu0 %v620
  %2075 = vmatpush.msra.mxu0 %v616
  %2076 = vmatpush.msra.mxu0 %v612
  %2077 = vmatpush.msra.mxu0 %v608
  %2078 = vmatmul.f32.gmra.mxu0 %v2022
  %v2079 = vpop.f32.mrf.mxu0
  %v2080 = vadd.f32 0.0, %v2079
  %2081 = vdwg.mxu0
  %2082 = vmatpush.msra.mxu0 %v669
  %2083 = vmatpush.msra.mxu0 %v665
  %2084 = vmatpush.msra.mxu0 %v661
  %2085 = vmatpush.msra.mxu0 %v657
  %2086 = vmatpush.msra.mxu0 %v653
  %2087 = vmatpush.msra.mxu0 %v649
  %2088 = vmatpush.msra.mxu0 %v645
  %2089 = vmatpush.msra.mxu0 %v641
  %2090 = vmatpush.msra.mxu0 %v637
  %2091 = vmatpush.msra.mxu0 %v633
  %2092 = vmatpush.msra.mxu0 %v629
  %2093 = vmatpush.msra.mxu0 %v625
  %2094 = vmatpush.msra.mxu0 %v621
  %2095 = vmatpush.msra.mxu0 %v617
  %2096 = vmatpush.msra.mxu0 %v613
  %2097 = vmatpush.msra.mxu0 %v609
  %2098 = vmatmul.f32.gmra.mxu0 %v2022
  %v2099 = vpop.f32.mrf.mxu0
  %v2100 = vadd.f32 0.0, %v2099
  %2101 = vdwg.mxu0
  %2102 = vmatpush.msra.mxu0 %v670
  %2103 = vmatpush.msra.mxu0 %v666
  %2104 = vmatpush.msra.mxu0 %v662
  %2105 = vmatpush.msra.mxu0 %v658
  %2106 = vmatpush.msra.mxu0 %v654
  %2107 = vmatpush.msra.mxu0 %v650
  %2108 = vmatpush.msra.mxu0 %v646
  %2109 = vmatpush.msra.mxu0 %v642
  %2110 = vmatpush.msra.mxu0 %v638
  %2111 = vmatpush.msra.mxu0 %v634
  %2112 = vmatpush.msra.mxu0 %v630
  %2113 = vmatpush.msra.mxu0 %v626
  %2114 = vmatpush.msra.mxu0 %v622
  %2115 = vmatpush.msra.mxu0 %v618
  %2116 = vmatpush.msra.mxu0 %v614
  %2117 = vmatpush.msra.mxu0 %v610
  %2118 = vmatmul.f32.gmra.mxu0 %v2022
  %v2119 = vpop.f32.mrf.mxu0
  %v2120 = vadd.f32 0.0, %v2119
  %2121 = vdwg.mxu0
  %2122 = vmatpush.msra.mxu0 %v671
  %2123 = vmatpush.msra.mxu0 %v667
  %2124 = vmatpush.msra.mxu0 %v663
  %2125 = vmatpush.msra.mxu0 %v659
  %2126 = vmatpush.msra.mxu0 %v655
  %2127 = vmatpush.msra.mxu0 %v651
  %2128 = vmatpush.msra.mxu0 %v647
  %2129 = vmatpush.msra.mxu0 %v643
  %2130 = vmatpush.msra.mxu0 %v639
  %2131 = vmatpush.msra.mxu0 %v635
  %2132 = vmatpush.msra.mxu0 %v631
  %2133 = vmatpush.msra.mxu0 %v627
  %2134 = vmatpush.msra.mxu0 %v623
  %2135 = vmatpush.msra.mxu0 %v619
  %2136 = vmatpush.msra.mxu0 %v615
  %2137 = vmatpush.msra.mxu0 %v611
  %2138 = vmatmul.f32.gmra.mxu0 %v2022
  %v2139 = vpop.f32.mrf.mxu0
  %v2140 = vadd.f32 0.0, %v2139
  %2141 = vdwg.mxu0
  %v2142 = vadd.f32 %v2027, %v2080
  %v2143 = vadd.f32 %v2028, %v2100
  %v2144 = vadd.f32 %v2029, %v2120
  %v2145 = vadd.f32 %v2030, %v2140
  %v2146 = vxor.u32 %v2142, 2147483648
  %v2147 = vmul.f32 %v2146, 1.442695
  %v2148 = vpow.pop %v2147
  %v2149 = vadd.f32 %v2148, 1.0
  %v2150 = vrcp.pop %v2149
  %v2151 = vmul.f32 %v2149, %v2150
  %v2152 = vsub.f32 1.0, %v2151
  %v2153 = vmul.f32 %v2150, %v2152
  %v2154 = vadd.f32 %v2150, %v2153
  %vm2155 = vweird.f32 %v2149
  %vm2156 = vweird.f32 %v2150
  %vm2157 = vmor %vm2155, %vm2156
  %v2158 = vsel %vm2157, %v2150, %v2154
  %v2159 = vand.u32 2147483647, %v2149
  %vm2160 = vcmp.eq.f32.partialorder %v2159, 8.507059e+37
  %v2161 = vand.u32 %v2149, 2147483648
  %v2162 = vor.u32 1.1754944e-38, %v2161
  %v2163 = vsel %vm2160, %v2162, %v2158
  %v2164 = vmul.f32 1.0, %v2163
  %v2165 = vxor.u32 %v2143, 2147483648
  %v2166 = vmul.f32 %v2165, 1.442695
  %v2167 = vpow.pop %v2166
  %v2168 = vadd.f32 %v2167, 1.0
  %v2169 = vrcp.pop %v2168
  %v2170 = vmul.f32 %v2168, %v2169
  %v2171 = vsub.f32 1.0, %v2170
  %v2172 = vmul.f32 %v2169, %v2171
  %v2173 = vadd.f32 %v2169, %v2172
  %vm2174 = vweird.f32 %v2168
  %vm2175 = vweird.f32 %v2169
  %vm2176 = vmor %vm2174, %vm2175
  %v2177 = vsel %vm2176, %v2169, %v2173
  %v2178 = vand.u32 2147483647, %v2168
  %vm2179 = vcmp.eq.f32.partialorder %v2178, 8.507059e+37
  %v2180 = vand.u32 %v2168, 2147483648
  %v2181 = vor.u32 1.1754944e-38, %v2180
  %v2182 = vsel %vm2179, %v2181, %v2177
  %v2183 = vmul.f32 1.0, %v2182
  %v2184 = vtanh.pop %v2144
  %v2185 = vxor.u32 %v2145, 2147483648
  %v2186 = vmul.f32 %v2185, 1.442695
  %v2187 = vpow.pop %v2186
  %v2188 = vadd.f32 %v2187, 1.0
  %v2189 = vrcp.pop %v2188
  %v2190 = vmul.f32 %v2188, %v2189
  %v2191 = vsub.f32 1.0, %v2190
  %v2192 = vmul.f32 %v2189, %v2191
  %v2193 = vadd.f32 %v2189, %v2192
  %vm2194 = vweird.f32 %v2188
  %vm2195 = vweird.f32 %v2189
  %vm2196 = vmor %vm2194, %vm2195
  %v2197 = vsel %vm2196, %v2189, %v2193
  %v2198 = vand.u32 2147483647, %v2188
  %vm2199 = vcmp.eq.f32.partialorder %v2198, 8.507059e+37
  %v2200 = vand.u32 %v2188, 2147483648
  %v2201 = vor.u32 1.1754944e-38, %v2200
  %v2202 = vsel %vm2199, %v2201, %v2197
  %v2203 = vmul.f32 1.0, %v2202
  %v2204 = vmul.f32 %v2183, %v2061
  %v2205 = vmul.f32 %v2164, %v2184
  %v2206 = vadd.f32 %v2204, %v2205
  %v2207 = vtanh.pop %v2206
  %v2208 = vmul.f32 %v2203, %v2207
  %2210 = vset.pattern.permute.xlu0 0
  %2211 = vperm.xlu0 %2210, %v2034
  %v2212 = vpop.permute.xlu0 %2211
  %v2214 = vmul.f32 %v2208, %v2212
  %v2215 = vmul.f32 %v2206, %v2212
  %2216 = vst [vmem:[#allocation3] sm:$0xff] %v2214
  %2217 = vst [vmem:[#allocation4] sm:$0xff] %v2215
  // Predicated region
  $region54: #{tlstm_forward.1} parent=0 // pred_check
    %p2218 = pneg %p107
  $region55: #{tlstm_forward.1} parent=0 // pred_check_branch
    %2220 = sbr.rel (%p2218) target = $region57
  $region56: #{tlstm_forward.1} parent=0 // pred_region
    %v2221 = vld [vmem:[%s10] sm:$0xff]
    %v2222 = vld [vmem:[%s10 + $0x8] sm:$0xff]
    %v2223 = vld [vmem:[%s10 + $0x10] sm:$0xff]
    %v2224 = vld [vmem:[%s10 + $0x18] sm:$0xff]
    %v2225 = vld [vmem:[%s10 + $0x20] sm:$0xff]
    %v2226 = vld [vmem:[%s10 + $0x28] sm:$0xff]
    %v2227 = vld [vmem:[%s10 + $0x30] sm:$0xff]
    %v2228 = vld [vmem:[%s10 + $0x38] sm:$0xff]
    %v2229 = vld [vmem:[%s10 + $0x40] sm:$0xff]
    %v2230 = vld [vmem:[%s10 + $0x48] sm:$0xff]
    %v2231 = vld [vmem:[%s10 + $0x50] sm:$0xff]
    %v2232 = vld [vmem:[%s10 + $0x58] sm:$0xff]
    %v2233 = vld [vmem:[%s10 + $0x60] sm:$0xff]
    %v2234 = vld [vmem:[%s10 + $0x68] sm:$0xff]
    %v2235 = vld [vmem:[%s10 + $0x70] sm:$0xff]
    %v2236 = vld [vmem:[%s10 + $0x78] sm:$0xff]
    %v2237 = vld [vmem:[%s11] sm:$0x1]
    %v2239 = vperm.slane %v2237, 0
    %2241 = vmatpush.msra.mxu0 %v2236
    %2242 = vmatpush.msra.mxu0 %v2235
    %2243 = vmatpush.msra.mxu0 %v2234
    %2244 = vmatpush.msra.mxu0 %v2233
    %2245 = vmatpush.msra.mxu0 %v2232
    %2246 = vmatpush.msra.mxu0 %v2231
    %2247 = vmatpush.msra.mxu0 %v2230
    %2248 = vmatpush.msra.mxu0 %v2229
    %2249 = vmatpush.msra.mxu0 %v2228
    %2250 = vmatpush.msra.mxu0 %v2227
    %2251 = vmatpush.msra.mxu0 %v2226
    %2252 = vmatpush.msra.mxu0 %v2225
    %2253 = vmatpush.msra.mxu0 %v2224
    %2254 = vmatpush.msra.mxu0 %v2223
    %2255 = vmatpush.msra.mxu0 %v2222
    %2256 = vmatpush.msra.mxu0 %v2221
    %2257 = vmatmul.f32.gmra.mxu0 %v2214
    %v2258 = vpop.f32.mrf.mxu0
    %v2259 = vadd.f32 %v2239, %v2258
    %2260 = vdwg.mxu0
    %2261 = vst [vmem:[%s12] sm:$0xff] %v2259
  $region57: #{tlstm_forward.1} parent=0 // pred_fallthru
    _
  // Predicated region
  $region58: #{tlstm_forward.1} parent=0 // pred_check
    _
  $region59: #{tlstm_forward.1} parent=0 // pred_check_branch
    %2263 = sbr.rel (0) target = $region61
  $region60: #{tlstm_forward.1} parent=0 // pred_region
    _
  $region61: #{tlstm_forward.1} parent=0 // pred_fallthru
    _
  // Predicated region
  $region62: #{tlstm_forward.1} parent=0 // pred_check
    _
  $region63: #{tlstm_forward.1} parent=0 // pred_check_branch
    %2265 = sbr.rel (0) target = $region65
  $region64: #{tlstm_forward.1} parent=0 // pred_region
    _
  $region65: #{tlstm_forward.1} parent=0 // pred_fallthru
    _

</llo_original>
